<compile_context>
chip_gen: v7x
topology: tpu7x:2x2x1
jax: 0.10.0
libtpu: 0.0.40
codegen_flags: <defaults>
</compile_context>

<pallas_src>
import jax
import jax.numpy as jnp
from jax import lax
from jax.experimental import pallas as pl
from jax.experimental.pallas import tpu as pltpu


# ------------------------------ kernel-side math ------------------------------

def _gates_to_hc(gates, c, H):
    """gates:(B,4H) ordered (i,f,g,o) like torch.nn.LSTM. Returns (h_new, c_new)."""
    i = jax.nn.sigmoid(gates[:, 0 * H:1 * H])
    f = jax.nn.sigmoid(gates[:, 1 * H:2 * H])
    g = jnp.tanh(gates[:, 2 * H:3 * H])
    o = jax.nn.sigmoid(gates[:, 3 * H:4 * H])
    c_new = f * c + i * g
    h_new = o * jnp.tanh(c_new)
    return h_new, c_new


def seq2seq_kernel(enc_x_ref,       # (T*B, E)   embedded source, time-major flattened
                   enc_w_ih_ref,    # (E, 4H)
                   enc_w_hh_ref,    # (H, 4H)
                   enc_b_ref,       # (1, 4H)    b_ih + b_hh
                   dec_emb_ref,     # (V, E)
                   dec_w_ih_ref,    # (E, 4H)
                   dec_w_cat_ref,   # (H, V+4H)  [W_fc | W_hh] concatenated on lanes
                   dec_b_ref,       # (1, 4H)    b_ih + b_hh
                   dec_b_fc_ref,    # (1, V)
                   out_ref):        # (T, B, V)
    T, B, V = out_ref.shape
    H = enc_w_hh_ref.shape[0]

    lane = lax.broadcasted_iota(jnp.int32, (B, V), 1)

    # ----- outputs[0, :, 1] = 1 (fixed SOS one-hot row, like the torch module) ----
    sos_onehot = jnp.where(lane == 1, jnp.float32(1), jnp.float32(0))
    out_ref[0] = sos_onehot

    # ---------------------------------- encoder ----------------------------------
    # Hoisted input projection: one (T*B,E)@(E,4H) matmul with the bias folded in,
    # instead of T tiny matmuls + T bias broadcasts inside the recurrence.
    x_all = (jnp.dot(enc_x_ref[...], enc_w_ih_ref[...],
                     preferred_element_type=jnp.float32)
             + enc_b_ref[...])                                   # (T*B, 4H)
    enc_w_hh = enc_w_hh_ref[...]

    h = jnp.zeros((B, H), jnp.float32)
    c = jnp.zeros((B, H), jnp.float32)
    for t in range(T):                                           # fully unrolled
        gates = x_all[t * B:(t + 1) * B, :] + jnp.dot(
            h, enc_w_hh, preferred_element_type=jnp.float32)
        h, c = _gates_to_hc(gates, c, H)

    # ---------------------------------- decoder ----------------------------------
    # Precomputed gate table: G = dec_emb @ dec_w_ih + dec_b, shape (V, 4H).
    # Per step the embedding lookup + input projection becomes onehot(token) @ G.
    gate_tbl = (jnp.dot(dec_emb_ref[...], dec_w_ih_ref[...],
                        preferred_element_type=jnp.float32)
                + dec_b_ref[...])                                # (V, 4H)
    w_cat = dec_w_cat_ref[...]                                   # (H, V+4H)
    b_fc = jnp.broadcast_to(dec_b_fc_ref[...], (B, V))           # hoisted broadcast

    # x = SOS token (id 1) for every batch row -> one-hot.
    onehot = sos_onehot                                          # (B, V)

    # Prologue: recurrent contribution of the encoder's final h for step 1.
    # (Logits half of this matmul is discarded; one wasted 128-lane block.)
    cat = jnp.dot(h, w_cat, preferred_element_type=jnp.float32)  # (B, V+4H)
    rec = cat[:, V:]

    for i in range(1, T):                                        # fully unrolled
        gates = jnp.dot(onehot, gate_tbl,
                        preferred_element_type=jnp.float32) + rec
        h, c = _gates_to_hc(gates, c, H)
        # One fused matmul: logits (lanes [0,V)) and next-step recurrent gates
        # (lanes [V, V+4H)).  Both slices are 128-lane aligned.
        cat = jnp.dot(h, w_cat, preferred_element_type=jnp.float32)
        logits = cat[:, :V] + b_fc
        out_ref[i] = logits                                      # lane-dense (B, V)
        rec = cat[:, V:]
        # Greedy argmax with first-max tie-break, built directly as the next
        # one-hot (lane max/min reductions only; no dynamic gather).
        m = jnp.max(logits, axis=-1, keepdims=True)
        first = jnp.min(jnp.where(logits == m, lane, V), axis=-1, keepdims=True)
        onehot = jnp.where(lane == first, jnp.float32(1), jnp.float32(0))


# -------------------------------- pallas wrapper --------------------------------

def seq2seq_forward(source, params):
    """Greedy (target=None) Seq2Seq forward.

    source: (T, B) int32 token ids (time-major, like the PyTorch module).
    returns: outputs (T, B, V) float32:
      outputs[0, :, 1] = 1, outputs[i] = decoder logits for step i (i >= 1).
    """
    T, B = source.shape
    V = params["dec_w_fc"].shape[1]

    # Source embedding lookup (gather) is glue — plain JAX; flatten to (T*B, E)
    # so the kernel can run a single big input-projection matmul.
    enc_x = jnp.take(params["enc_emb"], source.reshape(-1), axis=0)   # (T*B, E)

    # torch.nn.LSTM adds both bias vectors; combine once here (faithful port).
    enc_b = params["enc_b_ih"] + params["enc_b_hh"]
    dec_b = params["dec_b_ih"] + params["dec_b_hh"]

    # Fuse the decoder's output projection and recurrent projection into one
    # weight so the kernel issues a single MXU matmul per decode step for both.
    dec_w_cat = jnp.concatenate([params["dec_w_fc"], params["dec_w_hh"]],
                                axis=1)                               # (H, V+4H)

    vmem = pl.BlockSpec(memory_space=pltpu.MemorySpace.VMEM)
    outputs = pl.pallas_call(
        seq2seq_kernel,
        out_shape=jax.ShapeDtypeStruct((T, B, V), jnp.float32),
        in_specs=[vmem] * 9,
        out_specs=vmem,
    )(enc_x,
      params["enc_w_ih"], params["enc_w_hh"], enc_b,
      params["dec_emb"], params["dec_w_ih"], dec_w_cat, dec_b,
      params["dec_b_fc"])
    return outputs


# ---------------------------------- parameters ----------------------------------

def init_params(key, vocab, emb, hidden):
    ks = jax.random.split(key, 14)
    s = 0.1
    n = jax.random.normal
    return {
        # encoder
        "enc_emb":   s * n(ks[0], (vocab, emb), jnp.float32),
        "enc_w_ih":  s * n(ks[1], (emb, 4 * hidden), jnp.float32),
        "enc_w_hh":  s * n(ks[2], (hidden, 4 * hidden), jnp.float32),
        "enc_b_ih":  s * n(ks[3], (1, 4 * hidden), jnp.float32),
        "enc_b_hh":  s * n(ks[4], (1, 4 * hidden), jnp.float32),
        # decoder
        "dec_emb":   s * n(ks[5], (vocab, emb), jnp.float32),
        "dec_w_ih":  s * n(ks[6], (emb, 4 * hidden), jnp.float32),
        "dec_w_hh":  s * n(ks[7], (hidden, 4 * hidden), jnp.float32),
        "dec_b_ih":  s * n(ks[8], (1, 4 * hidden), jnp.float32),
        "dec_b_hh":  s * n(ks[9], (1, 4 * hidden), jnp.float32),
        "dec_w_fc":  s * n(ks[10], (hidden, vocab), jnp.float32),
        "dec_b_fc":  s * n(ks[11], (1, vocab), jnp.float32),
    }


# ----------------------- plain-JAX reference (encoder + step 1) -----------------

def _reference_step1_logits(source, params):
    """Pure-JAX reference for outputs[1] (no greedy cascade -> stable check)."""
    enc_b = params["enc_b_ih"] + params["enc_b_hh"]
    dec_b = params["dec_b_ih"] + params["dec_b_hh"]

    def cell(x, h, c, w_ih, w_hh, b):
        g = x @ w_ih + h @ w_hh + b
        H = h.shape[-1]
        i = jax.nn.sigmoid(g[:, 0 * H:1 * H])
        f = jax.nn.sigmoid(g[:, 1 * H:2 * H])
        gg = jnp.tanh(g[:, 2 * H:3 * H])
        o = jax.nn.sigmoid(g[:, 3 * H:4 * H])
        c = f * c + i * gg
        h = o * jnp.tanh(c)
        return h, c

    emb = jnp.take(params["enc_emb"], source, axis=0)            # (T, B, E)
    T, B, _ = emb.shape
    H = params["enc_w_hh"].shape[0]
    h = jnp.zeros((B, H), jnp.float32)
    c = jnp.zeros((B, H), jnp.float32)
    for t in range(T):
        h, c = cell(emb[t], h, c, params["enc_w_ih"], params["enc_w_hh"], enc_b)
    x_emb = jnp.take(params["dec_emb"], jnp.ones((B,), jnp.int32), axis=0)
    h, c = cell(x_emb, h, c, params["dec_w_ih"], params["dec_w_hh"], dec_b)
    return h @ params["dec_w_fc"] + params["dec_b_fc"]


# ------------------------------------- main --------------------------------------

if __name__ == "__main__":
    T, B = 8, 8          # target_len, batch
    EMB, HID, VOCAB = 16, 32, 128

    key = jax.random.PRNGKey(0)
    k_src, k_par = jax.random.split(key)
    params = init_params(k_par, VOCAB, EMB, HID)
    source = jax.random.randint(k_src, (T, B), minval=0, maxval=VOCAB,
                                dtype=jnp.int32)

    fwd = jax.jit(seq2seq_forward)
    outputs = fwd(source, params)
    jax.block_until_ready(outputs)

    assert outputs.shape == (T, B, VOCAB)
    assert outputs.dtype == jnp.float32
    # outputs[0] must be the fixed SOS one-hot row.
    assert float(outputs[0, 0, 1]) == 1.0 and float(outputs[0, 0, 0]) == 0.0
    # Numerically check encoder + the first decoder step against pure JAX
    # (step 1 has no greedy cascade, so a loose tolerance is robust).
    ref1 = _reference_step1_logits(source, params)
    assert jnp.allclose(outputs[1], ref1, atol=2e-3, rtol=2e-3), \
        float(jnp.max(jnp.abs(outputs[1] - ref1)))

    print("KERNEL_OK")
</pallas_src>

<mosaic_0001>
module attributes {stable_mosaic.version = 11 : i64} {
  func.func @seq2seq_kernel(%arg0: memref<64x16xf32, #tpu.memory_space<vmem>>, %arg1: memref<16x128xf32, #tpu.memory_space<vmem>>, %arg2: memref<32x128xf32, #tpu.memory_space<vmem>>, %arg3: memref<1x128xf32, #tpu.memory_space<vmem>>, %arg4: memref<128x16xf32, #tpu.memory_space<vmem>>, %arg5: memref<16x128xf32, #tpu.memory_space<vmem>>, %arg6: memref<32x256xf32, #tpu.memory_space<vmem>>, %arg7: memref<1x128xf32, #tpu.memory_space<vmem>>, %arg8: memref<1x128xf32, #tpu.memory_space<vmem>>, %arg9: memref<8x8x128xf32, #tpu.memory_space<vmem>>) attributes {dimension_semantics = [], scalar_prefetch = 0 : i64, scratch_operands = 0 : i64, tpu.core_type = #tpu.core_type<tc>} {
    %0 = tpu.iota {dimensions = array<i32: 1>} : vector<8x128xi32>
    %c1_i32 = arith.constant 1 : i32
    %1 = vector.broadcast %c1_i32 : i32 to vector<8x128xi32>
    %2 = arith.cmpi eq, %0, %1 : vector<8x128xi32>
    %cst = arith.constant 1.000000e+00 : f32
    %cst_0 = arith.constant 0.000000e+00 : f32
    %3 = vector.broadcast %cst : f32 to vector<8x128xf32>
    %4 = vector.broadcast %cst_0 : f32 to vector<8x128xf32>
    %5 = arith.select %2, %3, %4 : vector<8x128xi1>, vector<8x128xf32>
    %c0 = arith.constant 0 : index
    %c0_1 = arith.constant 0 : index
    %c0_2 = arith.constant 0 : index
    %6 = vector.load %arg9[%c0, %c0_1, %c0_2] : memref<8x8x128xf32, #tpu.memory_space<vmem>>, vector<1x8x128xf32>
    %7 = vector.shape_cast %6 : vector<1x8x128xf32> to vector<8x128xf32>
    %8 = vector.shape_cast %5 : vector<8x128xf32> to vector<1x8x128xf32>
    tpu.vector_store %arg9[%c0, %c0_1, %c0_2], %8 {strides = array<i32>} : memref<8x8x128xf32, #tpu.memory_space<vmem>>, vector<1x8x128xf32>,
    %c0_3 = arith.constant 0 : index
    %c0_4 = arith.constant 0 : index
    %9 = vector.load %arg0[%c0_3, %c0_4] : memref<64x16xf32, #tpu.memory_space<vmem>>, vector<64x16xf32>
    %c0_5 = arith.constant 0 : index
    %c0_6 = arith.constant 0 : index
    %10 = vector.load %arg1[%c0_5, %c0_6] : memref<16x128xf32, #tpu.memory_space<vmem>>, vector<16x128xf32>
    %cst_7 = arith.constant dense<0.000000e+00> : vector<64x128xf32>
    %11 = tpu.matmul %9, %10, %cst_7 {dimension_numbers = #tpu.dot_dimension_numbers<[1], [0], [0], [1], [0, 0, 1, 1], [], []>} : vector<64x16xf32>, vector<16x128xf32>, vector<64x128xf32> -> vector<64x128xf32>
    %c0_8 = arith.constant 0 : index
    %c0_9 = arith.constant 0 : index
    %12 = vector.load %arg3[%c0_8, %c0_9] : memref<1x128xf32, #tpu.memory_space<vmem>>, vector<1x128xf32>
    %13 = vector.broadcast %12 : vector<1x128xf32> to vector<64x128xf32>
    %14 = arith.addf %11, %13 : vector<64x128xf32>
    %c0_10 = arith.constant 0 : index
    %c0_11 = arith.constant 0 : index
    %15 = vector.load %arg2[%c0_10, %c0_11] : memref<32x128xf32, #tpu.memory_space<vmem>>, vector<32x128xf32>
    %cst_12 = arith.constant 0.000000e+00 : f32
    %16 = vector.broadcast %cst_12 : f32 to vector<8x32xf32>
    %cst_13 = arith.constant 0.000000e+00 : f32
    %17 = vector.broadcast %cst_13 : f32 to vector<8x32xf32>
    %18 = vector.extract_strided_slice %14 {offsets = [0, 0], sizes = [8, 128], strides = [1, 1]} : vector<64x128xf32> to vector<8x128xf32>
    %cst_14 = arith.constant dense<0.000000e+00> : vector<8x128xf32>
    %19 = tpu.matmul %16, %15, %cst_14 {dimension_numbers = #tpu.dot_dimension_numbers<[1], [0], [0], [1], [0, 0, 1, 1], [], []>} : vector<8x32xf32>, vector<32x128xf32>, vector<8x128xf32> -> vector<8x128xf32>
    %20 = arith.addf %18, %19 : vector<8x128xf32>
    %21 = vector.extract_strided_slice %20 {offsets = [0, 0], sizes = [8, 32], strides = [1, 1]} : vector<8x128xf32> to vector<8x32xf32>
    %22 = arith.negf %21 : vector<8x32xf32>
    %23 = math.exp %22 : vector<8x32xf32>
    %cst_15 = arith.constant 1.000000e+00 : f32
    %24 = vector.broadcast %cst_15 : f32 to vector<8x32xf32>
    %25 = arith.addf %24, %23 : vector<8x32xf32>
    %26 = arith.divf %24, %25 : vector<8x32xf32>
    %27 = vector.extract_strided_slice %20 {offsets = [0, 32], sizes = [8, 32], strides = [1, 1]} : vector<8x128xf32> to vector<8x32xf32>
    %28 = arith.negf %27 : vector<8x32xf32>
    %29 = math.exp %28 : vector<8x32xf32>
    %cst_16 = arith.constant 1.000000e+00 : f32
    %30 = vector.broadcast %cst_16 : f32 to vector<8x32xf32>
    %31 = arith.addf %30, %29 : vector<8x32xf32>
    %32 = arith.divf %30, %31 : vector<8x32xf32>
    %33 = vector.extract_strided_slice %20 {offsets = [0, 64], sizes = [8, 32], strides = [1, 1]} : vector<8x128xf32> to vector<8x32xf32>
    %34 = math.tanh %33 : vector<8x32xf32>
    %35 = vector.extract_strided_slice %20 {offsets = [0, 96], sizes = [8, 32], strides = [1, 1]} : vector<8x128xf32> to vector<8x32xf32>
    %36 = arith.negf %35 : vector<8x32xf32>
    %37 = math.exp %36 : vector<8x32xf32>
    %cst_17 = arith.constant 1.000000e+00 : f32
    %38 = vector.broadcast %cst_17 : f32 to vector<8x32xf32>
    %39 = arith.addf %38, %37 : vector<8x32xf32>
    %40 = arith.divf %38, %39 : vector<8x32xf32>
    %41 = arith.mulf %32, %17 : vector<8x32xf32>
    %42 = arith.mulf %26, %34 : vector<8x32xf32>
    %43 = arith.addf %41, %42 : vector<8x32xf32>
    %44 = math.tanh %43 : vector<8x32xf32>
    %45 = arith.mulf %40, %44 : vector<8x32xf32>
    %46 = vector.extract_strided_slice %14 {offsets = [8, 0], sizes = [8, 128], strides = [1, 1]} : vector<64x128xf32> to vector<8x128xf32>
    %cst_18 = arith.constant dense<0.000000e+00> : vector<8x128xf32>
    %47 = tpu.matmul %45, %15, %cst_18 {dimension_numbers = #tpu.dot_dimension_numbers<[1], [0], [0], [1], [0, 0, 1, 1], [], []>} : vector<8x32xf32>, vector<32x128xf32>, vector<8x128xf32> -> vector<8x128xf32>
    %48 = arith.addf %46, %47 : vector<8x128xf32>
    %49 = vector.extract_strided_slice %48 {offsets = [0, 0], sizes = [8, 32], strides = [1, 1]} : vector<8x128xf32> to vector<8x32xf32>
    %50 = arith.negf %49 : vector<8x32xf32>
    %51 = math.exp %50 : vector<8x32xf32>
    %cst_19 = arith.constant 1.000000e+00 : f32
    %52 = vector.broadcast %cst_19 : f32 to vector<8x32xf32>
    %53 = arith.addf %52, %51 : vector<8x32xf32>
    %54 = arith.divf %52, %53 : vector<8x32xf32>
    %55 = vector.extract_strided_slice %48 {offsets = [0, 32], sizes = [8, 32], strides = [1, 1]} : vector<8x128xf32> to vector<8x32xf32>
    %56 = arith.negf %55 : vector<8x32xf32>
    %57 = math.exp %56 : vector<8x32xf32>
    %cst_20 = arith.constant 1.000000e+00 : f32
    %58 = vector.broadcast %cst_20 : f32 to vector<8x32xf32>
    %59 = arith.addf %58, %57 : vector<8x32xf32>
    %60 = arith.divf %58, %59 : vector<8x32xf32>
    %61 = vector.extract_strided_slice %48 {offsets = [0, 64], sizes = [8, 32], strides = [1, 1]} : vector<8x128xf32> to vector<8x32xf32>
    %62 = math.tanh %61 : vector<8x32xf32>
    %63 = vector.extract_strided_slice %48 {offsets = [0, 96], sizes = [8, 32], strides = [1, 1]} : vector<8x128xf32> to vector<8x32xf32>
    %64 = arith.negf %63 : vector<8x32xf32>
    %65 = math.exp %64 : vector<8x32xf32>
    %cst_21 = arith.constant 1.000000e+00 : f32
    %66 = vector.broadcast %cst_21 : f32 to vector<8x32xf32>
    %67 = arith.addf %66, %65 : vector<8x32xf32>
    %68 = arith.divf %66, %67 : vector<8x32xf32>
    %69 = arith.mulf %60, %43 : vector<8x32xf32>
    %70 = arith.mulf %54, %62 : vector<8x32xf32>
    %71 = arith.addf %69, %70 : vector<8x32xf32>
    %72 = math.tanh %71 : vector<8x32xf32>
    %73 = arith.mulf %68, %72 : vector<8x32xf32>
    %74 = vector.extract_strided_slice %14 {offsets = [16, 0], sizes = [8, 128], strides = [1, 1]} : vector<64x128xf32> to vector<8x128xf32>
    %cst_22 = arith.constant dense<0.000000e+00> : vector<8x128xf32>
    %75 = tpu.matmul %73, %15, %cst_22 {dimension_numbers = #tpu.dot_dimension_numbers<[1], [0], [0], [1], [0, 0, 1, 1], [], []>} : vector<8x32xf32>, vector<32x128xf32>, vector<8x128xf32> -> vector<8x128xf32>
    %76 = arith.addf %74, %75 : vector<8x128xf32>
    %77 = vector.extract_strided_slice %76 {offsets = [0, 0], sizes = [8, 32], strides = [1, 1]} : vector<8x128xf32> to vector<8x32xf32>
    %78 = arith.negf %77 : vector<8x32xf32>
    %79 = math.exp %78 : vector<8x32xf32>
    %cst_23 = arith.constant 1.000000e+00 : f32
    %80 = vector.broadcast %cst_23 : f32 to vector<8x32xf32>
    %81 = arith.addf %80, %79 : vector<8x32xf32>
    %82 = arith.divf %80, %81 : vector<8x32xf32>
    %83 = vector.extract_strided_slice %76 {offsets = [0, 32], sizes = [8, 32], strides = [1, 1]} : vector<8x128xf32> to vector<8x32xf32>
    %84 = arith.negf %83 : vector<8x32xf32>
    %85 = math.exp %84 : vector<8x32xf32>
    %cst_24 = arith.constant 1.000000e+00 : f32
    %86 = vector.broadcast %cst_24 : f32 to vector<8x32xf32>
    %87 = arith.addf %86, %85 : vector<8x32xf32>
    %88 = arith.divf %86, %87 : vector<8x32xf32>
    %89 = vector.extract_strided_slice %76 {offsets = [0, 64], sizes = [8, 32], strides = [1, 1]} : vector<8x128xf32> to vector<8x32xf32>
    %90 = math.tanh %89 : vector<8x32xf32>
    %91 = vector.extract_strided_slice %76 {offsets = [0, 96], sizes = [8, 32], strides = [1, 1]} : vector<8x128xf32> to vector<8x32xf32>
    %92 = arith.negf %91 : vector<8x32xf32>
    %93 = math.exp %92 : vector<8x32xf32>
    %cst_25 = arith.constant 1.000000e+00 : f32
    %94 = vector.broadcast %cst_25 : f32 to vector<8x32xf32>
    %95 = arith.addf %94, %93 : vector<8x32xf32>
    %96 = arith.divf %94, %95 : vector<8x32xf32>
    %97 = arith.mulf %88, %71 : vector<8x32xf32>
    %98 = arith.mulf %82, %90 : vector<8x32xf32>
    %99 = arith.addf %97, %98 : vector<8x32xf32>
    %100 = math.tanh %99 : vector<8x32xf32>
    %101 = arith.mulf %96, %100 : vector<8x32xf32>
    %102 = vector.extract_strided_slice %14 {offsets = [24, 0], sizes = [8, 128], strides = [1, 1]} : vector<64x128xf32> to vector<8x128xf32>
    %cst_26 = arith.constant dense<0.000000e+00> : vector<8x128xf32>
    %103 = tpu.matmul %101, %15, %cst_26 {dimension_numbers = #tpu.dot_dimension_numbers<[1], [0], [0], [1], [0, 0, 1, 1], [], []>} : vector<8x32xf32>, vector<32x128xf32>, vector<8x128xf32> -> vector<8x128xf32>
    %104 = arith.addf %102, %103 : vector<8x128xf32>
    %105 = vector.extract_strided_slice %104 {offsets = [0, 0], sizes = [8, 32], strides = [1, 1]} : vector<8x128xf32> to vector<8x32xf32>
    %106 = arith.negf %105 : vector<8x32xf32>
    %107 = math.exp %106 : vector<8x32xf32>
    %cst_27 = arith.constant 1.000000e+00 : f32
    %108 = vector.broadcast %cst_27 : f32 to vector<8x32xf32>
    %109 = arith.addf %108, %107 : vector<8x32xf32>
    %110 = arith.divf %108, %109 : vector<8x32xf32>
    %111 = vector.extract_strided_slice %104 {offsets = [0, 32], sizes = [8, 32], strides = [1, 1]} : vector<8x128xf32> to vector<8x32xf32>
    %112 = arith.negf %111 : vector<8x32xf32>
    %113 = math.exp %112 : vector<8x32xf32>
    %cst_28 = arith.constant 1.000000e+00 : f32
    %114 = vector.broadcast %cst_28 : f32 to vector<8x32xf32>
    %115 = arith.addf %114, %113 : vector<8x32xf32>
    %116 = arith.divf %114, %115 : vector<8x32xf32>
    %117 = vector.extract_strided_slice %104 {offsets = [0, 64], sizes = [8, 32], strides = [1, 1]} : vector<8x128xf32> to vector<8x32xf32>
    %118 = math.tanh %117 : vector<8x32xf32>
    %119 = vector.extract_strided_slice %104 {offsets = [0, 96], sizes = [8, 32], strides = [1, 1]} : vector<8x128xf32> to vector<8x32xf32>
    %120 = arith.negf %119 : vector<8x32xf32>
    %121 = math.exp %120 : vector<8x32xf32>
    %cst_29 = arith.constant 1.000000e+00 : f32
    %122 = vector.broadcast %cst_29 : f32 to vector<8x32xf32>
    %123 = arith.addf %122, %121 : vector<8x32xf32>
    %124 = arith.divf %122, %123 : vector<8x32xf32>
    %125 = arith.mulf %116, %99 : vector<8x32xf32>
    %126 = arith.mulf %110, %118 : vector<8x32xf32>
    %127 = arith.addf %125, %126 : vector<8x32xf32>
    %128 = math.tanh %127 : vector<8x32xf32>
    %129 = arith.mulf %124, %128 : vector<8x32xf32>
    %130 = vector.extract_strided_slice %14 {offsets = [32, 0], sizes = [8, 128], strides = [1, 1]} : vector<64x128xf32> to vector<8x128xf32>
    %cst_30 = arith.constant dense<0.000000e+00> : vector<8x128xf32>
    %131 = tpu.matmul %129, %15, %cst_30 {dimension_numbers = #tpu.dot_dimension_numbers<[1], [0], [0], [1], [0, 0, 1, 1], [], []>} : vector<8x32xf32>, vector<32x128xf32>, vector<8x128xf32> -> vector<8x128xf32>
    %132 = arith.addf %130, %131 : vector<8x128xf32>
    %133 = vector.extract_strided_slice %132 {offsets = [0, 0], sizes = [8, 32], strides = [1, 1]} : vector<8x128xf32> to vector<8x32xf32>
    %134 = arith.negf %133 : vector<8x32xf32>
    %135 = math.exp %134 : vector<8x32xf32>
    %cst_31 = arith.constant 1.000000e+00 : f32
    %136 = vector.broadcast %cst_31 : f32 to vector<8x32xf32>
    %137 = arith.addf %136, %135 : vector<8x32xf32>
    %138 = arith.divf %136, %137 : vector<8x32xf32>
    %139 = vector.extract_strided_slice %132 {offsets = [0, 32], sizes = [8, 32], strides = [1, 1]} : vector<8x128xf32> to vector<8x32xf32>
    %140 = arith.negf %139 : vector<8x32xf32>
    %141 = math.exp %140 : vector<8x32xf32>
    %cst_32 = arith.constant 1.000000e+00 : f32
    %142 = vector.broadcast %cst_32 : f32 to vector<8x32xf32>
    %143 = arith.addf %142, %141 : vector<8x32xf32>
    %144 = arith.divf %142, %143 : vector<8x32xf32>
    %145 = vector.extract_strided_slice %132 {offsets = [0, 64], sizes = [8, 32], strides = [1, 1]} : vector<8x128xf32> to vector<8x32xf32>
    %146 = math.tanh %145 : vector<8x32xf32>
    %147 = vector.extract_strided_slice %132 {offsets = [0, 96], sizes = [8, 32], strides = [1, 1]} : vector<8x128xf32> to vector<8x32xf32>
    %148 = arith.negf %147 : vector<8x32xf32>
    %149 = math.exp %148 : vector<8x32xf32>
    %cst_33 = arith.constant 1.000000e+00 : f32
    %150 = vector.broadcast %cst_33 : f32 to vector<8x32xf32>
    %151 = arith.addf %150, %149 : vector<8x32xf32>
    %152 = arith.divf %150, %151 : vector<8x32xf32>
    %153 = arith.mulf %144, %127 : vector<8x32xf32>
    %154 = arith.mulf %138, %146 : vector<8x32xf32>
    %155 = arith.addf %153, %154 : vector<8x32xf32>
    %156 = math.tanh %155 : vector<8x32xf32>
    %157 = arith.mulf %152, %156 : vector<8x32xf32>
    %158 = vector.extract_strided_slice %14 {offsets = [40, 0], sizes = [8, 128], strides = [1, 1]} : vector<64x128xf32> to vector<8x128xf32>
    %cst_34 = arith.constant dense<0.000000e+00> : vector<8x128xf32>
    %159 = tpu.matmul %157, %15, %cst_34 {dimension_numbers = #tpu.dot_dimension_numbers<[1], [0], [0], [1], [0, 0, 1, 1], [], []>} : vector<8x32xf32>, vector<32x128xf32>, vector<8x128xf32> -> vector<8x128xf32>
    %160 = arith.addf %158, %159 : vector<8x128xf32>
    %161 = vector.extract_strided_slice %160 {offsets = [0, 0], sizes = [8, 32], strides = [1, 1]} : vector<8x128xf32> to vector<8x32xf32>
    %162 = arith.negf %161 : vector<8x32xf32>
    %163 = math.exp %162 : vector<8x32xf32>
    %cst_35 = arith.constant 1.000000e+00 : f32
    %164 = vector.broadcast %cst_35 : f32 to vector<8x32xf32>
    %165 = arith.addf %164, %163 : vector<8x32xf32>
    %166 = arith.divf %164, %165 : vector<8x32xf32>
    %167 = vector.extract_strided_slice %160 {offsets = [0, 32], sizes = [8, 32], strides = [1, 1]} : vector<8x128xf32> to vector<8x32xf32>
    %168 = arith.negf %167 : vector<8x32xf32>
    %169 = math.exp %168 : vector<8x32xf32>
    %cst_36 = arith.constant 1.000000e+00 : f32
    %170 = vector.broadcast %cst_36 : f32 to vector<8x32xf32>
    %171 = arith.addf %170, %169 : vector<8x32xf32>
    %172 = arith.divf %170, %171 : vector<8x32xf32>
    %173 = vector.extract_strided_slice %160 {offsets = [0, 64], sizes = [8, 32], strides = [1, 1]} : vector<8x128xf32> to vector<8x32xf32>
    %174 = math.tanh %173 : vector<8x32xf32>
    %175 = vector.extract_strided_slice %160 {offsets = [0, 96], sizes = [8, 32], strides = [1, 1]} : vector<8x128xf32> to vector<8x32xf32>
    %176 = arith.negf %175 : vector<8x32xf32>
    %177 = math.exp %176 : vector<8x32xf32>
    %cst_37 = arith.constant 1.000000e+00 : f32
    %178 = vector.broadcast %cst_37 : f32 to vector<8x32xf32>
    %179 = arith.addf %178, %177 : vector<8x32xf32>
    %180 = arith.divf %178, %179 : vector<8x32xf32>
    %181 = arith.mulf %172, %155 : vector<8x32xf32>
    %182 = arith.mulf %166, %174 : vector<8x32xf32>
    %183 = arith.addf %181, %182 : vector<8x32xf32>
    %184 = math.tanh %183 : vector<8x32xf32>
    %185 = arith.mulf %180, %184 : vector<8x32xf32>
    %186 = vector.extract_strided_slice %14 {offsets = [48, 0], sizes = [8, 128], strides = [1, 1]} : vector<64x128xf32> to vector<8x128xf32>
    %cst_38 = arith.constant dense<0.000000e+00> : vector<8x128xf32>
    %187 = tpu.matmul %185, %15, %cst_38 {dimension_numbers = #tpu.dot_dimension_numbers<[1], [0], [0], [1], [0, 0, 1, 1], [], []>} : vector<8x32xf32>, vector<32x128xf32>, vector<8x128xf32> -> vector<8x128xf32>
    %188 = arith.addf %186, %187 : vector<8x128xf32>
    %189 = vector.extract_strided_slice %188 {offsets = [0, 0], sizes = [8, 32], strides = [1, 1]} : vector<8x128xf32> to vector<8x32xf32>
    %190 = arith.negf %189 : vector<8x32xf32>
    %191 = math.exp %190 : vector<8x32xf32>
    %cst_39 = arith.constant 1.000000e+00 : f32
    %192 = vector.broadcast %cst_39 : f32 to vector<8x32xf32>
    %193 = arith.addf %192, %191 : vector<8x32xf32>
    %194 = arith.divf %192, %193 : vector<8x32xf32>
    %195 = vector.extract_strided_slice %188 {offsets = [0, 32], sizes = [8, 32], strides = [1, 1]} : vector<8x128xf32> to vector<8x32xf32>
    %196 = arith.negf %195 : vector<8x32xf32>
    %197 = math.exp %196 : vector<8x32xf32>
    %cst_40 = arith.constant 1.000000e+00 : f32
    %198 = vector.broadcast %cst_40 : f32 to vector<8x32xf32>
    %199 = arith.addf %198, %197 : vector<8x32xf32>
    %200 = arith.divf %198, %199 : vector<8x32xf32>
    %201 = vector.extract_strided_slice %188 {offsets = [0, 64], sizes = [8, 32], strides = [1, 1]} : vector<8x128xf32> to vector<8x32xf32>
    %202 = math.tanh %201 : vector<8x32xf32>
    %203 = vector.extract_strided_slice %188 {offsets = [0, 96], sizes = [8, 32], strides = [1, 1]} : vector<8x128xf32> to vector<8x32xf32>
    %204 = arith.negf %203 : vector<8x32xf32>
    %205 = math.exp %204 : vector<8x32xf32>
    %cst_41 = arith.constant 1.000000e+00 : f32
    %206 = vector.broadcast %cst_41 : f32 to vector<8x32xf32>
    %207 = arith.addf %206, %205 : vector<8x32xf32>
    %208 = arith.divf %206, %207 : vector<8x32xf32>
    %209 = arith.mulf %200, %183 : vector<8x32xf32>
    %210 = arith.mulf %194, %202 : vector<8x32xf32>
    %211 = arith.addf %209, %210 : vector<8x32xf32>
    %212 = math.tanh %211 : vector<8x32xf32>
    %213 = arith.mulf %208, %212 : vector<8x32xf32>
    %214 = vector.extract_strided_slice %14 {offsets = [56, 0], sizes = [8, 128], strides = [1, 1]} : vector<64x128xf32> to vector<8x128xf32>
    %cst_42 = arith.constant dense<0.000000e+00> : vector<8x128xf32>
    %215 = tpu.matmul %213, %15, %cst_42 {dimension_numbers = #tpu.dot_dimension_numbers<[1], [0], [0], [1], [0, 0, 1, 1], [], []>} : vector<8x32xf32>, vector<32x128xf32>, vector<8x128xf32> -> vector<8x128xf32>
    %216 = arith.addf %214, %215 : vector<8x128xf32>
    %217 = vector.extract_strided_slice %216 {offsets = [0, 0], sizes = [8, 32], strides = [1, 1]} : vector<8x128xf32> to vector<8x32xf32>
    %218 = arith.negf %217 : vector<8x32xf32>
    %219 = math.exp %218 : vector<8x32xf32>
    %cst_43 = arith.constant 1.000000e+00 : f32
    %220 = vector.broadcast %cst_43 : f32 to vector<8x32xf32>
    %221 = arith.addf %220, %219 : vector<8x32xf32>
    %222 = arith.divf %220, %221 : vector<8x32xf32>
    %223 = vector.extract_strided_slice %216 {offsets = [0, 32], sizes = [8, 32], strides = [1, 1]} : vector<8x128xf32> to vector<8x32xf32>
    %224 = arith.negf %223 : vector<8x32xf32>
    %225 = math.exp %224 : vector<8x32xf32>
    %cst_44 = arith.constant 1.000000e+00 : f32
    %226 = vector.broadcast %cst_44 : f32 to vector<8x32xf32>
    %227 = arith.addf %226, %225 : vector<8x32xf32>
    %228 = arith.divf %226, %227 : vector<8x32xf32>
    %229 = vector.extract_strided_slice %216 {offsets = [0, 64], sizes = [8, 32], strides = [1, 1]} : vector<8x128xf32> to vector<8x32xf32>
    %230 = math.tanh %229 : vector<8x32xf32>
    %231 = vector.extract_strided_slice %216 {offsets = [0, 96], sizes = [8, 32], strides = [1, 1]} : vector<8x128xf32> to vector<8x32xf32>
    %232 = arith.negf %231 : vector<8x32xf32>
    %233 = math.exp %232 : vector<8x32xf32>
    %cst_45 = arith.constant 1.000000e+00 : f32
    %234 = vector.broadcast %cst_45 : f32 to vector<8x32xf32>
    %235 = arith.addf %234, %233 : vector<8x32xf32>
    %236 = arith.divf %234, %235 : vector<8x32xf32>
    %237 = arith.mulf %228, %211 : vector<8x32xf32>
    %238 = arith.mulf %222, %230 : vector<8x32xf32>
    %239 = arith.addf %237, %238 : vector<8x32xf32>
    %240 = math.tanh %239 : vector<8x32xf32>
    %241 = arith.mulf %236, %240 : vector<8x32xf32>
    %c0_46 = arith.constant 0 : index
    %c0_47 = arith.constant 0 : index
    %242 = vector.load %arg4[%c0_46, %c0_47] : memref<128x16xf32, #tpu.memory_space<vmem>>, vector<128x16xf32>
    %c0_48 = arith.constant 0 : index
    %c0_49 = arith.constant 0 : index
    %243 = vector.load %arg5[%c0_48, %c0_49] : memref<16x128xf32, #tpu.memory_space<vmem>>, vector<16x128xf32>
    %cst_50 = arith.constant dense<0.000000e+00> : vector<128x128xf32>
    %244 = tpu.matmul %242, %243, %cst_50 {dimension_numbers = #tpu.dot_dimension_numbers<[1], [0], [0], [1], [0, 0, 1, 1], [], []>} : vector<128x16xf32>, vector<16x128xf32>, vector<128x128xf32> -> vector<128x128xf32>
    %c0_51 = arith.constant 0 : index
    %c0_52 = arith.constant 0 : index
    %245 = vector.load %arg7[%c0_51, %c0_52] : memref<1x128xf32, #tpu.memory_space<vmem>>, vector<1x128xf32>
    %246 = vector.broadcast %245 : vector<1x128xf32> to vector<128x128xf32>
    %247 = arith.addf %244, %246 : vector<128x128xf32>
    %c0_53 = arith.constant 0 : index
    %c0_54 = arith.constant 0 : index
    %248 = vector.load %arg6[%c0_53, %c0_54] : memref<32x256xf32, #tpu.memory_space<vmem>>, vector<32x256xf32>
    %c0_55 = arith.constant 0 : index
    %c0_56 = arith.constant 0 : index
    %249 = vector.load %arg8[%c0_55, %c0_56] : memref<1x128xf32, #tpu.memory_space<vmem>>, vector<1x128xf32>
    %250 = vector.shape_cast %249 : vector<1x128xf32> to vector<1x128xf32>
    %251 = vector.broadcast %250 : vector<1x128xf32> to vector<8x128xf32>
    %cst_57 = arith.constant dense<0.000000e+00> : vector<8x256xf32>
    %252 = tpu.matmul %241, %248, %cst_57 {dimension_numbers = #tpu.dot_dimension_numbers<[1], [0], [0], [1], [0, 0, 1, 1], [], []>} : vector<8x32xf32>, vector<32x256xf32>, vector<8x256xf32> -> vector<8x256xf32>
    %253 = vector.extract_strided_slice %252 {offsets = [0, 128], sizes = [8, 128], strides = [1, 1]} : vector<8x256xf32> to vector<8x128xf32>
    %cst_58 = arith.constant dense<0.000000e+00> : vector<8x128xf32>
    %254 = tpu.matmul %5, %247, %cst_58 {dimension_numbers = #tpu.dot_dimension_numbers<[1], [0], [0], [1], [0, 0, 1, 1], [], []>} : vector<8x128xf32>, vector<128x128xf32>, vector<8x128xf32> -> vector<8x128xf32>
    %255 = arith.addf %254, %253 : vector<8x128xf32>
    %256 = vector.extract_strided_slice %255 {offsets = [0, 0], sizes = [8, 32], strides = [1, 1]} : vector<8x128xf32> to vector<8x32xf32>
    %257 = arith.negf %256 : vector<8x32xf32>
    %258 = math.exp %257 : vector<8x32xf32>
    %cst_59 = arith.constant 1.000000e+00 : f32
    %259 = vector.broadcast %cst_59 : f32 to vector<8x32xf32>
    %260 = arith.addf %259, %258 : vector<8x32xf32>
    %261 = arith.divf %259, %260 : vector<8x32xf32>
    %262 = vector.extract_strided_slice %255 {offsets = [0, 32], sizes = [8, 32], strides = [1, 1]} : vector<8x128xf32> to vector<8x32xf32>
    %263 = arith.negf %262 : vector<8x32xf32>
    %264 = math.exp %263 : vector<8x32xf32>
    %cst_60 = arith.constant 1.000000e+00 : f32
    %265 = vector.broadcast %cst_60 : f32 to vector<8x32xf32>
    %266 = arith.addf %265, %264 : vector<8x32xf32>
    %267 = arith.divf %265, %266 : vector<8x32xf32>
    %268 = vector.extract_strided_slice %255 {offsets = [0, 64], sizes = [8, 32], strides = [1, 1]} : vector<8x128xf32> to vector<8x32xf32>
    %269 = math.tanh %268 : vector<8x32xf32>
    %270 = vector.extract_strided_slice %255 {offsets = [0, 96], sizes = [8, 32], strides = [1, 1]} : vector<8x128xf32> to vector<8x32xf32>
    %271 = arith.negf %270 : vector<8x32xf32>
    %272 = math.exp %271 : vector<8x32xf32>
    %cst_61 = arith.constant 1.000000e+00 : f32
    %273 = vector.broadcast %cst_61 : f32 to vector<8x32xf32>
    %274 = arith.addf %273, %272 : vector<8x32xf32>
    %275 = arith.divf %273, %274 : vector<8x32xf32>
    %276 = arith.mulf %267, %239 : vector<8x32xf32>
    %277 = arith.mulf %261, %269 : vector<8x32xf32>
    %278 = arith.addf %276, %277 : vector<8x32xf32>
    %279 = math.tanh %278 : vector<8x32xf32>
    %280 = arith.mulf %275, %279 : vector<8x32xf32>
    %cst_62 = arith.constant dense<0.000000e+00> : vector<8x256xf32>
    %281 = tpu.matmul %280, %248, %cst_62 {dimension_numbers = #tpu.dot_dimension_numbers<[1], [0], [0], [1], [0, 0, 1, 1], [], []>} : vector<8x32xf32>, vector<32x256xf32>, vector<8x256xf32> -> vector<8x256xf32>
    %282 = vector.extract_strided_slice %281 {offsets = [0, 0], sizes = [8, 128], strides = [1, 1]} : vector<8x256xf32> to vector<8x128xf32>
    %283 = arith.addf %282, %251 : vector<8x128xf32>
    %c1 = arith.constant 1 : index
    %c0_63 = arith.constant 0 : index
    %c0_64 = arith.constant 0 : index
    %284 = vector.load %arg9[%c1, %c0_63, %c0_64] : memref<8x8x128xf32, #tpu.memory_space<vmem>>, vector<1x8x128xf32>
    %285 = vector.shape_cast %284 : vector<1x8x128xf32> to vector<8x128xf32>
    %286 = vector.shape_cast %283 : vector<8x128xf32> to vector<1x8x128xf32>
    tpu.vector_store %arg9[%c1, %c0_63, %c0_64], %286 {strides = array<i32>} : memref<8x8x128xf32, #tpu.memory_space<vmem>>, vector<1x8x128xf32>,
    %287 = vector.extract_strided_slice %281 {offsets = [0, 128], sizes = [8, 128], strides = [1, 1]} : vector<8x256xf32> to vector<8x128xf32>
    %cst_65 = arith.constant dense<0xFF800000> : vector<8xf32>
    %288 = vector.multi_reduction <maximumf>, %283, %cst_65 [1] : vector<8x128xf32> to vector<8xf32>
    %289 = vector.shape_cast %288 : vector<8xf32> to vector<8x1xf32>
    %290 = vector.broadcast %289 : vector<8x1xf32> to vector<8x128xf32>
    %291 = arith.cmpf oeq, %283, %290 : vector<8x128xf32>
    %c128_i32 = arith.constant 128 : i32
    %292 = vector.broadcast %c128_i32 : i32 to vector<8x128xi32>
    %293 = arith.select %291, %0, %292 : vector<8x128xi1>, vector<8x128xi32>
    %cst_66 = arith.constant dense<2147483647> : vector<8xi32>
    %294 = vector.multi_reduction <minsi>, %293, %cst_66 [1] : vector<8x128xi32> to vector<8xi32>
    %295 = vector.shape_cast %294 : vector<8xi32> to vector<8x1xi32>
    %296 = vector.broadcast %295 : vector<8x1xi32> to vector<8x128xi32>
    %297 = arith.cmpi eq, %0, %296 : vector<8x128xi32>
    %cst_67 = arith.constant 1.000000e+00 : f32
    %cst_68 = arith.constant 0.000000e+00 : f32
    %298 = vector.broadcast %cst_67 : f32 to vector<8x128xf32>
    %299 = vector.broadcast %cst_68 : f32 to vector<8x128xf32>
    %300 = arith.select %297, %298, %299 : vector<8x128xi1>, vector<8x128xf32>
    %cst_69 = arith.constant dense<0.000000e+00> : vector<8x128xf32>
    %301 = tpu.matmul %300, %247, %cst_69 {dimension_numbers = #tpu.dot_dimension_numbers<[1], [0], [0], [1], [0, 0, 1, 1], [], []>} : vector<8x128xf32>, vector<128x128xf32>, vector<8x128xf32> -> vector<8x128xf32>
    %302 = arith.addf %301, %287 : vector<8x128xf32>
    %303 = vector.extract_strided_slice %302 {offsets = [0, 0], sizes = [8, 32], strides = [1, 1]} : vector<8x128xf32> to vector<8x32xf32>
    %304 = arith.negf %303 : vector<8x32xf32>
    %305 = math.exp %304 : vector<8x32xf32>
    %cst_70 = arith.constant 1.000000e+00 : f32
    %306 = vector.broadcast %cst_70 : f32 to vector<8x32xf32>
    %307 = arith.addf %306, %305 : vector<8x32xf32>
    %308 = arith.divf %306, %307 : vector<8x32xf32>
    %309 = vector.extract_strided_slice %302 {offsets = [0, 32], sizes = [8, 32], strides = [1, 1]} : vector<8x128xf32> to vector<8x32xf32>
    %310 = arith.negf %309 : vector<8x32xf32>
    %311 = math.exp %310 : vector<8x32xf32>
    %cst_71 = arith.constant 1.000000e+00 : f32
    %312 = vector.broadcast %cst_71 : f32 to vector<8x32xf32>
    %313 = arith.addf %312, %311 : vector<8x32xf32>
    %314 = arith.divf %312, %313 : vector<8x32xf32>
    %315 = vector.extract_strided_slice %302 {offsets = [0, 64], sizes = [8, 32], strides = [1, 1]} : vector<8x128xf32> to vector<8x32xf32>
    %316 = math.tanh %315 : vector<8x32xf32>
    %317 = vector.extract_strided_slice %302 {offsets = [0, 96], sizes = [8, 32], strides = [1, 1]} : vector<8x128xf32> to vector<8x32xf32>
    %318 = arith.negf %317 : vector<8x32xf32>
    %319 = math.exp %318 : vector<8x32xf32>
    %cst_72 = arith.constant 1.000000e+00 : f32
    %320 = vector.broadcast %cst_72 : f32 to vector<8x32xf32>
    %321 = arith.addf %320, %319 : vector<8x32xf32>
    %322 = arith.divf %320, %321 : vector<8x32xf32>
    %323 = arith.mulf %314, %278 : vector<8x32xf32>
    %324 = arith.mulf %308, %316 : vector<8x32xf32>
    %325 = arith.addf %323, %324 : vector<8x32xf32>
    %326 = math.tanh %325 : vector<8x32xf32>
    %327 = arith.mulf %322, %326 : vector<8x32xf32>
    %cst_73 = arith.constant dense<0.000000e+00> : vector<8x256xf32>
    %328 = tpu.matmul %327, %248, %cst_73 {dimension_numbers = #tpu.dot_dimension_numbers<[1], [0], [0], [1], [0, 0, 1, 1], [], []>} : vector<8x32xf32>, vector<32x256xf32>, vector<8x256xf32> -> vector<8x256xf32>
    %329 = vector.extract_strided_slice %328 {offsets = [0, 0], sizes = [8, 128], strides = [1, 1]} : vector<8x256xf32> to vector<8x128xf32>
    %330 = arith.addf %329, %251 : vector<8x128xf32>
    %c2 = arith.constant 2 : index
    %c0_74 = arith.constant 0 : index
    %c0_75 = arith.constant 0 : index
    %331 = vector.load %arg9[%c2, %c0_74, %c0_75] : memref<8x8x128xf32, #tpu.memory_space<vmem>>, vector<1x8x128xf32>
    %332 = vector.shape_cast %331 : vector<1x8x128xf32> to vector<8x128xf32>
    %333 = vector.shape_cast %330 : vector<8x128xf32> to vector<1x8x128xf32>
    tpu.vector_store %arg9[%c2, %c0_74, %c0_75], %333 {strides = array<i32>} : memref<8x8x128xf32, #tpu.memory_space<vmem>>, vector<1x8x128xf32>,
    %334 = vector.extract_strided_slice %328 {offsets = [0, 128], sizes = [8, 128], strides = [1, 1]} : vector<8x256xf32> to vector<8x128xf32>
    %cst_76 = arith.constant dense<0xFF800000> : vector<8xf32>
    %335 = vector.multi_reduction <maximumf>, %330, %cst_76 [1] : vector<8x128xf32> to vector<8xf32>
    %336 = vector.shape_cast %335 : vector<8xf32> to vector<8x1xf32>
    %337 = vector.broadcast %336 : vector<8x1xf32> to vector<8x128xf32>
    %338 = arith.cmpf oeq, %330, %337 : vector<8x128xf32>
    %c128_i32_77 = arith.constant 128 : i32
    %339 = vector.broadcast %c128_i32_77 : i32 to vector<8x128xi32>
    %340 = arith.select %338, %0, %339 : vector<8x128xi1>, vector<8x128xi32>
    %cst_78 = arith.constant dense<2147483647> : vector<8xi32>
    %341 = vector.multi_reduction <minsi>, %340, %cst_78 [1] : vector<8x128xi32> to vector<8xi32>
    %342 = vector.shape_cast %341 : vector<8xi32> to vector<8x1xi32>
    %343 = vector.broadcast %342 : vector<8x1xi32> to vector<8x128xi32>
    %344 = arith.cmpi eq, %0, %343 : vector<8x128xi32>
    %cst_79 = arith.constant 1.000000e+00 : f32
    %cst_80 = arith.constant 0.000000e+00 : f32
    %345 = vector.broadcast %cst_79 : f32 to vector<8x128xf32>
    %346 = vector.broadcast %cst_80 : f32 to vector<8x128xf32>
    %347 = arith.select %344, %345, %346 : vector<8x128xi1>, vector<8x128xf32>
    %cst_81 = arith.constant dense<0.000000e+00> : vector<8x128xf32>
    %348 = tpu.matmul %347, %247, %cst_81 {dimension_numbers = #tpu.dot_dimension_numbers<[1], [0], [0], [1], [0, 0, 1, 1], [], []>} : vector<8x128xf32>, vector<128x128xf32>, vector<8x128xf32> -> vector<8x128xf32>
    %349 = arith.addf %348, %334 : vector<8x128xf32>
    %350 = vector.extract_strided_slice %349 {offsets = [0, 0], sizes = [8, 32], strides = [1, 1]} : vector<8x128xf32> to vector<8x32xf32>
    %351 = arith.negf %350 : vector<8x32xf32>
    %352 = math.exp %351 : vector<8x32xf32>
    %cst_82 = arith.constant 1.000000e+00 : f32
    %353 = vector.broadcast %cst_82 : f32 to vector<8x32xf32>
    %354 = arith.addf %353, %352 : vector<8x32xf32>
    %355 = arith.divf %353, %354 : vector<8x32xf32>
    %356 = vector.extract_strided_slice %349 {offsets = [0, 32], sizes = [8, 32], strides = [1, 1]} : vector<8x128xf32> to vector<8x32xf32>
    %357 = arith.negf %356 : vector<8x32xf32>
    %358 = math.exp %357 : vector<8x32xf32>
    %cst_83 = arith.constant 1.000000e+00 : f32
    %359 = vector.broadcast %cst_83 : f32 to vector<8x32xf32>
    %360 = arith.addf %359, %358 : vector<8x32xf32>
    %361 = arith.divf %359, %360 : vector<8x32xf32>
    %362 = vector.extract_strided_slice %349 {offsets = [0, 64], sizes = [8, 32], strides = [1, 1]} : vector<8x128xf32> to vector<8x32xf32>
    %363 = math.tanh %362 : vector<8x32xf32>
    %364 = vector.extract_strided_slice %349 {offsets = [0, 96], sizes = [8, 32], strides = [1, 1]} : vector<8x128xf32> to vector<8x32xf32>
    %365 = arith.negf %364 : vector<8x32xf32>
    %366 = math.exp %365 : vector<8x32xf32>
    %cst_84 = arith.constant 1.000000e+00 : f32
    %367 = vector.broadcast %cst_84 : f32 to vector<8x32xf32>
    %368 = arith.addf %367, %366 : vector<8x32xf32>
    %369 = arith.divf %367, %368 : vector<8x32xf32>
    %370 = arith.mulf %361, %325 : vector<8x32xf32>
    %371 = arith.mulf %355, %363 : vector<8x32xf32>
    %372 = arith.addf %370, %371 : vector<8x32xf32>
    %373 = math.tanh %372 : vector<8x32xf32>
    %374 = arith.mulf %369, %373 : vector<8x32xf32>
    %cst_85 = arith.constant dense<0.000000e+00> : vector<8x256xf32>
    %375 = tpu.matmul %374, %248, %cst_85 {dimension_numbers = #tpu.dot_dimension_numbers<[1], [0], [0], [1], [0, 0, 1, 1], [], []>} : vector<8x32xf32>, vector<32x256xf32>, vector<8x256xf32> -> vector<8x256xf32>
    %376 = vector.extract_strided_slice %375 {offsets = [0, 0], sizes = [8, 128], strides = [1, 1]} : vector<8x256xf32> to vector<8x128xf32>
    %377 = arith.addf %376, %251 : vector<8x128xf32>
    %c3 = arith.constant 3 : index
    %c0_86 = arith.constant 0 : index
    %c0_87 = arith.constant 0 : index
    %378 = vector.load %arg9[%c3, %c0_86, %c0_87] : memref<8x8x128xf32, #tpu.memory_space<vmem>>, vector<1x8x128xf32>
    %379 = vector.shape_cast %378 : vector<1x8x128xf32> to vector<8x128xf32>
    %380 = vector.shape_cast %377 : vector<8x128xf32> to vector<1x8x128xf32>
    tpu.vector_store %arg9[%c3, %c0_86, %c0_87], %380 {strides = array<i32>} : memref<8x8x128xf32, #tpu.memory_space<vmem>>, vector<1x8x128xf32>,
    %381 = vector.extract_strided_slice %375 {offsets = [0, 128], sizes = [8, 128], strides = [1, 1]} : vector<8x256xf32> to vector<8x128xf32>
    %cst_88 = arith.constant dense<0xFF800000> : vector<8xf32>
    %382 = vector.multi_reduction <maximumf>, %377, %cst_88 [1] : vector<8x128xf32> to vector<8xf32>
    %383 = vector.shape_cast %382 : vector<8xf32> to vector<8x1xf32>
    %384 = vector.broadcast %383 : vector<8x1xf32> to vector<8x128xf32>
    %385 = arith.cmpf oeq, %377, %384 : vector<8x128xf32>
    %c128_i32_89 = arith.constant 128 : i32
    %386 = vector.broadcast %c128_i32_89 : i32 to vector<8x128xi32>
    %387 = arith.select %385, %0, %386 : vector<8x128xi1>, vector<8x128xi32>
    %cst_90 = arith.constant dense<2147483647> : vector<8xi32>
    %388 = vector.multi_reduction <minsi>, %387, %cst_90 [1] : vector<8x128xi32> to vector<8xi32>
    %389 = vector.shape_cast %388 : vector<8xi32> to vector<8x1xi32>
    %390 = vector.broadcast %389 : vector<8x1xi32> to vector<8x128xi32>
    %391 = arith.cmpi eq, %0, %390 : vector<8x128xi32>
    %cst_91 = arith.constant 1.000000e+00 : f32
    %cst_92 = arith.constant 0.000000e+00 : f32
    %392 = vector.broadcast %cst_91 : f32 to vector<8x128xf32>
    %393 = vector.broadcast %cst_92 : f32 to vector<8x128xf32>
    %394 = arith.select %391, %392, %393 : vector<8x128xi1>, vector<8x128xf32>
    %cst_93 = arith.constant dense<0.000000e+00> : vector<8x128xf32>
    %395 = tpu.matmul %394, %247, %cst_93 {dimension_numbers = #tpu.dot_dimension_numbers<[1], [0], [0], [1], [0, 0, 1, 1], [], []>} : vector<8x128xf32>, vector<128x128xf32>, vector<8x128xf32> -> vector<8x128xf32>
    %396 = arith.addf %395, %381 : vector<8x128xf32>
    %397 = vector.extract_strided_slice %396 {offsets = [0, 0], sizes = [8, 32], strides = [1, 1]} : vector<8x128xf32> to vector<8x32xf32>
    %398 = arith.negf %397 : vector<8x32xf32>
    %399 = math.exp %398 : vector<8x32xf32>
    %cst_94 = arith.constant 1.000000e+00 : f32
    %400 = vector.broadcast %cst_94 : f32 to vector<8x32xf32>
    %401 = arith.addf %400, %399 : vector<8x32xf32>
    %402 = arith.divf %400, %401 : vector<8x32xf32>
    %403 = vector.extract_strided_slice %396 {offsets = [0, 32], sizes = [8, 32], strides = [1, 1]} : vector<8x128xf32> to vector<8x32xf32>
    %404 = arith.negf %403 : vector<8x32xf32>
    %405 = math.exp %404 : vector<8x32xf32>
    %cst_95 = arith.constant 1.000000e+00 : f32
    %406 = vector.broadcast %cst_95 : f32 to vector<8x32xf32>
    %407 = arith.addf %406, %405 : vector<8x32xf32>
    %408 = arith.divf %406, %407 : vector<8x32xf32>
    %409 = vector.extract_strided_slice %396 {offsets = [0, 64], sizes = [8, 32], strides = [1, 1]} : vector<8x128xf32> to vector<8x32xf32>
    %410 = math.tanh %409 : vector<8x32xf32>
    %411 = vector.extract_strided_slice %396 {offsets = [0, 96], sizes = [8, 32], strides = [1, 1]} : vector<8x128xf32> to vector<8x32xf32>
    %412 = arith.negf %411 : vector<8x32xf32>
    %413 = math.exp %412 : vector<8x32xf32>
    %cst_96 = arith.constant 1.000000e+00 : f32
    %414 = vector.broadcast %cst_96 : f32 to vector<8x32xf32>
    %415 = arith.addf %414, %413 : vector<8x32xf32>
    %416 = arith.divf %414, %415 : vector<8x32xf32>
    %417 = arith.mulf %408, %372 : vector<8x32xf32>
    %418 = arith.mulf %402, %410 : vector<8x32xf32>
    %419 = arith.addf %417, %418 : vector<8x32xf32>
    %420 = math.tanh %419 : vector<8x32xf32>
    %421 = arith.mulf %416, %420 : vector<8x32xf32>
    %cst_97 = arith.constant dense<0.000000e+00> : vector<8x256xf32>
    %422 = tpu.matmul %421, %248, %cst_97 {dimension_numbers = #tpu.dot_dimension_numbers<[1], [0], [0], [1], [0, 0, 1, 1], [], []>} : vector<8x32xf32>, vector<32x256xf32>, vector<8x256xf32> -> vector<8x256xf32>
    %423 = vector.extract_strided_slice %422 {offsets = [0, 0], sizes = [8, 128], strides = [1, 1]} : vector<8x256xf32> to vector<8x128xf32>
    %424 = arith.addf %423, %251 : vector<8x128xf32>
    %c4 = arith.constant 4 : index
    %c0_98 = arith.constant 0 : index
    %c0_99 = arith.constant 0 : index
    %425 = vector.load %arg9[%c4, %c0_98, %c0_99] : memref<8x8x128xf32, #tpu.memory_space<vmem>>, vector<1x8x128xf32>
    %426 = vector.shape_cast %425 : vector<1x8x128xf32> to vector<8x128xf32>
    %427 = vector.shape_cast %424 : vector<8x128xf32> to vector<1x8x128xf32>
    tpu.vector_store %arg9[%c4, %c0_98, %c0_99], %427 {strides = array<i32>} : memref<8x8x128xf32, #tpu.memory_space<vmem>>, vector<1x8x128xf32>,
    %428 = vector.extract_strided_slice %422 {offsets = [0, 128], sizes = [8, 128], strides = [1, 1]} : vector<8x256xf32> to vector<8x128xf32>
    %cst_100 = arith.constant dense<0xFF800000> : vector<8xf32>
    %429 = vector.multi_reduction <maximumf>, %424, %cst_100 [1] : vector<8x128xf32> to vector<8xf32>
    %430 = vector.shape_cast %429 : vector<8xf32> to vector<8x1xf32>
    %431 = vector.broadcast %430 : vector<8x1xf32> to vector<8x128xf32>
    %432 = arith.cmpf oeq, %424, %431 : vector<8x128xf32>
    %c128_i32_101 = arith.constant 128 : i32
    %433 = vector.broadcast %c128_i32_101 : i32 to vector<8x128xi32>
    %434 = arith.select %432, %0, %433 : vector<8x128xi1>, vector<8x128xi32>
    %cst_102 = arith.constant dense<2147483647> : vector<8xi32>
    %435 = vector.multi_reduction <minsi>, %434, %cst_102 [1] : vector<8x128xi32> to vector<8xi32>
    %436 = vector.shape_cast %435 : vector<8xi32> to vector<8x1xi32>
    %437 = vector.broadcast %436 : vector<8x1xi32> to vector<8x128xi32>
    %438 = arith.cmpi eq, %0, %437 : vector<8x128xi32>
    %cst_103 = arith.constant 1.000000e+00 : f32
    %cst_104 = arith.constant 0.000000e+00 : f32
    %439 = vector.broadcast %cst_103 : f32 to vector<8x128xf32>
    %440 = vector.broadcast %cst_104 : f32 to vector<8x128xf32>
    %441 = arith.select %438, %439, %440 : vector<8x128xi1>, vector<8x128xf32>
    %cst_105 = arith.constant dense<0.000000e+00> : vector<8x128xf32>
    %442 = tpu.matmul %441, %247, %cst_105 {dimension_numbers = #tpu.dot_dimension_numbers<[1], [0], [0], [1], [0, 0, 1, 1], [], []>} : vector<8x128xf32>, vector<128x128xf32>, vector<8x128xf32> -> vector<8x128xf32>
    %443 = arith.addf %442, %428 : vector<8x128xf32>
    %444 = vector.extract_strided_slice %443 {offsets = [0, 0], sizes = [8, 32], strides = [1, 1]} : vector<8x128xf32> to vector<8x32xf32>
    %445 = arith.negf %444 : vector<8x32xf32>
    %446 = math.exp %445 : vector<8x32xf32>
    %cst_106 = arith.constant 1.000000e+00 : f32
    %447 = vector.broadcast %cst_106 : f32 to vector<8x32xf32>
    %448 = arith.addf %447, %446 : vector<8x32xf32>
    %449 = arith.divf %447, %448 : vector<8x32xf32>
    %450 = vector.extract_strided_slice %443 {offsets = [0, 32], sizes = [8, 32], strides = [1, 1]} : vector<8x128xf32> to vector<8x32xf32>
    %451 = arith.negf %450 : vector<8x32xf32>
    %452 = math.exp %451 : vector<8x32xf32>
    %cst_107 = arith.constant 1.000000e+00 : f32
    %453 = vector.broadcast %cst_107 : f32 to vector<8x32xf32>
    %454 = arith.addf %453, %452 : vector<8x32xf32>
    %455 = arith.divf %453, %454 : vector<8x32xf32>
    %456 = vector.extract_strided_slice %443 {offsets = [0, 64], sizes = [8, 32], strides = [1, 1]} : vector<8x128xf32> to vector<8x32xf32>
    %457 = math.tanh %456 : vector<8x32xf32>
    %458 = vector.extract_strided_slice %443 {offsets = [0, 96], sizes = [8, 32], strides = [1, 1]} : vector<8x128xf32> to vector<8x32xf32>
    %459 = arith.negf %458 : vector<8x32xf32>
    %460 = math.exp %459 : vector<8x32xf32>
    %cst_108 = arith.constant 1.000000e+00 : f32
    %461 = vector.broadcast %cst_108 : f32 to vector<8x32xf32>
    %462 = arith.addf %461, %460 : vector<8x32xf32>
    %463 = arith.divf %461, %462 : vector<8x32xf32>
    %464 = arith.mulf %455, %419 : vector<8x32xf32>
    %465 = arith.mulf %449, %457 : vector<8x32xf32>
    %466 = arith.addf %464, %465 : vector<8x32xf32>
    %467 = math.tanh %466 : vector<8x32xf32>
    %468 = arith.mulf %463, %467 : vector<8x32xf32>
    %cst_109 = arith.constant dense<0.000000e+00> : vector<8x256xf32>
    %469 = tpu.matmul %468, %248, %cst_109 {dimension_numbers = #tpu.dot_dimension_numbers<[1], [0], [0], [1], [0, 0, 1, 1], [], []>} : vector<8x32xf32>, vector<32x256xf32>, vector<8x256xf32> -> vector<8x256xf32>
    %470 = vector.extract_strided_slice %469 {offsets = [0, 0], sizes = [8, 128], strides = [1, 1]} : vector<8x256xf32> to vector<8x128xf32>
    %471 = arith.addf %470, %251 : vector<8x128xf32>
    %c5 = arith.constant 5 : index
    %c0_110 = arith.constant 0 : index
    %c0_111 = arith.constant 0 : index
    %472 = vector.load %arg9[%c5, %c0_110, %c0_111] : memref<8x8x128xf32, #tpu.memory_space<vmem>>, vector<1x8x128xf32>
    %473 = vector.shape_cast %472 : vector<1x8x128xf32> to vector<8x128xf32>
    %474 = vector.shape_cast %471 : vector<8x128xf32> to vector<1x8x128xf32>
    tpu.vector_store %arg9[%c5, %c0_110, %c0_111], %474 {strides = array<i32>} : memref<8x8x128xf32, #tpu.memory_space<vmem>>, vector<1x8x128xf32>,
    %475 = vector.extract_strided_slice %469 {offsets = [0, 128], sizes = [8, 128], strides = [1, 1]} : vector<8x256xf32> to vector<8x128xf32>
    %cst_112 = arith.constant dense<0xFF800000> : vector<8xf32>
    %476 = vector.multi_reduction <maximumf>, %471, %cst_112 [1] : vector<8x128xf32> to vector<8xf32>
    %477 = vector.shape_cast %476 : vector<8xf32> to vector<8x1xf32>
    %478 = vector.broadcast %477 : vector<8x1xf32> to vector<8x128xf32>
    %479 = arith.cmpf oeq, %471, %478 : vector<8x128xf32>
    %c128_i32_113 = arith.constant 128 : i32
    %480 = vector.broadcast %c128_i32_113 : i32 to vector<8x128xi32>
    %481 = arith.select %479, %0, %480 : vector<8x128xi1>, vector<8x128xi32>
    %cst_114 = arith.constant dense<2147483647> : vector<8xi32>
    %482 = vector.multi_reduction <minsi>, %481, %cst_114 [1] : vector<8x128xi32> to vector<8xi32>
    %483 = vector.shape_cast %482 : vector<8xi32> to vector<8x1xi32>
    %484 = vector.broadcast %483 : vector<8x1xi32> to vector<8x128xi32>
    %485 = arith.cmpi eq, %0, %484 : vector<8x128xi32>
    %cst_115 = arith.constant 1.000000e+00 : f32
    %cst_116 = arith.constant 0.000000e+00 : f32
    %486 = vector.broadcast %cst_115 : f32 to vector<8x128xf32>
    %487 = vector.broadcast %cst_116 : f32 to vector<8x128xf32>
    %488 = arith.select %485, %486, %487 : vector<8x128xi1>, vector<8x128xf32>
    %cst_117 = arith.constant dense<0.000000e+00> : vector<8x128xf32>
    %489 = tpu.matmul %488, %247, %cst_117 {dimension_numbers = #tpu.dot_dimension_numbers<[1], [0], [0], [1], [0, 0, 1, 1], [], []>} : vector<8x128xf32>, vector<128x128xf32>, vector<8x128xf32> -> vector<8x128xf32>
    %490 = arith.addf %489, %475 : vector<8x128xf32>
    %491 = vector.extract_strided_slice %490 {offsets = [0, 0], sizes = [8, 32], strides = [1, 1]} : vector<8x128xf32> to vector<8x32xf32>
    %492 = arith.negf %491 : vector<8x32xf32>
    %493 = math.exp %492 : vector<8x32xf32>
    %cst_118 = arith.constant 1.000000e+00 : f32
    %494 = vector.broadcast %cst_118 : f32 to vector<8x32xf32>
    %495 = arith.addf %494, %493 : vector<8x32xf32>
    %496 = arith.divf %494, %495 : vector<8x32xf32>
    %497 = vector.extract_strided_slice %490 {offsets = [0, 32], sizes = [8, 32], strides = [1, 1]} : vector<8x128xf32> to vector<8x32xf32>
    %498 = arith.negf %497 : vector<8x32xf32>
    %499 = math.exp %498 : vector<8x32xf32>
    %cst_119 = arith.constant 1.000000e+00 : f32
    %500 = vector.broadcast %cst_119 : f32 to vector<8x32xf32>
    %501 = arith.addf %500, %499 : vector<8x32xf32>
    %502 = arith.divf %500, %501 : vector<8x32xf32>
    %503 = vector.extract_strided_slice %490 {offsets = [0, 64], sizes = [8, 32], strides = [1, 1]} : vector<8x128xf32> to vector<8x32xf32>
    %504 = math.tanh %503 : vector<8x32xf32>
    %505 = vector.extract_strided_slice %490 {offsets = [0, 96], sizes = [8, 32], strides = [1, 1]} : vector<8x128xf32> to vector<8x32xf32>
    %506 = arith.negf %505 : vector<8x32xf32>
    %507 = math.exp %506 : vector<8x32xf32>
    %cst_120 = arith.constant 1.000000e+00 : f32
    %508 = vector.broadcast %cst_120 : f32 to vector<8x32xf32>
    %509 = arith.addf %508, %507 : vector<8x32xf32>
    %510 = arith.divf %508, %509 : vector<8x32xf32>
    %511 = arith.mulf %502, %466 : vector<8x32xf32>
    %512 = arith.mulf %496, %504 : vector<8x32xf32>
    %513 = arith.addf %511, %512 : vector<8x32xf32>
    %514 = math.tanh %513 : vector<8x32xf32>
    %515 = arith.mulf %510, %514 : vector<8x32xf32>
    %cst_121 = arith.constant dense<0.000000e+00> : vector<8x256xf32>
    %516 = tpu.matmul %515, %248, %cst_121 {dimension_numbers = #tpu.dot_dimension_numbers<[1], [0], [0], [1], [0, 0, 1, 1], [], []>} : vector<8x32xf32>, vector<32x256xf32>, vector<8x256xf32> -> vector<8x256xf32>
    %517 = vector.extract_strided_slice %516 {offsets = [0, 0], sizes = [8, 128], strides = [1, 1]} : vector<8x256xf32> to vector<8x128xf32>
    %518 = arith.addf %517, %251 : vector<8x128xf32>
    %c6 = arith.constant 6 : index
    %c0_122 = arith.constant 0 : index
    %c0_123 = arith.constant 0 : index
    %519 = vector.load %arg9[%c6, %c0_122, %c0_123] : memref<8x8x128xf32, #tpu.memory_space<vmem>>, vector<1x8x128xf32>
    %520 = vector.shape_cast %519 : vector<1x8x128xf32> to vector<8x128xf32>
    %521 = vector.shape_cast %518 : vector<8x128xf32> to vector<1x8x128xf32>
    tpu.vector_store %arg9[%c6, %c0_122, %c0_123], %521 {strides = array<i32>} : memref<8x8x128xf32, #tpu.memory_space<vmem>>, vector<1x8x128xf32>,
    %522 = vector.extract_strided_slice %516 {offsets = [0, 128], sizes = [8, 128], strides = [1, 1]} : vector<8x256xf32> to vector<8x128xf32>
    %cst_124 = arith.constant dense<0xFF800000> : vector<8xf32>
    %523 = vector.multi_reduction <maximumf>, %518, %cst_124 [1] : vector<8x128xf32> to vector<8xf32>
    %524 = vector.shape_cast %523 : vector<8xf32> to vector<8x1xf32>
    %525 = vector.broadcast %524 : vector<8x1xf32> to vector<8x128xf32>
    %526 = arith.cmpf oeq, %518, %525 : vector<8x128xf32>
    %c128_i32_125 = arith.constant 128 : i32
    %527 = vector.broadcast %c128_i32_125 : i32 to vector<8x128xi32>
    %528 = arith.select %526, %0, %527 : vector<8x128xi1>, vector<8x128xi32>
    %cst_126 = arith.constant dense<2147483647> : vector<8xi32>
    %529 = vector.multi_reduction <minsi>, %528, %cst_126 [1] : vector<8x128xi32> to vector<8xi32>
    %530 = vector.shape_cast %529 : vector<8xi32> to vector<8x1xi32>
    %531 = vector.broadcast %530 : vector<8x1xi32> to vector<8x128xi32>
    %532 = arith.cmpi eq, %0, %531 : vector<8x128xi32>
    %cst_127 = arith.constant 1.000000e+00 : f32
    %cst_128 = arith.constant 0.000000e+00 : f32
    %533 = vector.broadcast %cst_127 : f32 to vector<8x128xf32>
    %534 = vector.broadcast %cst_128 : f32 to vector<8x128xf32>
    %535 = arith.select %532, %533, %534 : vector<8x128xi1>, vector<8x128xf32>
    %cst_129 = arith.constant dense<0.000000e+00> : vector<8x128xf32>
    %536 = tpu.matmul %535, %247, %cst_129 {dimension_numbers = #tpu.dot_dimension_numbers<[1], [0], [0], [1], [0, 0, 1, 1], [], []>} : vector<8x128xf32>, vector<128x128xf32>, vector<8x128xf32> -> vector<8x128xf32>
    %537 = arith.addf %536, %522 : vector<8x128xf32>
    %538 = vector.extract_strided_slice %537 {offsets = [0, 0], sizes = [8, 32], strides = [1, 1]} : vector<8x128xf32> to vector<8x32xf32>
    %539 = arith.negf %538 : vector<8x32xf32>
    %540 = math.exp %539 : vector<8x32xf32>
    %cst_130 = arith.constant 1.000000e+00 : f32
    %541 = vector.broadcast %cst_130 : f32 to vector<8x32xf32>
    %542 = arith.addf %541, %540 : vector<8x32xf32>
    %543 = arith.divf %541, %542 : vector<8x32xf32>
    %544 = vector.extract_strided_slice %537 {offsets = [0, 32], sizes = [8, 32], strides = [1, 1]} : vector<8x128xf32> to vector<8x32xf32>
    %545 = arith.negf %544 : vector<8x32xf32>
    %546 = math.exp %545 : vector<8x32xf32>
    %cst_131 = arith.constant 1.000000e+00 : f32
    %547 = vector.broadcast %cst_131 : f32 to vector<8x32xf32>
    %548 = arith.addf %547, %546 : vector<8x32xf32>
    %549 = arith.divf %547, %548 : vector<8x32xf32>
    %550 = vector.extract_strided_slice %537 {offsets = [0, 64], sizes = [8, 32], strides = [1, 1]} : vector<8x128xf32> to vector<8x32xf32>
    %551 = math.tanh %550 : vector<8x32xf32>
    %552 = vector.extract_strided_slice %537 {offsets = [0, 96], sizes = [8, 32], strides = [1, 1]} : vector<8x128xf32> to vector<8x32xf32>
    %553 = arith.negf %552 : vector<8x32xf32>
    %554 = math.exp %553 : vector<8x32xf32>
    %cst_132 = arith.constant 1.000000e+00 : f32
    %555 = vector.broadcast %cst_132 : f32 to vector<8x32xf32>
    %556 = arith.addf %555, %554 : vector<8x32xf32>
    %557 = arith.divf %555, %556 : vector<8x32xf32>
    %558 = arith.mulf %549, %513 : vector<8x32xf32>
    %559 = arith.mulf %543, %551 : vector<8x32xf32>
    %560 = arith.addf %558, %559 : vector<8x32xf32>
    %561 = math.tanh %560 : vector<8x32xf32>
    %562 = arith.mulf %557, %561 : vector<8x32xf32>
    %cst_133 = arith.constant dense<0.000000e+00> : vector<8x256xf32>
    %563 = tpu.matmul %562, %248, %cst_133 {dimension_numbers = #tpu.dot_dimension_numbers<[1], [0], [0], [1], [0, 0, 1, 1], [], []>} : vector<8x32xf32>, vector<32x256xf32>, vector<8x256xf32> -> vector<8x256xf32>
    %564 = vector.extract_strided_slice %563 {offsets = [0, 0], sizes = [8, 128], strides = [1, 1]} : vector<8x256xf32> to vector<8x128xf32>
    %565 = arith.addf %564, %251 : vector<8x128xf32>
    %c7 = arith.constant 7 : index
    %c0_134 = arith.constant 0 : index
    %c0_135 = arith.constant 0 : index
    %566 = vector.load %arg9[%c7, %c0_134, %c0_135] : memref<8x8x128xf32, #tpu.memory_space<vmem>>, vector<1x8x128xf32>
    %567 = vector.shape_cast %566 : vector<1x8x128xf32> to vector<8x128xf32>
    %568 = vector.shape_cast %565 : vector<8x128xf32> to vector<1x8x128xf32>
    tpu.vector_store %arg9[%c7, %c0_134, %c0_135], %568 {strides = array<i32>} : memref<8x8x128xf32, #tpu.memory_space<vmem>>, vector<1x8x128xf32>,
    return
  }
}

</mosaic_0001>

<llo_original>
// kernel: seq2seq_forward.1
$region0: #{seq2seq_forward.1}
  #allocation0 [shape = 'u32[]', space=smem, size = 0x4, offset = 0x4, fixed_abs, tag = 'smem constant byte address 0x4 - core index']
  #allocation1 [shape = 'u32[144,128]{1,0:T(1,128)}', space=vmem, size = 0x12000, scoped, tag = 'internal scratch']
  %s0 = inlined_call_operand.vmem [shape: f32[64,16], index: 0, kind: input, shape index: {}]
  %s1 = inlined_call_operand.vmem [shape: f32[16,128], index: 1, kind: input, shape index: {}]
  %s2 = inlined_call_operand.vmem [shape: f32[32,128], index: 2, kind: input, shape index: {}]
  %s3 = inlined_call_operand.vmem [shape: f32[1,128], index: 3, kind: input, shape index: {}]
  %s4 = inlined_call_operand.vmem [shape: f32[128,16], index: 4, kind: input, shape index: {}]
  %s5 = inlined_call_operand.vmem [shape: f32[16,128], index: 5, kind: input, shape index: {}]
  %s6 = inlined_call_operand.vmem [shape: f32[32,256], index: 6, kind: input, shape index: {}]
  %s7 = inlined_call_operand.vmem [shape: f32[1,128], index: 7, kind: input, shape index: {}]
  %s8 = inlined_call_operand.vmem [shape: f32[1,128], index: 8, kind: input, shape index: {}]
  %s9 = inlined_call_operand.hbm [shape: f32[8,8,128], index: 9, kind: output, shape index: {}]
  %s10 = sld [smem:[#allocation0]]
  $region46: #{seq2seq_forward.1} parent=0
    _
  %s12 = ssub.s32 1, %s10
  %s13 = scalar_select 0, %s12, %s10
  $region1: #{seq2seq_forward.1} parent=0
    #allocation2 [shape = 'u8[32768]{0}', space=vmem, size = 0x8000, scoped, tag = 'output window, operand 0, single buffered']
    #allocation3 [shape = 's32[1]{0}', space=sflag, size = 0x4, scoped, tag = 'scoped memory for seq2seq_forward.1']
    %14 = vsyncpa [#allocation3], 0
    // Predicated region
    $region2: #{seq2seq_forward.1} parent=1 // pred_check
      _
    $region3: #{seq2seq_forward.1} parent=1 // pred_check_branch
      %16 = sbr.rel (0) target = $region5
    $region4: #{seq2seq_forward.1} parent=1 // pred_region
      _
    $region5: #{seq2seq_forward.1} parent=1 // pred_fallthru
      _
    // Predicated region
    $region6: #{seq2seq_forward.1} parent=1 // pred_check
      _
    $region7: #{seq2seq_forward.1} parent=1 // pred_check_branch
      %18 = sbr.rel (0) target = $region9
    $region8: #{seq2seq_forward.1} parent=1 // pred_region
      _
    $region9: #{seq2seq_forward.1} parent=1 // pred_fallthru
      _
    // Predicated region
    $region10: #{seq2seq_forward.1} parent=1 // pred_check
      _
    $region11: #{seq2seq_forward.1} parent=1 // pred_check_branch
      %20 = sbr.rel (0) target = $region13
    $region12: #{seq2seq_forward.1} parent=1 // pred_region
      _
    $region13: #{seq2seq_forward.1} parent=1 // pred_fallthru
      _
    // Predicated region
    $region14: #{seq2seq_forward.1} parent=1 // pred_check
      _
    $region15: #{seq2seq_forward.1} parent=1 // pred_check_branch
      %22 = sbr.rel (0) target = $region17
    $region16: #{seq2seq_forward.1} parent=1 // pred_region
      _
    $region17: #{seq2seq_forward.1} parent=1 // pred_fallthru
      _
    // Predicated region
    $region18: #{seq2seq_forward.1} parent=1 // pred_check
      _
    $region19: #{seq2seq_forward.1} parent=1 // pred_check_branch
      %24 = sbr.rel (0) target = $region21
    $region20: #{seq2seq_forward.1} parent=1 // pred_region
      _
    $region21: #{seq2seq_forward.1} parent=1 // pred_fallthru
      _
    // Predicated region
    $region22: #{seq2seq_forward.1} parent=1 // pred_check
      _
    $region23: #{seq2seq_forward.1} parent=1 // pred_check_branch
      %26 = sbr.rel (0) target = $region25
    $region24: #{seq2seq_forward.1} parent=1 // pred_region
      _
    $region25: #{seq2seq_forward.1} parent=1 // pred_fallthru
      _
    // Predicated region
    $region26: #{seq2seq_forward.1} parent=1 // pred_check
      _
    $region27: #{seq2seq_forward.1} parent=1 // pred_check_branch
      %28 = sbr.rel (0) target = $region29
    $region28: #{seq2seq_forward.1} parent=1 // pred_region
      _
    $region29: #{seq2seq_forward.1} parent=1 // pred_fallthru
      _
    // Predicated region
    $region30: #{seq2seq_forward.1} parent=1 // pred_check
      _
    $region31: #{seq2seq_forward.1} parent=1 // pred_check_branch
      %30 = sbr.rel (0) target = $region33
    $region32: #{seq2seq_forward.1} parent=1 // pred_region
      _
    $region33: #{seq2seq_forward.1} parent=1 // pred_fallthru
      _
    // Predicated region
    $region34: #{seq2seq_forward.1} parent=1 // pred_check
      _
    $region35: #{seq2seq_forward.1} parent=1 // pred_check_branch
      %32 = sbr.rel (0) target = $region37
    $region36: #{seq2seq_forward.1} parent=1 // pred_region
      _
    $region37: #{seq2seq_forward.1} parent=1 // pred_fallthru
      _
    %v33 = vlaneseq
    %v34 = vand.u32 %v33, 127
    %vm35 = vcmp.eq.s32.totalorder %v34, 1
    %v36 = vsel %vm35, 1.0, 0.0
    %37 = vst [vmem:[#allocation2] sm:$0xff] %v36
    %v38 = vld [vmem:[%s0] sm:$0xff]
    %v39 = vld [vmem:[%s0 + $0x8] sm:$0xff]
    %v40 = vld [vmem:[%s0 + $0x10] sm:$0xff]
    %v41 = vld [vmem:[%s0 + $0x18] sm:$0xff]
    %v42 = vld [vmem:[%s0 + $0x20] sm:$0xff]
    %v43 = vld [vmem:[%s0 + $0x28] sm:$0xff]
    %v44 = vld [vmem:[%s0 + $0x30] sm:$0xff]
    %v45 = vld [vmem:[%s0 + $0x38] sm:$0xff]
    %v46 = vld [vmem:[%s1] sm:$0xff]
    %v47 = vld [vmem:[%s1 + $0x8] sm:$0xff]
    %v48 = vld [vmem:[%s3] sm:$0x1]
    %v50 = vlaneseq
    %v51 = vshrl.u32 %v50, 7
    %v52 = vsub.s32 0, %v51
    %v53 = vrot.slane %v48, %v52
    %vm55 = vcmask 130048
    %v57 = vsel %vm55, %v38, 0
    %v60 = vsel %vm55, %v39, 0
    %v63 = vsel %vm55, %v40, 0
    %v66 = vsel %vm55, %v41, 0
    %v69 = vsel %vm55, %v42, 0
    %v72 = vsel %vm55, %v43, 0
    %v75 = vsel %vm55, %v44, 0
    %v78 = vsel %vm55, %v45, 0
    %80 = vmatprep.subr.mxu0 0.0
    %81 = vmatpush1.msra.mxu0 %v46
    %82 = vmatprep.subr.mxu0 0.0
    %83 = vmatpush1.msra.mxu0 %v47
    %84 = vmatprep.subr.mxu0 0.0
    %85 = vmatpush1.msra.mxu0 0.0
    %86 = vmatprep.subr.mxu0 0.0
    %87 = vmatpush1.msra.mxu0 0.0
    %88 = vmatprep.subr.mxu0 0.0
    %89 = vmatpush1.msra.mxu0 0.0
    %90 = vmatprep.subr.mxu0 0.0
    %91 = vmatpush1.msra.mxu0 0.0
    %92 = vmatprep.subr.mxu0 0.0
    %93 = vmatpush1.msra.mxu0 0.0
    %94 = vmatprep.subr.mxu0 0.0
    %95 = vmatpush1.msra.mxu0 0.0
    %96 = vmatprep.subr.mxu0 0.0
    %97 = vmatpush1.msra.mxu0 0.0
    %98 = vmatprep.subr.mxu0 0.0
    %99 = vmatpush1.msra.mxu0 0.0
    %100 = vmatprep.subr.mxu0 0.0
    %101 = vmatpush1.msra.mxu0 0.0
    %102 = vmatprep.subr.mxu0 0.0
    %103 = vmatpush1.msra.mxu0 0.0
    %104 = vmatprep.subr.mxu0 0.0
    %105 = vmatpush1.msra.mxu0 0.0
    %106 = vmatprep.subr.mxu0 0.0
    %107 = vmatpush1.msra.mxu0 0.0
    %108 = vmatprep.subr.mxu0 0.0
    %109 = vmatpush1.msra.mxu0 0.0
    %110 = vmatprep.subr.mxu0 0.0
    %111 = vmatpush1.msra.mxu0 0.0
    %112 = vmatprep.subr.mxu0 0.0
    %113 = vmatpush1.msra.mxu0 0.0
    %114 = vmatprep.subr.mxu0 0.0
    %115 = vmatpush1.msra.mxu0 0.0
    %116 = vmatprep.subr.mxu0 0.0
    %117 = vmatpush1.msra.mxu0 0.0
    %118 = vmatprep.subr.mxu0 0.0
    %119 = vmatpush1.msra.mxu0 0.0
    %120 = vmatprep.subr.mxu0 0.0
    %121 = vmatpush1.msra.mxu0 0.0
    %122 = vmatprep.subr.mxu0 0.0
    %123 = vmatpush1.msra.mxu0 0.0
    %124 = vmatprep.subr.mxu0 0.0
    %125 = vmatpush1.msra.mxu0 0.0
    %126 = vmatprep.subr.mxu0 0.0
    %127 = vmatpush1.msra.mxu0 0.0
    %128 = vmatprep.subr.mxu0 0.0
    %129 = vmatpush1.msra.mxu0 0.0
    %130 = vmatprep.subr.mxu0 0.0
    %131 = vmatpush1.msra.mxu0 0.0
    %132 = vmatprep.subr.mxu0 0.0
    %133 = vmatpush1.msra.mxu0 0.0
    %134 = vmatprep.subr.mxu0 0.0
    %135 = vmatpush1.msra.mxu0 0.0
    %136 = vmatprep.subr.mxu0 0.0
    %137 = vmatpush1.msra.mxu0 0.0
    %138 = vmatprep.subr.mxu0 0.0
    %139 = vmatpush1.msra.mxu0 0.0
    %140 = vmatprep.subr.mxu0 0.0
    %141 = vmatpush1.msra.mxu0 0.0
    %142 = vmatprep.subr.mxu0 0.0
    %143 = vmatpush1.msra.mxu0 0.0
    %144 = vmatprep.mubr.f32.mxu0 0.0
    %145 = vmatmul.mubr.f32.gmra.mrb[0].mxu0 %v57
    %v146 = vpop.f32.mrb[0].mxu0
    %v147 = vadd.f32 %v53, %v146
    %v148 = vpop.f32.mrb[0].mxu0
    %149 = vmatprep.mubr.f32.mxu0 0.0
    %150 = vmatmul.mubr.f32.gmra.mrb[0].mxu0 %v60
    %v151 = vpop.f32.mrb[0].mxu0
    %v152 = vadd.f32 %v53, %v151
    %v153 = vpop.f32.mrb[0].mxu0
    %154 = vmatprep.mubr.f32.mxu0 0.0
    %155 = vmatmul.mubr.f32.gmra.mrb[0].mxu0 %v63
    %v156 = vpop.f32.mrb[0].mxu0
    %v157 = vadd.f32 %v53, %v156
    %v158 = vpop.f32.mrb[0].mxu0
    %159 = vmatprep.mubr.f32.mxu0 0.0
    %160 = vmatmul.mubr.f32.gmra.mrb[0].mxu0 %v66
    %v161 = vpop.f32.mrb[0].mxu0
    %v162 = vadd.f32 %v53, %v161
    %v163 = vpop.f32.mrb[0].mxu0
    %164 = vmatprep.mubr.f32.mxu0 0.0
    %165 = vmatmul.mubr.f32.gmra.mrb[0].mxu0 %v69
    %v166 = vpop.f32.mrb[0].mxu0
    %v167 = vadd.f32 %v53, %v166
    %v168 = vpop.f32.mrb[0].mxu0
    %169 = vmatprep.mubr.f32.mxu0 0.0
    %170 = vmatmul.mubr.f32.gmra.mrb[0].mxu0 %v72
    %v171 = vpop.f32.mrb[0].mxu0
    %v172 = vadd.f32 %v53, %v171
    %v173 = vpop.f32.mrb[0].mxu0
    %174 = vmatprep.mubr.f32.mxu0 0.0
    %175 = vmatmul.mubr.f32.gmra.mrb[0].mxu0 %v75
    %v176 = vpop.f32.mrb[0].mxu0
    %v177 = vadd.f32 %v53, %v176
    %v178 = vpop.f32.mrb[0].mxu0
    %179 = vmatprep.mubr.f32.mxu0 0.0
    %180 = vmatmul.mubr.f32.gmra.mrb[0].mxu0 %v78
    %v181 = vpop.f32.mrb[0].mxu0
    %v182 = vadd.f32 %v53, %v181
    %v183 = vpop.f32.mrb[0].mxu0
    %184 = vdwg.mxu0
    %v185 = vld [vmem:[%s2] sm:$0xff]
    %v186 = vld [vmem:[%s2 + $0x8] sm:$0xff]
    %v187 = vld [vmem:[%s2 + $0x10] sm:$0xff]
    %v188 = vld [vmem:[%s2 + $0x18] sm:$0xff]
    %vm189 = vcmask 261120
    %v191 = vsel %vm189, 0.0, 0
    %193 = vmatprep.subr.mxu0 0.0
    %194 = vmatpush1.msra.mxu0 %v185
    %195 = vmatprep.subr.mxu0 0.0
    %196 = vmatpush1.msra.mxu0 %v186
    %197 = vmatprep.subr.mxu0 0.0
    %198 = vmatpush1.msra.mxu0 %v187
    %199 = vmatprep.subr.mxu0 0.0
    %200 = vmatpush1.msra.mxu0 %v188
    %201 = vmatprep.subr.mxu0 0.0
    %202 = vmatpush1.msra.mxu0 0.0
    %203 = vmatprep.subr.mxu0 0.0
    %204 = vmatpush1.msra.mxu0 0.0
    %205 = vmatprep.subr.mxu0 0.0
    %206 = vmatpush1.msra.mxu0 0.0
    %207 = vmatprep.subr.mxu0 0.0
    %208 = vmatpush1.msra.mxu0 0.0
    %209 = vmatprep.subr.mxu0 0.0
    %210 = vmatpush1.msra.mxu0 0.0
    %211 = vmatprep.subr.mxu0 0.0
    %212 = vmatpush1.msra.mxu0 0.0
    %213 = vmatprep.subr.mxu0 0.0
    %214 = vmatpush1.msra.mxu0 0.0
    %215 = vmatprep.subr.mxu0 0.0
    %216 = vmatpush1.msra.mxu0 0.0
    %217 = vmatprep.subr.mxu0 0.0
    %218 = vmatpush1.msra.mxu0 0.0
    %219 = vmatprep.subr.mxu0 0.0
    %220 = vmatpush1.msra.mxu0 0.0
    %221 = vmatprep.subr.mxu0 0.0
    %222 = vmatpush1.msra.mxu0 0.0
    %223 = vmatprep.subr.mxu0 0.0
    %224 = vmatpush1.msra.mxu0 0.0
    %225 = vmatprep.subr.mxu0 0.0
    %226 = vmatpush1.msra.mxu0 0.0
    %227 = vmatprep.subr.mxu0 0.0
    %228 = vmatpush1.msra.mxu0 0.0
    %229 = vmatprep.subr.mxu0 0.0
    %230 = vmatpush1.msra.mxu0 0.0
    %231 = vmatprep.subr.mxu0 0.0
    %232 = vmatpush1.msra.mxu0 0.0
    %233 = vmatprep.subr.mxu0 0.0
    %234 = vmatpush1.msra.mxu0 0.0
    %235 = vmatprep.subr.mxu0 0.0
    %236 = vmatpush1.msra.mxu0 0.0
    %237 = vmatprep.subr.mxu0 0.0
    %238 = vmatpush1.msra.mxu0 0.0
    %239 = vmatprep.subr.mxu0 0.0
    %240 = vmatpush1.msra.mxu0 0.0
    %241 = vmatprep.subr.mxu0 0.0
    %242 = vmatpush1.msra.mxu0 0.0
    %243 = vmatprep.subr.mxu0 0.0
    %244 = vmatpush1.msra.mxu0 0.0
    %245 = vmatprep.subr.mxu0 0.0
    %246 = vmatpush1.msra.mxu0 0.0
    %247 = vmatprep.subr.mxu0 0.0
    %248 = vmatpush1.msra.mxu0 0.0
    %249 = vmatprep.subr.mxu0 0.0
    %250 = vmatpush1.msra.mxu0 0.0
    %251 = vmatprep.subr.mxu0 0.0
    %252 = vmatpush1.msra.mxu0 0.0
    %253 = vmatprep.subr.mxu0 0.0
    %254 = vmatpush1.msra.mxu0 0.0
    %255 = vmatprep.subr.mxu0 0.0
    %256 = vmatpush1.msra.mxu0 0.0
    %257 = vmatprep.mubr.f32.mxu0 0.0
    %258 = vmatmul.mubr.f32.gmra.mrb[0].mxu0 %v191
    %v259 = vpop.f32.mrb[0].mxu0
    %v260 = vadd.f32 0.0, %v259
    %v261 = vpop.f32.mrb[0].mxu0
    %262 = vdwg.mxu0
    %v263 = vadd.f32 %v147, %v260
    %v264 = vxor.u32 %v263, 2147483648
    %v265 = vmul.f32 %v264, 1.442695
    %v266 = vpow.pop %v265
    %v267 = vadd.f32 %v266, 1.0
    %v268 = vrcp.pop %v267
    %v269 = vmul.f32 1.0, %v268
    %v270 = vtanh.pop %v263
    %v271 = vmul.f32 %v269, 0.0
    %273 = vrot.lane.b32.xlu0 %v270, 64
    %v274 = vpop.permute.xlu0 %273
    %v276 = vmul.f32 %v269, %v274
    %278 = vrot.lane.b32.xlu0 %v276, 32
    %v279 = vpop.permute.xlu0 %278
    %v281 = vadd.f32 %v271, %v279
    %v282 = vtanh.pop %v281
    %284 = vrot.lane.b32.xlu0 %v282, 64
    %v285 = vpop.permute.xlu0 %284
    %v287 = vmul.f32 %v269, %v285
    %289 = vrot.lane.b32.xlu0 %v287, 32
    %v290 = vpop.permute.xlu0 %289
    %v291 = vsel %vm189, %v290, 0
    %293 = vmatprep.subr.mxu0 0.0
    %294 = vmatpush1.msra.mxu0 %v185
    %295 = vmatprep.subr.mxu0 0.0
    %296 = vmatpush1.msra.mxu0 %v186
    %297 = vmatprep.subr.mxu0 0.0
    %298 = vmatpush1.msra.mxu0 %v187
    %299 = vmatprep.subr.mxu0 0.0
    %300 = vmatpush1.msra.mxu0 %v188
    %301 = vmatprep.subr.mxu0 0.0
    %302 = vmatpush1.msra.mxu0 0.0
    %303 = vmatprep.subr.mxu0 0.0
    %304 = vmatpush1.msra.mxu0 0.0
    %305 = vmatprep.subr.mxu0 0.0
    %306 = vmatpush1.msra.mxu0 0.0
    %307 = vmatprep.subr.mxu0 0.0
    %308 = vmatpush1.msra.mxu0 0.0
    %309 = vmatprep.subr.mxu0 0.0
    %310 = vmatpush1.msra.mxu0 0.0
    %311 = vmatprep.subr.mxu0 0.0
    %312 = vmatpush1.msra.mxu0 0.0
    %313 = vmatprep.subr.mxu0 0.0
    %314 = vmatpush1.msra.mxu0 0.0
    %315 = vmatprep.subr.mxu0 0.0
    %316 = vmatpush1.msra.mxu0 0.0
    %317 = vmatprep.subr.mxu0 0.0
    %318 = vmatpush1.msra.mxu0 0.0
    %319 = vmatprep.subr.mxu0 0.0
    %320 = vmatpush1.msra.mxu0 0.0
    %321 = vmatprep.subr.mxu0 0.0
    %322 = vmatpush1.msra.mxu0 0.0
    %323 = vmatprep.subr.mxu0 0.0
    %324 = vmatpush1.msra.mxu0 0.0
    %325 = vmatprep.subr.mxu0 0.0
    %326 = vmatpush1.msra.mxu0 0.0
    %327 = vmatprep.subr.mxu0 0.0
    %328 = vmatpush1.msra.mxu0 0.0
    %329 = vmatprep.subr.mxu0 0.0
    %330 = vmatpush1.msra.mxu0 0.0
    %331 = vmatprep.subr.mxu0 0.0
    %332 = vmatpush1.msra.mxu0 0.0
    %333 = vmatprep.subr.mxu0 0.0
    %334 = vmatpush1.msra.mxu0 0.0
    %335 = vmatprep.subr.mxu0 0.0
    %336 = vmatpush1.msra.mxu0 0.0
    %337 = vmatprep.subr.mxu0 0.0
    %338 = vmatpush1.msra.mxu0 0.0
    %339 = vmatprep.subr.mxu0 0.0
    %340 = vmatpush1.msra.mxu0 0.0
    %341 = vmatprep.subr.mxu0 0.0
    %342 = vmatpush1.msra.mxu0 0.0
    %343 = vmatprep.subr.mxu0 0.0
    %344 = vmatpush1.msra.mxu0 0.0
    %345 = vmatprep.subr.mxu0 0.0
    %346 = vmatpush1.msra.mxu0 0.0
    %347 = vmatprep.subr.mxu0 0.0
    %348 = vmatpush1.msra.mxu0 0.0
    %349 = vmatprep.subr.mxu0 0.0
    %350 = vmatpush1.msra.mxu0 0.0
    %351 = vmatprep.subr.mxu0 0.0
    %352 = vmatpush1.msra.mxu0 0.0
    %353 = vmatprep.subr.mxu0 0.0
    %354 = vmatpush1.msra.mxu0 0.0
    %355 = vmatprep.subr.mxu0 0.0
    %356 = vmatpush1.msra.mxu0 0.0
    %357 = vmatprep.mubr.f32.mxu0 0.0
    %358 = vmatmul.mubr.f32.gmra.mrb[0].mxu0 %v291
    %v359 = vpop.f32.mrb[0].mxu0
    %v360 = vadd.f32 0.0, %v359
    %v361 = vpop.f32.mrb[0].mxu0
    %362 = vdwg.mxu0
    %v363 = vadd.f32 %v152, %v360
    %v364 = vxor.u32 %v363, 2147483648
    %v365 = vmul.f32 %v364, 1.442695
    %v366 = vpow.pop %v365
    %v367 = vadd.f32 %v366, 1.0
    %v368 = vrcp.pop %v367
    %v369 = vmul.f32 1.0, %v368
    %v370 = vtanh.pop %v363
    %v371 = vmul.f32 %v369, %v281
    %373 = vrot.lane.b32.xlu0 %v370, 64
    %v374 = vpop.permute.xlu0 %373
    %v376 = vmul.f32 %v369, %v374
    %378 = vrot.lane.b32.xlu0 %v376, 32
    %v379 = vpop.permute.xlu0 %378
    %v381 = vadd.f32 %v371, %v379
    %v382 = vtanh.pop %v381
    %384 = vrot.lane.b32.xlu0 %v382, 64
    %v385 = vpop.permute.xlu0 %384
    %v387 = vmul.f32 %v369, %v385
    %389 = vrot.lane.b32.xlu0 %v387, 32
    %v390 = vpop.permute.xlu0 %389
    %v391 = vsel %vm189, %v390, 0
    %393 = vmatprep.subr.mxu0 0.0
    %394 = vmatpush1.msra.mxu0 %v185
    %395 = vmatprep.subr.mxu0 0.0
    %396 = vmatpush1.msra.mxu0 %v186
    %397 = vmatprep.subr.mxu0 0.0
    %398 = vmatpush1.msra.mxu0 %v187
    %399 = vmatprep.subr.mxu0 0.0
    %400 = vmatpush1.msra.mxu0 %v188
    %401 = vmatprep.subr.mxu0 0.0
    %402 = vmatpush1.msra.mxu0 0.0
    %403 = vmatprep.subr.mxu0 0.0
    %404 = vmatpush1.msra.mxu0 0.0
    %405 = vmatprep.subr.mxu0 0.0
    %406 = vmatpush1.msra.mxu0 0.0
    %407 = vmatprep.subr.mxu0 0.0
    %408 = vmatpush1.msra.mxu0 0.0
    %409 = vmatprep.subr.mxu0 0.0
    %410 = vmatpush1.msra.mxu0 0.0
    %411 = vmatprep.subr.mxu0 0.0
    %412 = vmatpush1.msra.mxu0 0.0
    %413 = vmatprep.subr.mxu0 0.0
    %414 = vmatpush1.msra.mxu0 0.0
    %415 = vmatprep.subr.mxu0 0.0
    %416 = vmatpush1.msra.mxu0 0.0
    %417 = vmatprep.subr.mxu0 0.0
    %418 = vmatpush1.msra.mxu0 0.0
    %419 = vmatprep.subr.mxu0 0.0
    %420 = vmatpush1.msra.mxu0 0.0
    %421 = vmatprep.subr.mxu0 0.0
    %422 = vmatpush1.msra.mxu0 0.0
    %423 = vmatprep.subr.mxu0 0.0
    %424 = vmatpush1.msra.mxu0 0.0
    %425 = vmatprep.subr.mxu0 0.0
    %426 = vmatpush1.msra.mxu0 0.0
    %427 = vmatprep.subr.mxu0 0.0
    %428 = vmatpush1.msra.mxu0 0.0
    %429 = vmatprep.subr.mxu0 0.0
    %430 = vmatpush1.msra.mxu0 0.0
    %431 = vmatprep.subr.mxu0 0.0
    %432 = vmatpush1.msra.mxu0 0.0
    %433 = vmatprep.subr.mxu0 0.0
    %434 = vmatpush1.msra.mxu0 0.0
    %435 = vmatprep.subr.mxu0 0.0
    %436 = vmatpush1.msra.mxu0 0.0
    %437 = vmatprep.subr.mxu0 0.0
    %438 = vmatpush1.msra.mxu0 0.0
    %439 = vmatprep.subr.mxu0 0.0
    %440 = vmatpush1.msra.mxu0 0.0
    %441 = vmatprep.subr.mxu0 0.0
    %442 = vmatpush1.msra.mxu0 0.0
    %443 = vmatprep.subr.mxu0 0.0
    %444 = vmatpush1.msra.mxu0 0.0
    %445 = vmatprep.subr.mxu0 0.0
    %446 = vmatpush1.msra.mxu0 0.0
    %447 = vmatprep.subr.mxu0 0.0
    %448 = vmatpush1.msra.mxu0 0.0
    %449 = vmatprep.subr.mxu0 0.0
    %450 = vmatpush1.msra.mxu0 0.0
    %451 = vmatprep.subr.mxu0 0.0
    %452 = vmatpush1.msra.mxu0 0.0
    %453 = vmatprep.subr.mxu0 0.0
    %454 = vmatpush1.msra.mxu0 0.0
    %455 = vmatprep.subr.mxu0 0.0
    %456 = vmatpush1.msra.mxu0 0.0
    %457 = vmatprep.mubr.f32.mxu0 0.0
    %458 = vmatmul.mubr.f32.gmra.mrb[0].mxu0 %v391
    %v459 = vpop.f32.mrb[0].mxu0
    %v460 = vadd.f32 0.0, %v459
    %v461 = vpop.f32.mrb[0].mxu0
    %462 = vdwg.mxu0
    %v463 = vadd.f32 %v157, %v460
    %v464 = vxor.u32 %v463, 2147483648
    %v465 = vmul.f32 %v464, 1.442695
    %v466 = vpow.pop %v465
    %v467 = vadd.f32 %v466, 1.0
    %v468 = vrcp.pop %v467
    %v469 = vmul.f32 1.0, %v468
    %v470 = vtanh.pop %v463
    %v471 = vmul.f32 %v469, %v381
    %473 = vrot.lane.b32.xlu0 %v470, 64
    %v474 = vpop.permute.xlu0 %473
    %v476 = vmul.f32 %v469, %v474
    %478 = vrot.lane.b32.xlu0 %v476, 32
    %v479 = vpop.permute.xlu0 %478
    %v481 = vadd.f32 %v471, %v479
    %v482 = vtanh.pop %v481
    %484 = vrot.lane.b32.xlu0 %v482, 64
    %v485 = vpop.permute.xlu0 %484
    %v487 = vmul.f32 %v469, %v485
    %489 = vrot.lane.b32.xlu0 %v487, 32
    %v490 = vpop.permute.xlu0 %489
    %v491 = vsel %vm189, %v490, 0
    %493 = vmatprep.subr.mxu0 0.0
    %494 = vmatpush1.msra.mxu0 %v185
    %495 = vmatprep.subr.mxu0 0.0
    %496 = vmatpush1.msra.mxu0 %v186
    %497 = vmatprep.subr.mxu0 0.0
    %498 = vmatpush1.msra.mxu0 %v187
    %499 = vmatprep.subr.mxu0 0.0
    %500 = vmatpush1.msra.mxu0 %v188
    %501 = vmatprep.subr.mxu0 0.0
    %502 = vmatpush1.msra.mxu0 0.0
    %503 = vmatprep.subr.mxu0 0.0
    %504 = vmatpush1.msra.mxu0 0.0
    %505 = vmatprep.subr.mxu0 0.0
    %506 = vmatpush1.msra.mxu0 0.0
    %507 = vmatprep.subr.mxu0 0.0
    %508 = vmatpush1.msra.mxu0 0.0
    %509 = vmatprep.subr.mxu0 0.0
    %510 = vmatpush1.msra.mxu0 0.0
    %511 = vmatprep.subr.mxu0 0.0
    %512 = vmatpush1.msra.mxu0 0.0
    %513 = vmatprep.subr.mxu0 0.0
    %514 = vmatpush1.msra.mxu0 0.0
    %515 = vmatprep.subr.mxu0 0.0
    %516 = vmatpush1.msra.mxu0 0.0
    %517 = vmatprep.subr.mxu0 0.0
    %518 = vmatpush1.msra.mxu0 0.0
    %519 = vmatprep.subr.mxu0 0.0
    %520 = vmatpush1.msra.mxu0 0.0
    %521 = vmatprep.subr.mxu0 0.0
    %522 = vmatpush1.msra.mxu0 0.0
    %523 = vmatprep.subr.mxu0 0.0
    %524 = vmatpush1.msra.mxu0 0.0
    %525 = vmatprep.subr.mxu0 0.0
    %526 = vmatpush1.msra.mxu0 0.0
    %527 = vmatprep.subr.mxu0 0.0
    %528 = vmatpush1.msra.mxu0 0.0
    %529 = vmatprep.subr.mxu0 0.0
    %530 = vmatpush1.msra.mxu0 0.0
    %531 = vmatprep.subr.mxu0 0.0
    %532 = vmatpush1.msra.mxu0 0.0
    %533 = vmatprep.subr.mxu0 0.0
    %534 = vmatpush1.msra.mxu0 0.0
    %535 = vmatprep.subr.mxu0 0.0
    %536 = vmatpush1.msra.mxu0 0.0
    %537 = vmatprep.subr.mxu0 0.0
    %538 = vmatpush1.msra.mxu0 0.0
    %539 = vmatprep.subr.mxu0 0.0
    %540 = vmatpush1.msra.mxu0 0.0
    %541 = vmatprep.subr.mxu0 0.0
    %542 = vmatpush1.msra.mxu0 0.0
    %543 = vmatprep.subr.mxu0 0.0
    %544 = vmatpush1.msra.mxu0 0.0
    %545 = vmatprep.subr.mxu0 0.0
    %546 = vmatpush1.msra.mxu0 0.0
    %547 = vmatprep.subr.mxu0 0.0
    %548 = vmatpush1.msra.mxu0 0.0
    %549 = vmatprep.subr.mxu0 0.0
    %550 = vmatpush1.msra.mxu0 0.0
    %551 = vmatprep.subr.mxu0 0.0
    %552 = vmatpush1.msra.mxu0 0.0
    %553 = vmatprep.subr.mxu0 0.0
    %554 = vmatpush1.msra.mxu0 0.0
    %555 = vmatprep.subr.mxu0 0.0
    %556 = vmatpush1.msra.mxu0 0.0
    %557 = vmatprep.mubr.f32.mxu0 0.0
    %558 = vmatmul.mubr.f32.gmra.mrb[0].mxu0 %v491
    %v559 = vpop.f32.mrb[0].mxu0
    %v560 = vadd.f32 0.0, %v559
    %v561 = vpop.f32.mrb[0].mxu0
    %562 = vdwg.mxu0
    %v563 = vadd.f32 %v162, %v560
    %v564 = vxor.u32 %v563, 2147483648
    %v565 = vmul.f32 %v564, 1.442695
    %v566 = vpow.pop %v565
    %v567 = vadd.f32 %v566, 1.0
    %v568 = vrcp.pop %v567
    %v569 = vmul.f32 1.0, %v568
    %v570 = vtanh.pop %v563
    %v571 = vmul.f32 %v569, %v481
    %573 = vrot.lane.b32.xlu0 %v570, 64
    %v574 = vpop.permute.xlu0 %573
    %v576 = vmul.f32 %v569, %v574
    %578 = vrot.lane.b32.xlu0 %v576, 32
    %v579 = vpop.permute.xlu0 %578
    %v581 = vadd.f32 %v571, %v579
    %v582 = vtanh.pop %v581
    %584 = vrot.lane.b32.xlu0 %v582, 64
    %v585 = vpop.permute.xlu0 %584
    %v587 = vmul.f32 %v569, %v585
    %589 = vrot.lane.b32.xlu0 %v587, 32
    %v590 = vpop.permute.xlu0 %589
    %v591 = vsel %vm189, %v590, 0
    %593 = vmatprep.subr.mxu0 0.0
    %594 = vmatpush1.msra.mxu0 %v185
    %595 = vmatprep.subr.mxu0 0.0
    %596 = vmatpush1.msra.mxu0 %v186
    %597 = vmatprep.subr.mxu0 0.0
    %598 = vmatpush1.msra.mxu0 %v187
    %599 = vmatprep.subr.mxu0 0.0
    %600 = vmatpush1.msra.mxu0 %v188
    %601 = vmatprep.subr.mxu0 0.0
    %602 = vmatpush1.msra.mxu0 0.0
    %603 = vmatprep.subr.mxu0 0.0
    %604 = vmatpush1.msra.mxu0 0.0
    %605 = vmatprep.subr.mxu0 0.0
    %606 = vmatpush1.msra.mxu0 0.0
    %607 = vmatprep.subr.mxu0 0.0
    %608 = vmatpush1.msra.mxu0 0.0
    %609 = vmatprep.subr.mxu0 0.0
    %610 = vmatpush1.msra.mxu0 0.0
    %611 = vmatprep.subr.mxu0 0.0
    %612 = vmatpush1.msra.mxu0 0.0
    %613 = vmatprep.subr.mxu0 0.0
    %614 = vmatpush1.msra.mxu0 0.0
    %615 = vmatprep.subr.mxu0 0.0
    %616 = vmatpush1.msra.mxu0 0.0
    %617 = vmatprep.subr.mxu0 0.0
    %618 = vmatpush1.msra.mxu0 0.0
    %619 = vmatprep.subr.mxu0 0.0
    %620 = vmatpush1.msra.mxu0 0.0
    %621 = vmatprep.subr.mxu0 0.0
    %622 = vmatpush1.msra.mxu0 0.0
    %623 = vmatprep.subr.mxu0 0.0
    %624 = vmatpush1.msra.mxu0 0.0
    %625 = vmatprep.subr.mxu0 0.0
    %626 = vmatpush1.msra.mxu0 0.0
    %627 = vmatprep.subr.mxu0 0.0
    %628 = vmatpush1.msra.mxu0 0.0
    %629 = vmatprep.subr.mxu0 0.0
    %630 = vmatpush1.msra.mxu0 0.0
    %631 = vmatprep.subr.mxu0 0.0
    %632 = vmatpush1.msra.mxu0 0.0
    %633 = vmatprep.subr.mxu0 0.0
    %634 = vmatpush1.msra.mxu0 0.0
    %635 = vmatprep.subr.mxu0 0.0
    %636 = vmatpush1.msra.mxu0 0.0
    %637 = vmatprep.subr.mxu0 0.0
    %638 = vmatpush1.msra.mxu0 0.0
    %639 = vmatprep.subr.mxu0 0.0
    %640 = vmatpush1.msra.mxu0 0.0
    %641 = vmatprep.subr.mxu0 0.0
    %642 = vmatpush1.msra.mxu0 0.0
    %643 = vmatprep.subr.mxu0 0.0
    %644 = vmatpush1.msra.mxu0 0.0
    %645 = vmatprep.subr.mxu0 0.0
    %646 = vmatpush1.msra.mxu0 0.0
    %647 = vmatprep.subr.mxu0 0.0
    %648 = vmatpush1.msra.mxu0 0.0
    %649 = vmatprep.subr.mxu0 0.0
    %650 = vmatpush1.msra.mxu0 0.0
    %651 = vmatprep.subr.mxu0 0.0
    %652 = vmatpush1.msra.mxu0 0.0
    %653 = vmatprep.subr.mxu0 0.0
    %654 = vmatpush1.msra.mxu0 0.0
    %655 = vmatprep.subr.mxu0 0.0
    %656 = vmatpush1.msra.mxu0 0.0
    %657 = vmatprep.mubr.f32.mxu0 0.0
    %658 = vmatmul.mubr.f32.gmra.mrb[0].mxu0 %v591
    %v659 = vpop.f32.mrb[0].mxu0
    %v660 = vadd.f32 0.0, %v659
    %v661 = vpop.f32.mrb[0].mxu0
    %662 = vdwg.mxu0
    %v663 = vadd.f32 %v167, %v660
    %v664 = vxor.u32 %v663, 2147483648
    %v665 = vmul.f32 %v664, 1.442695
    %v666 = vpow.pop %v665
    %v667 = vadd.f32 %v666, 1.0
    %v668 = vrcp.pop %v667
    %v669 = vmul.f32 1.0, %v668
    %v670 = vtanh.pop %v663
    %v671 = vmul.f32 %v669, %v581
    %673 = vrot.lane.b32.xlu0 %v670, 64
    %v674 = vpop.permute.xlu0 %673
    %v676 = vmul.f32 %v669, %v674
    %678 = vrot.lane.b32.xlu0 %v676, 32
    %v679 = vpop.permute.xlu0 %678
    %v681 = vadd.f32 %v671, %v679
    %v682 = vtanh.pop %v681
    %684 = vrot.lane.b32.xlu0 %v682, 64
    %v685 = vpop.permute.xlu0 %684
    %v687 = vmul.f32 %v669, %v685
    %689 = vrot.lane.b32.xlu0 %v687, 32
    %v690 = vpop.permute.xlu0 %689
    %v691 = vsel %vm189, %v690, 0
    %693 = vmatprep.subr.mxu0 0.0
    %694 = vmatpush1.msra.mxu0 %v185
    %695 = vmatprep.subr.mxu0 0.0
    %696 = vmatpush1.msra.mxu0 %v186
    %697 = vmatprep.subr.mxu0 0.0
    %698 = vmatpush1.msra.mxu0 %v187
    %699 = vmatprep.subr.mxu0 0.0
    %700 = vmatpush1.msra.mxu0 %v188
    %701 = vmatprep.subr.mxu0 0.0
    %702 = vmatpush1.msra.mxu0 0.0
    %703 = vmatprep.subr.mxu0 0.0
    %704 = vmatpush1.msra.mxu0 0.0
    %705 = vmatprep.subr.mxu0 0.0
    %706 = vmatpush1.msra.mxu0 0.0
    %707 = vmatprep.subr.mxu0 0.0
    %708 = vmatpush1.msra.mxu0 0.0
    %709 = vmatprep.subr.mxu0 0.0
    %710 = vmatpush1.msra.mxu0 0.0
    %711 = vmatprep.subr.mxu0 0.0
    %712 = vmatpush1.msra.mxu0 0.0
    %713 = vmatprep.subr.mxu0 0.0
    %714 = vmatpush1.msra.mxu0 0.0
    %715 = vmatprep.subr.mxu0 0.0
    %716 = vmatpush1.msra.mxu0 0.0
    %717 = vmatprep.subr.mxu0 0.0
    %718 = vmatpush1.msra.mxu0 0.0
    %719 = vmatprep.subr.mxu0 0.0
    %720 = vmatpush1.msra.mxu0 0.0
    %721 = vmatprep.subr.mxu0 0.0
    %722 = vmatpush1.msra.mxu0 0.0
    %723 = vmatprep.subr.mxu0 0.0
    %724 = vmatpush1.msra.mxu0 0.0
    %725 = vmatprep.subr.mxu0 0.0
    %726 = vmatpush1.msra.mxu0 0.0
    %727 = vmatprep.subr.mxu0 0.0
    %728 = vmatpush1.msra.mxu0 0.0
    %729 = vmatprep.subr.mxu0 0.0
    %730 = vmatpush1.msra.mxu0 0.0
    %731 = vmatprep.subr.mxu0 0.0
    %732 = vmatpush1.msra.mxu0 0.0
    %733 = vmatprep.subr.mxu0 0.0
    %734 = vmatpush1.msra.mxu0 0.0
    %735 = vmatprep.subr.mxu0 0.0
    %736 = vmatpush1.msra.mxu0 0.0
    %737 = vmatprep.subr.mxu0 0.0
    %738 = vmatpush1.msra.mxu0 0.0
    %739 = vmatprep.subr.mxu0 0.0
    %740 = vmatpush1.msra.mxu0 0.0
    %741 = vmatprep.subr.mxu0 0.0
    %742 = vmatpush1.msra.mxu0 0.0
    %743 = vmatprep.subr.mxu0 0.0
    %744 = vmatpush1.msra.mxu0 0.0
    %745 = vmatprep.subr.mxu0 0.0
    %746 = vmatpush1.msra.mxu0 0.0
    %747 = vmatprep.subr.mxu0 0.0
    %748 = vmatpush1.msra.mxu0 0.0
    %749 = vmatprep.subr.mxu0 0.0
    %750 = vmatpush1.msra.mxu0 0.0
    %751 = vmatprep.subr.mxu0 0.0
    %752 = vmatpush1.msra.mxu0 0.0
    %753 = vmatprep.subr.mxu0 0.0
    %754 = vmatpush1.msra.mxu0 0.0
    %755 = vmatprep.subr.mxu0 0.0
    %756 = vmatpush1.msra.mxu0 0.0
    %757 = vmatprep.mubr.f32.mxu0 0.0
    %758 = vmatmul.mubr.f32.gmra.mrb[0].mxu0 %v691
    %v759 = vpop.f32.mrb[0].mxu0
    %v760 = vadd.f32 0.0, %v759
    %v761 = vpop.f32.mrb[0].mxu0
    %762 = vdwg.mxu0
    %v763 = vadd.f32 %v172, %v760
    %v764 = vxor.u32 %v763, 2147483648
    %v765 = vmul.f32 %v764, 1.442695
    %v766 = vpow.pop %v765
    %v767 = vadd.f32 %v766, 1.0
    %v768 = vrcp.pop %v767
    %v769 = vmul.f32 1.0, %v768
    %v770 = vtanh.pop %v763
    %v771 = vmul.f32 %v769, %v681
    %773 = vrot.lane.b32.xlu0 %v770, 64
    %v774 = vpop.permute.xlu0 %773
    %v776 = vmul.f32 %v769, %v774
    %778 = vrot.lane.b32.xlu0 %v776, 32
    %v779 = vpop.permute.xlu0 %778
    %v781 = vadd.f32 %v771, %v779
    %v782 = vtanh.pop %v781
    %784 = vrot.lane.b32.xlu0 %v782, 64
    %v785 = vpop.permute.xlu0 %784
    %v787 = vmul.f32 %v769, %v785
    %789 = vrot.lane.b32.xlu0 %v787, 32
    %v790 = vpop.permute.xlu0 %789
    %v791 = vsel %vm189, %v790, 0
    %793 = vmatprep.subr.mxu0 0.0
    %794 = vmatpush1.msra.mxu0 %v185
    %795 = vmatprep.subr.mxu0 0.0
    %796 = vmatpush1.msra.mxu0 %v186
    %797 = vmatprep.subr.mxu0 0.0
    %798 = vmatpush1.msra.mxu0 %v187
    %799 = vmatprep.subr.mxu0 0.0
    %800 = vmatpush1.msra.mxu0 %v188
    %801 = vmatprep.subr.mxu0 0.0
    %802 = vmatpush1.msra.mxu0 0.0
    %803 = vmatprep.subr.mxu0 0.0
    %804 = vmatpush1.msra.mxu0 0.0
    %805 = vmatprep.subr.mxu0 0.0
    %806 = vmatpush1.msra.mxu0 0.0
    %807 = vmatprep.subr.mxu0 0.0
    %808 = vmatpush1.msra.mxu0 0.0
    %809 = vmatprep.subr.mxu0 0.0
    %810 = vmatpush1.msra.mxu0 0.0
    %811 = vmatprep.subr.mxu0 0.0
    %812 = vmatpush1.msra.mxu0 0.0
    %813 = vmatprep.subr.mxu0 0.0
    %814 = vmatpush1.msra.mxu0 0.0
    %815 = vmatprep.subr.mxu0 0.0
    %816 = vmatpush1.msra.mxu0 0.0
    %817 = vmatprep.subr.mxu0 0.0
    %818 = vmatpush1.msra.mxu0 0.0
    %819 = vmatprep.subr.mxu0 0.0
    %820 = vmatpush1.msra.mxu0 0.0
    %821 = vmatprep.subr.mxu0 0.0
    %822 = vmatpush1.msra.mxu0 0.0
    %823 = vmatprep.subr.mxu0 0.0
    %824 = vmatpush1.msra.mxu0 0.0
    %825 = vmatprep.subr.mxu0 0.0
    %826 = vmatpush1.msra.mxu0 0.0
    %827 = vmatprep.subr.mxu0 0.0
    %828 = vmatpush1.msra.mxu0 0.0
    %829 = vmatprep.subr.mxu0 0.0
    %830 = vmatpush1.msra.mxu0 0.0
    %831 = vmatprep.subr.mxu0 0.0
    %832 = vmatpush1.msra.mxu0 0.0
    %833 = vmatprep.subr.mxu0 0.0
    %834 = vmatpush1.msra.mxu0 0.0
    %835 = vmatprep.subr.mxu0 0.0
    %836 = vmatpush1.msra.mxu0 0.0
    %837 = vmatprep.subr.mxu0 0.0
    %838 = vmatpush1.msra.mxu0 0.0
    %839 = vmatprep.subr.mxu0 0.0
    %840 = vmatpush1.msra.mxu0 0.0
    %841 = vmatprep.subr.mxu0 0.0
    %842 = vmatpush1.msra.mxu0 0.0
    %843 = vmatprep.subr.mxu0 0.0
    %844 = vmatpush1.msra.mxu0 0.0
    %845 = vmatprep.subr.mxu0 0.0
    %846 = vmatpush1.msra.mxu0 0.0
    %847 = vmatprep.subr.mxu0 0.0
    %848 = vmatpush1.msra.mxu0 0.0
    %849 = vmatprep.subr.mxu0 0.0
    %850 = vmatpush1.msra.mxu0 0.0
    %851 = vmatprep.subr.mxu0 0.0
    %852 = vmatpush1.msra.mxu0 0.0
    %853 = vmatprep.subr.mxu0 0.0
    %854 = vmatpush1.msra.mxu0 0.0
    %855 = vmatprep.subr.mxu0 0.0
    %856 = vmatpush1.msra.mxu0 0.0
    %857 = vmatprep.mubr.f32.mxu0 0.0
    %858 = vmatmul.mubr.f32.gmra.mrb[0].mxu0 %v791
    %v859 = vpop.f32.mrb[0].mxu0
    %v860 = vadd.f32 0.0, %v859
    %v861 = vpop.f32.mrb[0].mxu0
    %862 = vdwg.mxu0
    %v863 = vadd.f32 %v177, %v860
    %v864 = vxor.u32 %v863, 2147483648
    %v865 = vmul.f32 %v864, 1.442695
    %v866 = vpow.pop %v865
    %v867 = vadd.f32 %v866, 1.0
    %v868 = vrcp.pop %v867
    %v869 = vmul.f32 1.0, %v868
    %v870 = vtanh.pop %v863
    %v871 = vmul.f32 %v869, %v781
    %873 = vrot.lane.b32.xlu0 %v870, 64
    %v874 = vpop.permute.xlu0 %873
    %v876 = vmul.f32 %v869, %v874
    %878 = vrot.lane.b32.xlu0 %v876, 32
    %v879 = vpop.permute.xlu0 %878
    %v881 = vadd.f32 %v871, %v879
    %v882 = vtanh.pop %v881
    %884 = vrot.lane.b32.xlu0 %v882, 64
    %v885 = vpop.permute.xlu0 %884
    %v887 = vmul.f32 %v869, %v885
    %889 = vrot.lane.b32.xlu0 %v887, 32
    %v890 = vpop.permute.xlu0 %889
    %v891 = vsel %vm189, %v890, 0
    %893 = vmatprep.subr.mxu0 0.0
    %894 = vmatpush1.msra.mxu0 %v185
    %895 = vmatprep.subr.mxu0 0.0
    %896 = vmatpush1.msra.mxu0 %v186
    %897 = vmatprep.subr.mxu0 0.0
    %898 = vmatpush1.msra.mxu0 %v187
    %899 = vmatprep.subr.mxu0 0.0
    %900 = vmatpush1.msra.mxu0 %v188
    %901 = vmatprep.subr.mxu0 0.0
    %902 = vmatpush1.msra.mxu0 0.0
    %903 = vmatprep.subr.mxu0 0.0
    %904 = vmatpush1.msra.mxu0 0.0
    %905 = vmatprep.subr.mxu0 0.0
    %906 = vmatpush1.msra.mxu0 0.0
    %907 = vmatprep.subr.mxu0 0.0
    %908 = vmatpush1.msra.mxu0 0.0
    %909 = vmatprep.subr.mxu0 0.0
    %910 = vmatpush1.msra.mxu0 0.0
    %911 = vmatprep.subr.mxu0 0.0
    %912 = vmatpush1.msra.mxu0 0.0
    %913 = vmatprep.subr.mxu0 0.0
    %914 = vmatpush1.msra.mxu0 0.0
    %915 = vmatprep.subr.mxu0 0.0
    %916 = vmatpush1.msra.mxu0 0.0
    %917 = vmatprep.subr.mxu0 0.0
    %918 = vmatpush1.msra.mxu0 0.0
    %919 = vmatprep.subr.mxu0 0.0
    %920 = vmatpush1.msra.mxu0 0.0
    %921 = vmatprep.subr.mxu0 0.0
    %922 = vmatpush1.msra.mxu0 0.0
    %923 = vmatprep.subr.mxu0 0.0
    %924 = vmatpush1.msra.mxu0 0.0
    %925 = vmatprep.subr.mxu0 0.0
    %926 = vmatpush1.msra.mxu0 0.0
    %927 = vmatprep.subr.mxu0 0.0
    %928 = vmatpush1.msra.mxu0 0.0
    %929 = vmatprep.subr.mxu0 0.0
    %930 = vmatpush1.msra.mxu0 0.0
    %931 = vmatprep.subr.mxu0 0.0
    %932 = vmatpush1.msra.mxu0 0.0
    %933 = vmatprep.subr.mxu0 0.0
    %934 = vmatpush1.msra.mxu0 0.0
    %935 = vmatprep.subr.mxu0 0.0
    %936 = vmatpush1.msra.mxu0 0.0
    %937 = vmatprep.subr.mxu0 0.0
    %938 = vmatpush1.msra.mxu0 0.0
    %939 = vmatprep.subr.mxu0 0.0
    %940 = vmatpush1.msra.mxu0 0.0
    %941 = vmatprep.subr.mxu0 0.0
    %942 = vmatpush1.msra.mxu0 0.0
    %943 = vmatprep.subr.mxu0 0.0
    %944 = vmatpush1.msra.mxu0 0.0
    %945 = vmatprep.subr.mxu0 0.0
    %946 = vmatpush1.msra.mxu0 0.0
    %947 = vmatprep.subr.mxu0 0.0
    %948 = vmatpush1.msra.mxu0 0.0
    %949 = vmatprep.subr.mxu0 0.0
    %950 = vmatpush1.msra.mxu0 0.0
    %951 = vmatprep.subr.mxu0 0.0
    %952 = vmatpush1.msra.mxu0 0.0
    %953 = vmatprep.subr.mxu0 0.0
    %954 = vmatpush1.msra.mxu0 0.0
    %955 = vmatprep.subr.mxu0 0.0
    %956 = vmatpush1.msra.mxu0 0.0
    %957 = vmatprep.mubr.f32.mxu0 0.0
    %958 = vmatmul.mubr.f32.gmra.mrb[0].mxu0 %v891
    %v959 = vpop.f32.mrb[0].mxu0
    %v960 = vadd.f32 0.0, %v959
    %v961 = vpop.f32.mrb[0].mxu0
    %962 = vdwg.mxu0
    %v963 = vadd.f32 %v182, %v960
    %v964 = vxor.u32 %v963, 2147483648
    %v965 = vmul.f32 %v964, 1.442695
    %v966 = vpow.pop %v965
    %v967 = vadd.f32 %v966, 1.0
    %v968 = vrcp.pop %v967
    %v969 = vmul.f32 1.0, %v968
    %v970 = vtanh.pop %v963
    %v971 = vmul.f32 %v969, %v881
    %973 = vrot.lane.b32.xlu0 %v970, 64
    %v974 = vpop.permute.xlu0 %973
    %v976 = vmul.f32 %v969, %v974
    %978 = vrot.lane.b32.xlu0 %v976, 32
    %v979 = vpop.permute.xlu0 %978
    %v981 = vadd.f32 %v971, %v979
    %v982 = vtanh.pop %v981
    %984 = vrot.lane.b32.xlu0 %v982, 64
    %v985 = vpop.permute.xlu0 %984
    %v987 = vmul.f32 %v969, %v985
    %v988 = vld [vmem:[%s4] sm:$0xff]
    %v989 = vld [vmem:[%s4 + $0x8] sm:$0xff]
    %v990 = vld [vmem:[%s4 + $0x10] sm:$0xff]
    %v991 = vld [vmem:[%s4 + $0x18] sm:$0xff]
    %v992 = vld [vmem:[%s4 + $0x20] sm:$0xff]
    %v993 = vld [vmem:[%s4 + $0x28] sm:$0xff]
    %v994 = vld [vmem:[%s4 + $0x30] sm:$0xff]
    %v995 = vld [vmem:[%s4 + $0x38] sm:$0xff]
    %v996 = vld [vmem:[%s4 + $0x40] sm:$0xff]
    %v997 = vld [vmem:[%s4 + $0x48] sm:$0xff]
    %v998 = vld [vmem:[%s4 + $0x50] sm:$0xff]
    %v999 = vld [vmem:[%s4 + $0x58] sm:$0xff]
    %v1000 = vld [vmem:[%s4 + $0x60] sm:$0xff]
    %v1001 = vld [vmem:[%s4 + $0x68] sm:$0xff]
    %v1002 = vld [vmem:[%s4 + $0x70] sm:$0xff]
    %v1003 = vld [vmem:[%s4 + $0x78] sm:$0xff]
    %v1004 = vld [vmem:[%s5] sm:$0xff]
    %v1005 = vld [vmem:[%s5 + $0x8] sm:$0xff]
    %v1006 = vld [vmem:[%s7] sm:$0x1]
    %v1008 = vlaneseq
    %v1009 = vshrl.u32 %v1008, 7
    %v1010 = vsub.s32 0, %v1009
    %v1011 = vrot.slane %v1006, %v1010
    %v1014 = vsel %vm55, %v988, 0
    %v1017 = vsel %vm55, %v989, 0
    %v1020 = vsel %vm55, %v990, 0
    %v1023 = vsel %vm55, %v991, 0
    %v1026 = vsel %vm55, %v992, 0
    %v1029 = vsel %vm55, %v993, 0
    %v1032 = vsel %vm55, %v994, 0
    %v1035 = vsel %vm55, %v995, 0
    %v1038 = vsel %vm55, %v996, 0
    %v1041 = vsel %vm55, %v997, 0
    %v1044 = vsel %vm55, %v998, 0
    %v1047 = vsel %vm55, %v999, 0
    %v1050 = vsel %vm55, %v1000, 0
    %v1053 = vsel %vm55, %v1001, 0
    %v1056 = vsel %vm55, %v1002, 0
    %v1059 = vsel %vm55, %v1003, 0
    %1061 = vmatprep.subr.mxu0 0.0
    %1062 = vmatpush1.msra.mxu0 %v1004
    %1063 = vmatprep.subr.mxu0 0.0
    %1064 = vmatpush1.msra.mxu0 %v1005
    %1065 = vmatprep.subr.mxu0 0.0
    %1066 = vmatpush1.msra.mxu0 0.0
    %1067 = vmatprep.subr.mxu0 0.0
    %1068 = vmatpush1.msra.mxu0 0.0
    %1069 = vmatprep.subr.mxu0 0.0
    %1070 = vmatpush1.msra.mxu0 0.0
    %1071 = vmatprep.subr.mxu0 0.0
    %1072 = vmatpush1.msra.mxu0 0.0
    %1073 = vmatprep.subr.mxu0 0.0
    %1074 = vmatpush1.msra.mxu0 0.0
    %1075 = vmatprep.subr.mxu0 0.0
    %1076 = vmatpush1.msra.mxu0 0.0
    %1077 = vmatprep.subr.mxu0 0.0
    %1078 = vmatpush1.msra.mxu0 0.0
    %1079 = vmatprep.subr.mxu0 0.0
    %1080 = vmatpush1.msra.mxu0 0.0
    %1081 = vmatprep.subr.mxu0 0.0
    %1082 = vmatpush1.msra.mxu0 0.0
    %1083 = vmatprep.subr.mxu0 0.0
    %1084 = vmatpush1.msra.mxu0 0.0
    %1085 = vmatprep.subr.mxu0 0.0
    %1086 = vmatpush1.msra.mxu0 0.0
    %1087 = vmatprep.subr.mxu0 0.0
    %1088 = vmatpush1.msra.mxu0 0.0
    %1089 = vmatprep.subr.mxu0 0.0
    %1090 = vmatpush1.msra.mxu0 0.0
    %1091 = vmatprep.subr.mxu0 0.0
    %1092 = vmatpush1.msra.mxu0 0.0
    %1093 = vmatprep.subr.mxu0 0.0
    %1094 = vmatpush1.msra.mxu0 0.0
    %1095 = vmatprep.subr.mxu0 0.0
    %1096 = vmatpush1.msra.mxu0 0.0
    %1097 = vmatprep.subr.mxu0 0.0
    %1098 = vmatpush1.msra.mxu0 0.0
    %1099 = vmatprep.subr.mxu0 0.0
    %1100 = vmatpush1.msra.mxu0 0.0
    %1101 = vmatprep.subr.mxu0 0.0
    %1102 = vmatpush1.msra.mxu0 0.0
    %1103 = vmatprep.subr.mxu0 0.0
    %1104 = vmatpush1.msra.mxu0 0.0
    %1105 = vmatprep.subr.mxu0 0.0
    %1106 = vmatpush1.msra.mxu0 0.0
    %1107 = vmatprep.subr.mxu0 0.0
    %1108 = vmatpush1.msra.mxu0 0.0
    %1109 = vmatprep.subr.mxu0 0.0
    %1110 = vmatpush1.msra.mxu0 0.0
    %1111 = vmatprep.subr.mxu0 0.0
    %1112 = vmatpush1.msra.mxu0 0.0
    %1113 = vmatprep.subr.mxu0 0.0
    %1114 = vmatpush1.msra.mxu0 0.0
    %1115 = vmatprep.subr.mxu0 0.0
    %1116 = vmatpush1.msra.mxu0 0.0
    %1117 = vmatprep.subr.mxu0 0.0
    %1118 = vmatpush1.msra.mxu0 0.0
    %1119 = vmatprep.subr.mxu0 0.0
    %1120 = vmatpush1.msra.mxu0 0.0
    %1121 = vmatprep.subr.mxu0 0.0
    %1122 = vmatpush1.msra.mxu0 0.0
    %1123 = vmatprep.subr.mxu0 0.0
    %1124 = vmatpush1.msra.mxu0 0.0
    %1125 = vmatprep.mubr.f32.mxu0 0.0
    %1126 = vmatmul.mubr.f32.gmra.mrb[0].mxu0 %v1014
    %v1127 = vpop.f32.mrb[0].mxu0
    %v1128 = vadd.f32 %v1011, %v1127
    %v1129 = vpop.f32.mrb[0].mxu0
    %1130 = vmatprep.mubr.f32.mxu0 0.0
    %1131 = vmatmul.mubr.f32.gmra.mrb[0].mxu0 %v1017
    %v1132 = vpop.f32.mrb[0].mxu0
    %v1133 = vadd.f32 %v1011, %v1132
    %v1134 = vpop.f32.mrb[0].mxu0
    %1135 = vmatprep.mubr.f32.mxu0 0.0
    %1136 = vmatmul.mubr.f32.gmra.mrb[0].mxu0 %v1020
    %v1137 = vpop.f32.mrb[0].mxu0
    %v1138 = vadd.f32 %v1011, %v1137
    %v1139 = vpop.f32.mrb[0].mxu0
    %1140 = vmatprep.mubr.f32.mxu0 0.0
    %1141 = vmatmul.mubr.f32.gmra.mrb[0].mxu0 %v1023
    %v1142 = vpop.f32.mrb[0].mxu0
    %v1143 = vadd.f32 %v1011, %v1142
    %v1144 = vpop.f32.mrb[0].mxu0
    %1145 = vmatprep.mubr.f32.mxu0 0.0
    %1146 = vmatmul.mubr.f32.gmra.mrb[0].mxu0 %v1026
    %v1147 = vpop.f32.mrb[0].mxu0
    %v1148 = vadd.f32 %v1011, %v1147
    %v1149 = vpop.f32.mrb[0].mxu0
    %1150 = vmatprep.mubr.f32.mxu0 0.0
    %1151 = vmatmul.mubr.f32.gmra.mrb[0].mxu0 %v1029
    %v1152 = vpop.f32.mrb[0].mxu0
    %v1153 = vadd.f32 %v1011, %v1152
    %v1154 = vpop.f32.mrb[0].mxu0
    %1155 = vmatprep.mubr.f32.mxu0 0.0
    %1156 = vmatmul.mubr.f32.gmra.mrb[0].mxu0 %v1032
    %v1157 = vpop.f32.mrb[0].mxu0
    %v1158 = vadd.f32 %v1011, %v1157
    %v1159 = vpop.f32.mrb[0].mxu0
    %1160 = vmatprep.mubr.f32.mxu0 0.0
    %1161 = vmatmul.mubr.f32.gmra.mrb[0].mxu0 %v1035
    %v1162 = vpop.f32.mrb[0].mxu0
    %v1163 = vadd.f32 %v1011, %v1162
    %v1164 = vpop.f32.mrb[0].mxu0
    %1165 = vmatprep.mubr.f32.mxu0 0.0
    %1166 = vmatmul.mubr.f32.gmra.mrb[0].mxu0 %v1038
    %v1167 = vpop.f32.mrb[0].mxu0
    %v1168 = vadd.f32 %v1011, %v1167
    %v1169 = vpop.f32.mrb[0].mxu0
    %1170 = vmatprep.mubr.f32.mxu0 0.0
    %1171 = vmatmul.mubr.f32.gmra.mrb[0].mxu0 %v1041
    %v1172 = vpop.f32.mrb[0].mxu0
    %v1173 = vadd.f32 %v1011, %v1172
    %v1174 = vpop.f32.mrb[0].mxu0
    %1175 = vmatprep.mubr.f32.mxu0 0.0
    %1176 = vmatmul.mubr.f32.gmra.mrb[0].mxu0 %v1044
    %v1177 = vpop.f32.mrb[0].mxu0
    %v1178 = vadd.f32 %v1011, %v1177
    %v1179 = vpop.f32.mrb[0].mxu0
    %1180 = vmatprep.mubr.f32.mxu0 0.0
    %1181 = vmatmul.mubr.f32.gmra.mrb[0].mxu0 %v1047
    %v1182 = vpop.f32.mrb[0].mxu0
    %v1183 = vadd.f32 %v1011, %v1182
    %v1184 = vpop.f32.mrb[0].mxu0
    %1185 = vmatprep.mubr.f32.mxu0 0.0
    %1186 = vmatmul.mubr.f32.gmra.mrb[0].mxu0 %v1050
    %v1187 = vpop.f32.mrb[0].mxu0
    %v1188 = vadd.f32 %v1011, %v1187
    %v1189 = vpop.f32.mrb[0].mxu0
    %1190 = vmatprep.mubr.f32.mxu0 0.0
    %1191 = vmatmul.mubr.f32.gmra.mrb[0].mxu0 %v1053
    %v1192 = vpop.f32.mrb[0].mxu0
    %v1193 = vadd.f32 %v1011, %v1192
    %v1194 = vpop.f32.mrb[0].mxu0
    %1195 = vmatprep.mubr.f32.mxu0 0.0
    %1196 = vmatmul.mubr.f32.gmra.mrb[0].mxu0 %v1056
    %v1197 = vpop.f32.mrb[0].mxu0
    %v1198 = vadd.f32 %v1011, %v1197
    %v1199 = vpop.f32.mrb[0].mxu0
    %1200 = vmatprep.mubr.f32.mxu0 0.0
    %1201 = vmatmul.mubr.f32.gmra.mrb[0].mxu0 %v1059
    %v1202 = vpop.f32.mrb[0].mxu0
    %v1203 = vadd.f32 %v1011, %v1202
    %v1204 = vpop.f32.mrb[0].mxu0
    %1205 = vdwg.mxu0
    %v1206 = vld [vmem:[%s6] sm:$0xff]
    %v1207 = vld [vmem:[%s6 + $0x8] sm:$0xff]
    %v1208 = vld [vmem:[%s6 + $0x10] sm:$0xff]
    %v1209 = vld [vmem:[%s6 + $0x18] sm:$0xff]
    %v1210 = vld [vmem:[%s6 + $0x20] sm:$0xff]
    %v1211 = vld [vmem:[%s6 + $0x28] sm:$0xff]
    %v1212 = vld [vmem:[%s6 + $0x30] sm:$0xff]
    %v1213 = vld [vmem:[%s6 + $0x38] sm:$0xff]
    %v1214 = vld [vmem:[%s8] sm:$0x1]
    %v1216 = vlaneseq
    %v1217 = vshrl.u32 %v1216, 7
    %v1218 = vsub.s32 0, %v1217
    %v1219 = vrot.slane %v1214, %v1218
    %1222 = vrot.lane.b32.xlu0 %v987, 32
    %v1223 = vpop.permute.xlu0 %1222
    %v1224 = vsel %vm189, %v1223, 0
    %1226 = vmatprep.subr.mxu0 %v1207
    %1227 = vmatpush1.msra.mxu0 %v1206
    %1228 = vmatprep.subr.mxu0 %v1209
    %1229 = vmatpush1.msra.mxu0 %v1208
    %1230 = vmatprep.subr.mxu0 %v1211
    %1231 = vmatpush1.msra.mxu0 %v1210
    %1232 = vmatprep.subr.mxu0 %v1213
    %1233 = vmatpush1.msra.mxu0 %v1212
    %1234 = vmatprep.subr.mxu0 0.0
    %1235 = vmatpush1.msra.mxu0 0.0
    %1236 = vmatprep.subr.mxu0 0.0
    %1237 = vmatpush1.msra.mxu0 0.0
    %1238 = vmatprep.subr.mxu0 0.0
    %1239 = vmatpush1.msra.mxu0 0.0
    %1240 = vmatprep.subr.mxu0 0.0
    %1241 = vmatpush1.msra.mxu0 0.0
    %1242 = vmatprep.subr.mxu0 0.0
    %1243 = vmatpush1.msra.mxu0 0.0
    %1244 = vmatprep.subr.mxu0 0.0
    %1245 = vmatpush1.msra.mxu0 0.0
    %1246 = vmatprep.subr.mxu0 0.0
    %1247 = vmatpush1.msra.mxu0 0.0
    %1248 = vmatprep.subr.mxu0 0.0
    %1249 = vmatpush1.msra.mxu0 0.0
    %1250 = vmatprep.subr.mxu0 0.0
    %1251 = vmatpush1.msra.mxu0 0.0
    %1252 = vmatprep.subr.mxu0 0.0
    %1253 = vmatpush1.msra.mxu0 0.0
    %1254 = vmatprep.subr.mxu0 0.0
    %1255 = vmatpush1.msra.mxu0 0.0
    %1256 = vmatprep.subr.mxu0 0.0
    %1257 = vmatpush1.msra.mxu0 0.0
    %1258 = vmatprep.subr.mxu0 0.0
    %1259 = vmatpush1.msra.mxu0 0.0
    %1260 = vmatprep.subr.mxu0 0.0
    %1261 = vmatpush1.msra.mxu0 0.0
    %1262 = vmatprep.subr.mxu0 0.0
    %1263 = vmatpush1.msra.mxu0 0.0
    %1264 = vmatprep.subr.mxu0 0.0
    %1265 = vmatpush1.msra.mxu0 0.0
    %1266 = vmatprep.subr.mxu0 0.0
    %1267 = vmatpush1.msra.mxu0 0.0
    %1268 = vmatprep.subr.mxu0 0.0
    %1269 = vmatpush1.msra.mxu0 0.0
    %1270 = vmatprep.subr.mxu0 0.0
    %1271 = vmatpush1.msra.mxu0 0.0
    %1272 = vmatprep.subr.mxu0 0.0
    %1273 = vmatpush1.msra.mxu0 0.0
    %1274 = vmatprep.subr.mxu0 0.0
    %1275 = vmatpush1.msra.mxu0 0.0
    %1276 = vmatprep.subr.mxu0 0.0
    %1277 = vmatpush1.msra.mxu0 0.0
    %1278 = vmatprep.subr.mxu0 0.0
    %1279 = vmatpush1.msra.mxu0 0.0
    %1280 = vmatprep.subr.mxu0 0.0
    %1281 = vmatpush1.msra.mxu0 0.0
    %1282 = vmatprep.subr.mxu0 0.0
    %1283 = vmatpush1.msra.mxu0 0.0
    %1284 = vmatprep.subr.mxu0 0.0
    %1285 = vmatpush1.msra.mxu0 0.0
    %1286 = vmatprep.subr.mxu0 0.0
    %1287 = vmatpush1.msra.mxu0 0.0
    %1288 = vmatprep.subr.mxu0 0.0
    %1289 = vmatpush1.msra.mxu0 0.0
    %1290 = vmatprep.mubr.f32.mxu0 0.0
    %1291 = vmatmul.mubr.f32.gmra.mrb[0].mxu0 %v1224
    %v1292 = vpop.f32.mrb[0].mxu0
    %v1293 = vpop.f32.mrb[0].mxu0
    %v1294 = vadd.f32 0.0, %v1293
    %1295 = vdwg.mxu0
    %1296 = vmatprep.subr.mxu0 0.0
    %1297 = vmatpush1.msra.mxu0 %v1128
    %1298 = vmatprep.subr.mxu0 0.0
    %1299 = vmatpush1.msra.mxu0 %v1133
    %1300 = vmatprep.subr.mxu0 0.0
    %1301 = vmatpush1.msra.mxu0 %v1138
    %1302 = vmatprep.subr.mxu0 0.0
    %1303 = vmatpush1.msra.mxu0 %v1143
    %1304 = vmatprep.subr.mxu0 0.0
    %1305 = vmatpush1.msra.mxu0 %v1148
    %1306 = vmatprep.subr.mxu0 0.0
    %1307 = vmatpush1.msra.mxu0 %v1153
    %1308 = vmatprep.subr.mxu0 0.0
    %1309 = vmatpush1.msra.mxu0 %v1158
    %1310 = vmatprep.subr.mxu0 0.0
    %1311 = vmatpush1.msra.mxu0 %v1163
    %1312 = vmatprep.subr.mxu0 0.0
    %1313 = vmatpush1.msra.mxu0 %v1168
    %1314 = vmatprep.subr.mxu0 0.0
    %1315 = vmatpush1.msra.mxu0 %v1173
    %1316 = vmatprep.subr.mxu0 0.0
    %1317 = vmatpush1.msra.mxu0 %v1178
    %1318 = vmatprep.subr.mxu0 0.0
    %1319 = vmatpush1.msra.mxu0 %v1183
    %1320 = vmatprep.subr.mxu0 0.0
    %1321 = vmatpush1.msra.mxu0 %v1188
    %1322 = vmatprep.subr.mxu0 0.0
    %1323 = vmatpush1.msra.mxu0 %v1193
    %1324 = vmatprep.subr.mxu0 0.0
    %1325 = vmatpush1.msra.mxu0 %v1198
    %1326 = vmatprep.subr.mxu0 0.0
    %1327 = vmatpush1.msra.mxu0 %v1203
    %1328 = vmatprep.subr.mxu0 0.0
    %1329 = vmatpush1.msra.mxu0 0.0
    %1330 = vmatprep.subr.mxu0 0.0
    %1331 = vmatpush1.msra.mxu0 0.0
    %1332 = vmatprep.subr.mxu0 0.0
    %1333 = vmatpush1.msra.mxu0 0.0
    %1334 = vmatprep.subr.mxu0 0.0
    %1335 = vmatpush1.msra.mxu0 0.0
    %1336 = vmatprep.subr.mxu0 0.0
    %1337 = vmatpush1.msra.mxu0 0.0
    %1338 = vmatprep.subr.mxu0 0.0
    %1339 = vmatpush1.msra.mxu0 0.0
    %1340 = vmatprep.subr.mxu0 0.0
    %1341 = vmatpush1.msra.mxu0 0.0
    %1342 = vmatprep.subr.mxu0 0.0
    %1343 = vmatpush1.msra.mxu0 0.0
    %1344 = vmatprep.subr.mxu0 0.0
    %1345 = vmatpush1.msra.mxu0 0.0
    %1346 = vmatprep.subr.mxu0 0.0
    %1347 = vmatpush1.msra.mxu0 0.0
    %1348 = vmatprep.subr.mxu0 0.0
    %1349 = vmatpush1.msra.mxu0 0.0
    %1350 = vmatprep.subr.mxu0 0.0
    %1351 = vmatpush1.msra.mxu0 0.0
    %1352 = vmatprep.subr.mxu0 0.0
    %1353 = vmatpush1.msra.mxu0 0.0
    %1354 = vmatprep.subr.mxu0 0.0
    %1355 = vmatpush1.msra.mxu0 0.0
    %1356 = vmatprep.subr.mxu0 0.0
    %1357 = vmatpush1.msra.mxu0 0.0
    %1358 = vmatprep.subr.mxu0 0.0
    %1359 = vmatpush1.msra.mxu0 0.0
    %1360 = vmatprep.mubr.f32.mxu0 0.0
    %1361 = vmatmul.mubr.f32.gmra.mrb[0].mxu0 %v36
    %v1362 = vpop.f32.mrb[0].mxu0
    %v1363 = vadd.f32 %v1294, %v1362
    %v1364 = vpop.f32.mrb[0].mxu0
    %1365 = vdwg.mxu0
    %v1366 = vxor.u32 %v1363, 2147483648
    %v1367 = vmul.f32 %v1366, 1.442695
    %v1368 = vpow.pop %v1367
    %v1369 = vadd.f32 %v1368, 1.0
    %v1370 = vrcp.pop %v1369
    %v1371 = vmul.f32 1.0, %v1370
    %v1372 = vtanh.pop %v1363
    %v1373 = vmul.f32 %v1371, %v981
    %1375 = vrot.lane.b32.xlu0 %v1372, 64
    %v1376 = vpop.permute.xlu0 %1375
    %v1378 = vmul.f32 %v1371, %v1376
    %1380 = vrot.lane.b32.xlu0 %v1378, 32
    %v1381 = vpop.permute.xlu0 %1380
    %v1383 = vadd.f32 %v1373, %v1381
    %v1384 = vtanh.pop %v1383
    %1386 = vrot.lane.b32.xlu0 %v1384, 64
    %v1387 = vpop.permute.xlu0 %1386
    %v1389 = vmul.f32 %v1371, %v1387
    %1391 = vrot.lane.b32.xlu0 %v1389, 32
    %v1392 = vpop.permute.xlu0 %1391
    %v1393 = vsel %vm189, %v1392, 0
    %1395 = vmatprep.subr.mxu0 %v1207
    %1396 = vmatpush1.msra.mxu0 %v1206
    %1397 = vmatprep.subr.mxu0 %v1209
    %1398 = vmatpush1.msra.mxu0 %v1208
    %1399 = vmatprep.subr.mxu0 %v1211
    %1400 = vmatpush1.msra.mxu0 %v1210
    %1401 = vmatprep.subr.mxu0 %v1213
    %1402 = vmatpush1.msra.mxu0 %v1212
    %1403 = vmatprep.subr.mxu0 0.0
    %1404 = vmatpush1.msra.mxu0 0.0
    %1405 = vmatprep.subr.mxu0 0.0
    %1406 = vmatpush1.msra.mxu0 0.0
    %1407 = vmatprep.subr.mxu0 0.0
    %1408 = vmatpush1.msra.mxu0 0.0
    %1409 = vmatprep.subr.mxu0 0.0
    %1410 = vmatpush1.msra.mxu0 0.0
    %1411 = vmatprep.subr.mxu0 0.0
    %1412 = vmatpush1.msra.mxu0 0.0
    %1413 = vmatprep.subr.mxu0 0.0
    %1414 = vmatpush1.msra.mxu0 0.0
    %1415 = vmatprep.subr.mxu0 0.0
    %1416 = vmatpush1.msra.mxu0 0.0
    %1417 = vmatprep.subr.mxu0 0.0
    %1418 = vmatpush1.msra.mxu0 0.0
    %1419 = vmatprep.subr.mxu0 0.0
    %1420 = vmatpush1.msra.mxu0 0.0
    %1421 = vmatprep.subr.mxu0 0.0
    %1422 = vmatpush1.msra.mxu0 0.0
    %1423 = vmatprep.subr.mxu0 0.0
    %1424 = vmatpush1.msra.mxu0 0.0
    %1425 = vmatprep.subr.mxu0 0.0
    %1426 = vmatpush1.msra.mxu0 0.0
    %1427 = vmatprep.subr.mxu0 0.0
    %1428 = vmatpush1.msra.mxu0 0.0
    %1429 = vmatprep.subr.mxu0 0.0
    %1430 = vmatpush1.msra.mxu0 0.0
    %1431 = vmatprep.subr.mxu0 0.0
    %1432 = vmatpush1.msra.mxu0 0.0
    %1433 = vmatprep.subr.mxu0 0.0
    %1434 = vmatpush1.msra.mxu0 0.0
    %1435 = vmatprep.subr.mxu0 0.0
    %1436 = vmatpush1.msra.mxu0 0.0
    %1437 = vmatprep.subr.mxu0 0.0
    %1438 = vmatpush1.msra.mxu0 0.0
    %1439 = vmatprep.subr.mxu0 0.0
    %1440 = vmatpush1.msra.mxu0 0.0
    %1441 = vmatprep.subr.mxu0 0.0
    %1442 = vmatpush1.msra.mxu0 0.0
    %1443 = vmatprep.subr.mxu0 0.0
    %1444 = vmatpush1.msra.mxu0 0.0
    %1445 = vmatprep.subr.mxu0 0.0
    %1446 = vmatpush1.msra.mxu0 0.0
    %1447 = vmatprep.subr.mxu0 0.0
    %1448 = vmatpush1.msra.mxu0 0.0
    %1449 = vmatprep.subr.mxu0 0.0
    %1450 = vmatpush1.msra.mxu0 0.0
    %1451 = vmatprep.subr.mxu0 0.0
    %1452 = vmatpush1.msra.mxu0 0.0
    %1453 = vmatprep.subr.mxu0 0.0
    %1454 = vmatpush1.msra.mxu0 0.0
    %1455 = vmatprep.subr.mxu0 0.0
    %1456 = vmatpush1.msra.mxu0 0.0
    %1457 = vmatprep.subr.mxu0 0.0
    %1458 = vmatpush1.msra.mxu0 0.0
    %1459 = vmatprep.mubr.f32.mxu0 0.0
    %1460 = vmatmul.mubr.f32.gmra.mrb[0].mxu0 %v1393
    %v1461 = vpop.f32.mrb[0].mxu0
    %v1462 = vadd.f32 0.0, %v1461
    %v1463 = vpop.f32.mrb[0].mxu0
    %v1464 = vadd.f32 0.0, %v1463
    %1465 = vdwg.mxu0
    %v1466 = vadd.f32 %v1462, %v1219
    %s1467 = scalar_lea.vmem [#allocation2], 8
    %1468 = vst [vmem:[%s1467] sm:$0xff] %v1466
    %1469 = vmax.xlane.f32.xlu0 %v1466
    %v1470 = vpop.xlane.xlu0 %1469
    %vm1471 = vcmp.eq.f32.partialorder %v1466, %v1470
    %v1472 = vsel %vm1471, %v34, 128
    %v1473 = vand.u32 %v1472, 65535
    %v1474 = vshra.s32 %v1472, 16
    %v1475 = vcvt.s32.f32 %v1473
    %v1476 = vcvt.s32.f32 %v1474
    %1477 = vmin.xlane.f32.xlu0 %v1476
    %v1478 = vpop.xlane.xlu0 %1477
    %vm1479 = vcmp.eq.f32.partialorder %v1476, %v1478
    %v1480 = vsel %vm1479, %v1475, inf
    %1481 = vmin.xlane.f32.xlu0 %v1480
    %v1482 = vpop.xlane.xlu0 %1481
    %v1483 = vcvt.f32.s32 %v1482
    %v1484 = vcvt.f32.s32 %v1478
    %v1485 = vshll.u32 %v1484, 16
    %v1486 = vadd.s32 %v1485, %v1483
    %vm1487 = vcmp.eq.s32.totalorder %v34, %v1486
    %v1488 = vsel %vm1487, 1.0, 0.0
    %1489 = vmatprep.subr.mxu0 0.0
    %1490 = vmatpush1.msra.mxu0 %v1128
    %1491 = vmatprep.subr.mxu0 0.0
    %1492 = vmatpush1.msra.mxu0 %v1133
    %1493 = vmatprep.subr.mxu0 0.0
    %1494 = vmatpush1.msra.mxu0 %v1138
    %1495 = vmatprep.subr.mxu0 0.0
    %1496 = vmatpush1.msra.mxu0 %v1143
    %1497 = vmatprep.subr.mxu0 0.0
    %1498 = vmatpush1.msra.mxu0 %v1148
    %1499 = vmatprep.subr.mxu0 0.0
    %1500 = vmatpush1.msra.mxu0 %v1153
    %1501 = vmatprep.subr.mxu0 0.0
    %1502 = vmatpush1.msra.mxu0 %v1158
    %1503 = vmatprep.subr.mxu0 0.0
    %1504 = vmatpush1.msra.mxu0 %v1163
    %1505 = vmatprep.subr.mxu0 0.0
    %1506 = vmatpush1.msra.mxu0 %v1168
    %1507 = vmatprep.subr.mxu0 0.0
    %1508 = vmatpush1.msra.mxu0 %v1173
    %1509 = vmatprep.subr.mxu0 0.0
    %1510 = vmatpush1.msra.mxu0 %v1178
    %1511 = vmatprep.subr.mxu0 0.0
    %1512 = vmatpush1.msra.mxu0 %v1183
    %1513 = vmatprep.subr.mxu0 0.0
    %1514 = vmatpush1.msra.mxu0 %v1188
    %1515 = vmatprep.subr.mxu0 0.0
    %1516 = vmatpush1.msra.mxu0 %v1193
    %1517 = vmatprep.subr.mxu0 0.0
    %1518 = vmatpush1.msra.mxu0 %v1198
    %1519 = vmatprep.subr.mxu0 0.0
    %1520 = vmatpush1.msra.mxu0 %v1203
    %1521 = vmatprep.subr.mxu0 0.0
    %1522 = vmatpush1.msra.mxu0 0.0
    %1523 = vmatprep.subr.mxu0 0.0
    %1524 = vmatpush1.msra.mxu0 0.0
    %1525 = vmatprep.subr.mxu0 0.0
    %1526 = vmatpush1.msra.mxu0 0.0
    %1527 = vmatprep.subr.mxu0 0.0
    %1528 = vmatpush1.msra.mxu0 0.0
    %1529 = vmatprep.subr.mxu0 0.0
    %1530 = vmatpush1.msra.mxu0 0.0
    %1531 = vmatprep.subr.mxu0 0.0
    %1532 = vmatpush1.msra.mxu0 0.0
    %1533 = vmatprep.subr.mxu0 0.0
    %1534 = vmatpush1.msra.mxu0 0.0
    %1535 = vmatprep.subr.mxu0 0.0
    %1536 = vmatpush1.msra.mxu0 0.0
    %1537 = vmatprep.subr.mxu0 0.0
    %1538 = vmatpush1.msra.mxu0 0.0
    %1539 = vmatprep.subr.mxu0 0.0
    %1540 = vmatpush1.msra.mxu0 0.0
    %1541 = vmatprep.subr.mxu0 0.0
    %1542 = vmatpush1.msra.mxu0 0.0
    %1543 = vmatprep.subr.mxu0 0.0
    %1544 = vmatpush1.msra.mxu0 0.0
    %1545 = vmatprep.subr.mxu0 0.0
    %1546 = vmatpush1.msra.mxu0 0.0
    %1547 = vmatprep.subr.mxu0 0.0
    %1548 = vmatpush1.msra.mxu0 0.0
    %1549 = vmatprep.subr.mxu0 0.0
    %1550 = vmatpush1.msra.mxu0 0.0
    %1551 = vmatprep.subr.mxu0 0.0
    %1552 = vmatpush1.msra.mxu0 0.0
    %1553 = vmatprep.mubr.f32.mxu0 0.0
    %1554 = vmatmul.mubr.f32.gmra.mrb[0].mxu0 %v1488
    %v1555 = vpop.f32.mrb[0].mxu0
    %v1556 = vadd.f32 %v1464, %v1555
    %v1557 = vpop.f32.mrb[0].mxu0
    %1558 = vdwg.mxu0
    %v1559 = vxor.u32 %v1556, 2147483648
    %v1560 = vmul.f32 %v1559, 1.442695
    %v1561 = vpow.pop %v1560
    %v1562 = vadd.f32 %v1561, 1.0
    %v1563 = vrcp.pop %v1562
    %v1564 = vmul.f32 1.0, %v1563
    %v1565 = vtanh.pop %v1556
    %v1566 = vmul.f32 %v1564, %v1383
    %1568 = vrot.lane.b32.xlu0 %v1565, 64
    %v1569 = vpop.permute.xlu0 %1568
    %v1571 = vmul.f32 %v1564, %v1569
    %1573 = vrot.lane.b32.xlu0 %v1571, 32
    %v1574 = vpop.permute.xlu0 %1573
    %v1576 = vadd.f32 %v1566, %v1574
    %v1577 = vtanh.pop %v1576
    %1579 = vrot.lane.b32.xlu0 %v1577, 64
    %v1580 = vpop.permute.xlu0 %1579
    %v1582 = vmul.f32 %v1564, %v1580
    %1584 = vrot.lane.b32.xlu0 %v1582, 32
    %v1585 = vpop.permute.xlu0 %1584
    %v1586 = vsel %vm189, %v1585, 0
    %1588 = vmatprep.subr.mxu0 %v1207
    %1589 = vmatpush1.msra.mxu0 %v1206
    %1590 = vmatprep.subr.mxu0 %v1209
    %1591 = vmatpush1.msra.mxu0 %v1208
    %1592 = vmatprep.subr.mxu0 %v1211
    %1593 = vmatpush1.msra.mxu0 %v1210
    %1594 = vmatprep.subr.mxu0 %v1213
    %1595 = vmatpush1.msra.mxu0 %v1212
    %1596 = vmatprep.subr.mxu0 0.0
    %1597 = vmatpush1.msra.mxu0 0.0
    %1598 = vmatprep.subr.mxu0 0.0
    %1599 = vmatpush1.msra.mxu0 0.0
    %1600 = vmatprep.subr.mxu0 0.0
    %1601 = vmatpush1.msra.mxu0 0.0
    %1602 = vmatprep.subr.mxu0 0.0
    %1603 = vmatpush1.msra.mxu0 0.0
    %1604 = vmatprep.subr.mxu0 0.0
    %1605 = vmatpush1.msra.mxu0 0.0
    %1606 = vmatprep.subr.mxu0 0.0
    %1607 = vmatpush1.msra.mxu0 0.0
    %1608 = vmatprep.subr.mxu0 0.0
    %1609 = vmatpush1.msra.mxu0 0.0
    %1610 = vmatprep.subr.mxu0 0.0
    %1611 = vmatpush1.msra.mxu0 0.0
    %1612 = vmatprep.subr.mxu0 0.0
    %1613 = vmatpush1.msra.mxu0 0.0
    %1614 = vmatprep.subr.mxu0 0.0
    %1615 = vmatpush1.msra.mxu0 0.0
    %1616 = vmatprep.subr.mxu0 0.0
    %1617 = vmatpush1.msra.mxu0 0.0
    %1618 = vmatprep.subr.mxu0 0.0
    %1619 = vmatpush1.msra.mxu0 0.0
    %1620 = vmatprep.subr.mxu0 0.0
    %1621 = vmatpush1.msra.mxu0 0.0
    %1622 = vmatprep.subr.mxu0 0.0
    %1623 = vmatpush1.msra.mxu0 0.0
    %1624 = vmatprep.subr.mxu0 0.0
    %1625 = vmatpush1.msra.mxu0 0.0
    %1626 = vmatprep.subr.mxu0 0.0
    %1627 = vmatpush1.msra.mxu0 0.0
    %1628 = vmatprep.subr.mxu0 0.0
    %1629 = vmatpush1.msra.mxu0 0.0
    %1630 = vmatprep.subr.mxu0 0.0
    %1631 = vmatpush1.msra.mxu0 0.0
    %1632 = vmatprep.subr.mxu0 0.0
    %1633 = vmatpush1.msra.mxu0 0.0
    %1634 = vmatprep.subr.mxu0 0.0
    %1635 = vmatpush1.msra.mxu0 0.0
    %1636 = vmatprep.subr.mxu0 0.0
    %1637 = vmatpush1.msra.mxu0 0.0
    %1638 = vmatprep.subr.mxu0 0.0
    %1639 = vmatpush1.msra.mxu0 0.0
    %1640 = vmatprep.subr.mxu0 0.0
    %1641 = vmatpush1.msra.mxu0 0.0
    %1642 = vmatprep.subr.mxu0 0.0
    %1643 = vmatpush1.msra.mxu0 0.0
    %1644 = vmatprep.subr.mxu0 0.0
    %1645 = vmatpush1.msra.mxu0 0.0
    %1646 = vmatprep.subr.mxu0 0.0
    %1647 = vmatpush1.msra.mxu0 0.0
    %1648 = vmatprep.subr.mxu0 0.0
    %1649 = vmatpush1.msra.mxu0 0.0
    %1650 = vmatprep.subr.mxu0 0.0
    %1651 = vmatpush1.msra.mxu0 0.0
    %1652 = vmatprep.mubr.f32.mxu0 0.0
    %1653 = vmatmul.mubr.f32.gmra.mrb[0].mxu0 %v1586
    %v1654 = vpop.f32.mrb[0].mxu0
    %v1655 = vadd.f32 0.0, %v1654
    %v1656 = vpop.f32.mrb[0].mxu0
    %v1657 = vadd.f32 0.0, %v1656
    %1658 = vdwg.mxu0
    %v1659 = vadd.f32 %v1655, %v1219
    %s1660 = scalar_lea.vmem [#allocation2], 16
    %1661 = vst [vmem:[%s1660] sm:$0xff] %v1659
    %1662 = vmax.xlane.f32.xlu0 %v1659
    %v1663 = vpop.xlane.xlu0 %1662
    %vm1664 = vcmp.eq.f32.partialorder %v1659, %v1663
    %v1665 = vsel %vm1664, %v34, 128
    %v1666 = vand.u32 %v1665, 65535
    %v1667 = vshra.s32 %v1665, 16
    %v1668 = vcvt.s32.f32 %v1666
    %v1669 = vcvt.s32.f32 %v1667
    %1670 = vmin.xlane.f32.xlu0 %v1669
    %v1671 = vpop.xlane.xlu0 %1670
    %vm1672 = vcmp.eq.f32.partialorder %v1669, %v1671
    %v1673 = vsel %vm1672, %v1668, inf
    %1674 = vmin.xlane.f32.xlu0 %v1673
    %v1675 = vpop.xlane.xlu0 %1674
    %v1676 = vcvt.f32.s32 %v1675
    %v1677 = vcvt.f32.s32 %v1671
    %v1678 = vshll.u32 %v1677, 16
    %v1679 = vadd.s32 %v1678, %v1676
    %vm1680 = vcmp.eq.s32.totalorder %v34, %v1679
    %v1681 = vsel %vm1680, 1.0, 0.0
    %1682 = vmatprep.subr.mxu0 0.0
    %1683 = vmatpush1.msra.mxu0 %v1128
    %1684 = vmatprep.subr.mxu0 0.0
    %1685 = vmatpush1.msra.mxu0 %v1133
    %1686 = vmatprep.subr.mxu0 0.0
    %1687 = vmatpush1.msra.mxu0 %v1138
    %1688 = vmatprep.subr.mxu0 0.0
    %1689 = vmatpush1.msra.mxu0 %v1143
    %1690 = vmatprep.subr.mxu0 0.0
    %1691 = vmatpush1.msra.mxu0 %v1148
    %1692 = vmatprep.subr.mxu0 0.0
    %1693 = vmatpush1.msra.mxu0 %v1153
    %1694 = vmatprep.subr.mxu0 0.0
    %1695 = vmatpush1.msra.mxu0 %v1158
    %1696 = vmatprep.subr.mxu0 0.0
    %1697 = vmatpush1.msra.mxu0 %v1163
    %1698 = vmatprep.subr.mxu0 0.0
    %1699 = vmatpush1.msra.mxu0 %v1168
    %1700 = vmatprep.subr.mxu0 0.0
    %1701 = vmatpush1.msra.mxu0 %v1173
    %1702 = vmatprep.subr.mxu0 0.0
    %1703 = vmatpush1.msra.mxu0 %v1178
    %1704 = vmatprep.subr.mxu0 0.0
    %1705 = vmatpush1.msra.mxu0 %v1183
    %1706 = vmatprep.subr.mxu0 0.0
    %1707 = vmatpush1.msra.mxu0 %v1188
    %1708 = vmatprep.subr.mxu0 0.0
    %1709 = vmatpush1.msra.mxu0 %v1193
    %1710 = vmatprep.subr.mxu0 0.0
    %1711 = vmatpush1.msra.mxu0 %v1198
    %1712 = vmatprep.subr.mxu0 0.0
    %1713 = vmatpush1.msra.mxu0 %v1203
    %1714 = vmatprep.subr.mxu0 0.0
    %1715 = vmatpush1.msra.mxu0 0.0
    %1716 = vmatprep.subr.mxu0 0.0
    %1717 = vmatpush1.msra.mxu0 0.0
    %1718 = vmatprep.subr.mxu0 0.0
    %1719 = vmatpush1.msra.mxu0 0.0
    %1720 = vmatprep.subr.mxu0 0.0
    %1721 = vmatpush1.msra.mxu0 0.0
    %1722 = vmatprep.subr.mxu0 0.0
    %1723 = vmatpush1.msra.mxu0 0.0
    %1724 = vmatprep.subr.mxu0 0.0
    %1725 = vmatpush1.msra.mxu0 0.0
    %1726 = vmatprep.subr.mxu0 0.0
    %1727 = vmatpush1.msra.mxu0 0.0
    %1728 = vmatprep.subr.mxu0 0.0
    %1729 = vmatpush1.msra.mxu0 0.0
    %1730 = vmatprep.subr.mxu0 0.0
    %1731 = vmatpush1.msra.mxu0 0.0
    %1732 = vmatprep.subr.mxu0 0.0
    %1733 = vmatpush1.msra.mxu0 0.0
    %1734 = vmatprep.subr.mxu0 0.0
    %1735 = vmatpush1.msra.mxu0 0.0
    %1736 = vmatprep.subr.mxu0 0.0
    %1737 = vmatpush1.msra.mxu0 0.0
    %1738 = vmatprep.subr.mxu0 0.0
    %1739 = vmatpush1.msra.mxu0 0.0
    %1740 = vmatprep.subr.mxu0 0.0
    %1741 = vmatpush1.msra.mxu0 0.0
    %1742 = vmatprep.subr.mxu0 0.0
    %1743 = vmatpush1.msra.mxu0 0.0
    %1744 = vmatprep.subr.mxu0 0.0
    %1745 = vmatpush1.msra.mxu0 0.0
    %1746 = vmatprep.mubr.f32.mxu0 0.0
    %1747 = vmatmul.mubr.f32.gmra.mrb[0].mxu0 %v1681
    %v1748 = vpop.f32.mrb[0].mxu0
    %v1749 = vadd.f32 %v1657, %v1748
    %v1750 = vpop.f32.mrb[0].mxu0
    %1751 = vdwg.mxu0
    %v1752 = vxor.u32 %v1749, 2147483648
    %v1753 = vmul.f32 %v1752, 1.442695
    %v1754 = vpow.pop %v1753
    %v1755 = vadd.f32 %v1754, 1.0
    %v1756 = vrcp.pop %v1755
    %v1757 = vmul.f32 1.0, %v1756
    %v1758 = vtanh.pop %v1749
    %v1759 = vmul.f32 %v1757, %v1576
    %1761 = vrot.lane.b32.xlu0 %v1758, 64
    %v1762 = vpop.permute.xlu0 %1761
    %v1764 = vmul.f32 %v1757, %v1762
    %1766 = vrot.lane.b32.xlu0 %v1764, 32
    %v1767 = vpop.permute.xlu0 %1766
    %v1769 = vadd.f32 %v1759, %v1767
    %v1770 = vtanh.pop %v1769
    %1772 = vrot.lane.b32.xlu0 %v1770, 64
    %v1773 = vpop.permute.xlu0 %1772
    %v1775 = vmul.f32 %v1757, %v1773
    %1777 = vrot.lane.b32.xlu0 %v1775, 32
    %v1778 = vpop.permute.xlu0 %1777
    %v1779 = vsel %vm189, %v1778, 0
    %1781 = vmatprep.subr.mxu0 %v1207
    %1782 = vmatpush1.msra.mxu0 %v1206
    %1783 = vmatprep.subr.mxu0 %v1209
    %1784 = vmatpush1.msra.mxu0 %v1208
    %1785 = vmatprep.subr.mxu0 %v1211
    %1786 = vmatpush1.msra.mxu0 %v1210
    %1787 = vmatprep.subr.mxu0 %v1213
    %1788 = vmatpush1.msra.mxu0 %v1212
    %1789 = vmatprep.subr.mxu0 0.0
    %1790 = vmatpush1.msra.mxu0 0.0
    %1791 = vmatprep.subr.mxu0 0.0
    %1792 = vmatpush1.msra.mxu0 0.0
    %1793 = vmatprep.subr.mxu0 0.0
    %1794 = vmatpush1.msra.mxu0 0.0
    %1795 = vmatprep.subr.mxu0 0.0
    %1796 = vmatpush1.msra.mxu0 0.0
    %1797 = vmatprep.subr.mxu0 0.0
    %1798 = vmatpush1.msra.mxu0 0.0
    %1799 = vmatprep.subr.mxu0 0.0
    %1800 = vmatpush1.msra.mxu0 0.0
    %1801 = vmatprep.subr.mxu0 0.0
    %1802 = vmatpush1.msra.mxu0 0.0
    %1803 = vmatprep.subr.mxu0 0.0
    %1804 = vmatpush1.msra.mxu0 0.0
    %1805 = vmatprep.subr.mxu0 0.0
    %1806 = vmatpush1.msra.mxu0 0.0
    %1807 = vmatprep.subr.mxu0 0.0
    %1808 = vmatpush1.msra.mxu0 0.0
    %1809 = vmatprep.subr.mxu0 0.0
    %1810 = vmatpush1.msra.mxu0 0.0
    %1811 = vmatprep.subr.mxu0 0.0
    %1812 = vmatpush1.msra.mxu0 0.0
    %1813 = vmatprep.subr.mxu0 0.0
    %1814 = vmatpush1.msra.mxu0 0.0
    %1815 = vmatprep.subr.mxu0 0.0
    %1816 = vmatpush1.msra.mxu0 0.0
    %1817 = vmatprep.subr.mxu0 0.0
    %1818 = vmatpush1.msra.mxu0 0.0
    %1819 = vmatprep.subr.mxu0 0.0
    %1820 = vmatpush1.msra.mxu0 0.0
    %1821 = vmatprep.subr.mxu0 0.0
    %1822 = vmatpush1.msra.mxu0 0.0
    %1823 = vmatprep.subr.mxu0 0.0
    %1824 = vmatpush1.msra.mxu0 0.0
    %1825 = vmatprep.subr.mxu0 0.0
    %1826 = vmatpush1.msra.mxu0 0.0
    %1827 = vmatprep.subr.mxu0 0.0
    %1828 = vmatpush1.msra.mxu0 0.0
    %1829 = vmatprep.subr.mxu0 0.0
    %1830 = vmatpush1.msra.mxu0 0.0
    %1831 = vmatprep.subr.mxu0 0.0
    %1832 = vmatpush1.msra.mxu0 0.0
    %1833 = vmatprep.subr.mxu0 0.0
    %1834 = vmatpush1.msra.mxu0 0.0
    %1835 = vmatprep.subr.mxu0 0.0
    %1836 = vmatpush1.msra.mxu0 0.0
    %1837 = vmatprep.subr.mxu0 0.0
    %1838 = vmatpush1.msra.mxu0 0.0
    %1839 = vmatprep.subr.mxu0 0.0
    %1840 = vmatpush1.msra.mxu0 0.0
    %1841 = vmatprep.subr.mxu0 0.0
    %1842 = vmatpush1.msra.mxu0 0.0
    %1843 = vmatprep.subr.mxu0 0.0
    %1844 = vmatpush1.msra.mxu0 0.0
    %1845 = vmatprep.mubr.f32.mxu0 0.0
    %1846 = vmatmul.mubr.f32.gmra.mrb[0].mxu0 %v1779
    %v1847 = vpop.f32.mrb[0].mxu0
    %v1848 = vadd.f32 0.0, %v1847
    %v1849 = vpop.f32.mrb[0].mxu0
    %v1850 = vadd.f32 0.0, %v1849
    %1851 = vdwg.mxu0
    %v1852 = vadd.f32 %v1848, %v1219
    %s1853 = scalar_lea.vmem [#allocation2], 24
    %1854 = vst [vmem:[%s1853] sm:$0xff] %v1852
    %1855 = vmax.xlane.f32.xlu0 %v1852
    %v1856 = vpop.xlane.xlu0 %1855
    %vm1857 = vcmp.eq.f32.partialorder %v1852, %v1856
    %v1858 = vsel %vm1857, %v34, 128
    %v1859 = vand.u32 %v1858, 65535
    %v1860 = vshra.s32 %v1858, 16
    %v1861 = vcvt.s32.f32 %v1859
    %v1862 = vcvt.s32.f32 %v1860
    %1863 = vmin.xlane.f32.xlu0 %v1862
    %v1864 = vpop.xlane.xlu0 %1863
    %vm1865 = vcmp.eq.f32.partialorder %v1862, %v1864
    %v1866 = vsel %vm1865, %v1861, inf
    %1867 = vmin.xlane.f32.xlu0 %v1866
    %v1868 = vpop.xlane.xlu0 %1867
    %v1869 = vcvt.f32.s32 %v1868
    %v1870 = vcvt.f32.s32 %v1864
    %v1871 = vshll.u32 %v1870, 16
    %v1872 = vadd.s32 %v1871, %v1869
    %vm1873 = vcmp.eq.s32.totalorder %v34, %v1872
    %v1874 = vsel %vm1873, 1.0, 0.0
    %1875 = vmatprep.subr.mxu0 0.0
    %1876 = vmatpush1.msra.mxu0 %v1128
    %1877 = vmatprep.subr.mxu0 0.0
    %1878 = vmatpush1.msra.mxu0 %v1133
    %1879 = vmatprep.subr.mxu0 0.0
    %1880 = vmatpush1.msra.mxu0 %v1138
    %1881 = vmatprep.subr.mxu0 0.0
    %1882 = vmatpush1.msra.mxu0 %v1143
    %1883 = vmatprep.subr.mxu0 0.0
    %1884 = vmatpush1.msra.mxu0 %v1148
    %1885 = vmatprep.subr.mxu0 0.0
    %1886 = vmatpush1.msra.mxu0 %v1153
    %1887 = vmatprep.subr.mxu0 0.0
    %1888 = vmatpush1.msra.mxu0 %v1158
    %1889 = vmatprep.subr.mxu0 0.0
    %1890 = vmatpush1.msra.mxu0 %v1163
    %1891 = vmatprep.subr.mxu0 0.0
    %1892 = vmatpush1.msra.mxu0 %v1168
    %1893 = vmatprep.subr.mxu0 0.0
    %1894 = vmatpush1.msra.mxu0 %v1173
    %1895 = vmatprep.subr.mxu0 0.0
    %1896 = vmatpush1.msra.mxu0 %v1178
    %1897 = vmatprep.subr.mxu0 0.0
    %1898 = vmatpush1.msra.mxu0 %v1183
    %1899 = vmatprep.subr.mxu0 0.0
    %1900 = vmatpush1.msra.mxu0 %v1188
    %1901 = vmatprep.subr.mxu0 0.0
    %1902 = vmatpush1.msra.mxu0 %v1193
    %1903 = vmatprep.subr.mxu0 0.0
    %1904 = vmatpush1.msra.mxu0 %v1198
    %1905 = vmatprep.subr.mxu0 0.0
    %1906 = vmatpush1.msra.mxu0 %v1203
    %1907 = vmatprep.subr.mxu0 0.0
    %1908 = vmatpush1.msra.mxu0 0.0
    %1909 = vmatprep.subr.mxu0 0.0
    %1910 = vmatpush1.msra.mxu0 0.0
    %1911 = vmatprep.subr.mxu0 0.0
    %1912 = vmatpush1.msra.mxu0 0.0
    %1913 = vmatprep.subr.mxu0 0.0
    %1914 = vmatpush1.msra.mxu0 0.0
    %1915 = vmatprep.subr.mxu0 0.0
    %1916 = vmatpush1.msra.mxu0 0.0
    %1917 = vmatprep.subr.mxu0 0.0
    %1918 = vmatpush1.msra.mxu0 0.0
    %1919 = vmatprep.subr.mxu0 0.0
    %1920 = vmatpush1.msra.mxu0 0.0
    %1921 = vmatprep.subr.mxu0 0.0
    %1922 = vmatpush1.msra.mxu0 0.0
    %1923 = vmatprep.subr.mxu0 0.0
    %1924 = vmatpush1.msra.mxu0 0.0
    %1925 = vmatprep.subr.mxu0 0.0
    %1926 = vmatpush1.msra.mxu0 0.0
    %1927 = vmatprep.subr.mxu0 0.0
    %1928 = vmatpush1.msra.mxu0 0.0
    %1929 = vmatprep.subr.mxu0 0.0
    %1930 = vmatpush1.msra.mxu0 0.0
    %1931 = vmatprep.subr.mxu0 0.0
    %1932 = vmatpush1.msra.mxu0 0.0
    %1933 = vmatprep.subr.mxu0 0.0
    %1934 = vmatpush1.msra.mxu0 0.0
    %1935 = vmatprep.subr.mxu0 0.0
    %1936 = vmatpush1.msra.mxu0 0.0
    %1937 = vmatprep.subr.mxu0 0.0
    %1938 = vmatpush1.msra.mxu0 0.0
    %1939 = vmatprep.mubr.f32.mxu0 0.0
    %1940 = vmatmul.mubr.f32.gmra.mrb[0].mxu0 %v1874
    %v1941 = vpop.f32.mrb[0].mxu0
    %v1942 = vadd.f32 %v1850, %v1941
    %v1943 = vpop.f32.mrb[0].mxu0
    %1944 = vdwg.mxu0
    %v1945 = vxor.u32 %v1942, 2147483648
    %v1946 = vmul.f32 %v1945, 1.442695
    %v1947 = vpow.pop %v1946
    %v1948 = vadd.f32 %v1947, 1.0
    %v1949 = vrcp.pop %v1948
    %v1950 = vmul.f32 1.0, %v1949
    %v1951 = vtanh.pop %v1942
    %v1952 = vmul.f32 %v1950, %v1769
    %1954 = vrot.lane.b32.xlu0 %v1951, 64
    %v1955 = vpop.permute.xlu0 %1954
    %v1957 = vmul.f32 %v1950, %v1955
    %1959 = vrot.lane.b32.xlu0 %v1957, 32
    %v1960 = vpop.permute.xlu0 %1959
    %v1962 = vadd.f32 %v1952, %v1960
    %v1963 = vtanh.pop %v1962
    %1965 = vrot.lane.b32.xlu0 %v1963, 64
    %v1966 = vpop.permute.xlu0 %1965
    %v1968 = vmul.f32 %v1950, %v1966
    %1970 = vrot.lane.b32.xlu0 %v1968, 32
    %v1971 = vpop.permute.xlu0 %1970
    %v1972 = vsel %vm189, %v1971, 0
    %1974 = vmatprep.subr.mxu0 %v1207
    %1975 = vmatpush1.msra.mxu0 %v1206
    %1976 = vmatprep.subr.mxu0 %v1209
    %1977 = vmatpush1.msra.mxu0 %v1208
    %1978 = vmatprep.subr.mxu0 %v1211
    %1979 = vmatpush1.msra.mxu0 %v1210
    %1980 = vmatprep.subr.mxu0 %v1213
    %1981 = vmatpush1.msra.mxu0 %v1212
    %1982 = vmatprep.subr.mxu0 0.0
    %1983 = vmatpush1.msra.mxu0 0.0
    %1984 = vmatprep.subr.mxu0 0.0
    %1985 = vmatpush1.msra.mxu0 0.0
    %1986 = vmatprep.subr.mxu0 0.0
    %1987 = vmatpush1.msra.mxu0 0.0
    %1988 = vmatprep.subr.mxu0 0.0
    %1989 = vmatpush1.msra.mxu0 0.0
    %1990 = vmatprep.subr.mxu0 0.0
    %1991 = vmatpush1.msra.mxu0 0.0
    %1992 = vmatprep.subr.mxu0 0.0
    %1993 = vmatpush1.msra.mxu0 0.0
    %1994 = vmatprep.subr.mxu0 0.0
    %1995 = vmatpush1.msra.mxu0 0.0
    %1996 = vmatprep.subr.mxu0 0.0
    %1997 = vmatpush1.msra.mxu0 0.0
    %1998 = vmatprep.subr.mxu0 0.0
    %1999 = vmatpush1.msra.mxu0 0.0
    %2000 = vmatprep.subr.mxu0 0.0
    %2001 = vmatpush1.msra.mxu0 0.0
    %2002 = vmatprep.subr.mxu0 0.0
    %2003 = vmatpush1.msra.mxu0 0.0
    %2004 = vmatprep.subr.mxu0 0.0
    %2005 = vmatpush1.msra.mxu0 0.0
    %2006 = vmatprep.subr.mxu0 0.0
    %2007 = vmatpush1.msra.mxu0 0.0
    %2008 = vmatprep.subr.mxu0 0.0
    %2009 = vmatpush1.msra.mxu0 0.0
    %2010 = vmatprep.subr.mxu0 0.0
    %2011 = vmatpush1.msra.mxu0 0.0
    %2012 = vmatprep.subr.mxu0 0.0
    %2013 = vmatpush1.msra.mxu0 0.0
    %2014 = vmatprep.subr.mxu0 0.0
    %2015 = vmatpush1.msra.mxu0 0.0
    %2016 = vmatprep.subr.mxu0 0.0
    %2017 = vmatpush1.msra.mxu0 0.0
    %2018 = vmatprep.subr.mxu0 0.0
    %2019 = vmatpush1.msra.mxu0 0.0
    %2020 = vmatprep.subr.mxu0 0.0
    %2021 = vmatpush1.msra.mxu0 0.0
    %2022 = vmatprep.subr.mxu0 0.0
    %2023 = vmatpush1.msra.mxu0 0.0
    %2024 = vmatprep.subr.mxu0 0.0
    %2025 = vmatpush1.msra.mxu0 0.0
    %2026 = vmatprep.subr.mxu0 0.0
    %2027 = vmatpush1.msra.mxu0 0.0
    %2028 = vmatprep.subr.mxu0 0.0
    %2029 = vmatpush1.msra.mxu0 0.0
    %2030 = vmatprep.subr.mxu0 0.0
    %2031 = vmatpush1.msra.mxu0 0.0
    %2032 = vmatprep.subr.mxu0 0.0
    %2033 = vmatpush1.msra.mxu0 0.0
    %2034 = vmatprep.subr.mxu0 0.0
    %2035 = vmatpush1.msra.mxu0 0.0
    %2036 = vmatprep.subr.mxu0 0.0
    %2037 = vmatpush1.msra.mxu0 0.0
    %2038 = vmatprep.mubr.f32.mxu0 0.0
    %2039 = vmatmul.mubr.f32.gmra.mrb[0].mxu0 %v1972
    %v2040 = vpop.f32.mrb[0].mxu0
    %v2041 = vadd.f32 0.0, %v2040
    %v2042 = vpop.f32.mrb[0].mxu0
    %v2043 = vadd.f32 0.0, %v2042
    %2044 = vdwg.mxu0
    %v2045 = vadd.f32 %v2041, %v1219
    %s2046 = scalar_lea.vmem [#allocation2], 32
    %2047 = vst [vmem:[%s2046] sm:$0xff] %v2045
    %2048 = vmax.xlane.f32.xlu0 %v2045
    %v2049 = vpop.xlane.xlu0 %2048
    %vm2050 = vcmp.eq.f32.partialorder %v2045, %v2049
    %v2051 = vsel %vm2050, %v34, 128
    %v2052 = vand.u32 %v2051, 65535
    %v2053 = vshra.s32 %v2051, 16
    %v2054 = vcvt.s32.f32 %v2052
    %v2055 = vcvt.s32.f32 %v2053
    %2056 = vmin.xlane.f32.xlu0 %v2055
    %v2057 = vpop.xlane.xlu0 %2056
    %vm2058 = vcmp.eq.f32.partialorder %v2055, %v2057
    %v2059 = vsel %vm2058, %v2054, inf
    %2060 = vmin.xlane.f32.xlu0 %v2059
    %v2061 = vpop.xlane.xlu0 %2060
    %v2062 = vcvt.f32.s32 %v2061
    %v2063 = vcvt.f32.s32 %v2057
    %v2064 = vshll.u32 %v2063, 16
    %v2065 = vadd.s32 %v2064, %v2062
    %vm2066 = vcmp.eq.s32.totalorder %v34, %v2065
    %v2067 = vsel %vm2066, 1.0, 0.0
    %2068 = vmatprep.subr.mxu0 0.0
    %2069 = vmatpush1.msra.mxu0 %v1128
    %2070 = vmatprep.subr.mxu0 0.0
    %2071 = vmatpush1.msra.mxu0 %v1133
    %2072 = vmatprep.subr.mxu0 0.0
    %2073 = vmatpush1.msra.mxu0 %v1138
    %2074 = vmatprep.subr.mxu0 0.0
    %2075 = vmatpush1.msra.mxu0 %v1143
    %2076 = vmatprep.subr.mxu0 0.0
    %2077 = vmatpush1.msra.mxu0 %v1148
    %2078 = vmatprep.subr.mxu0 0.0
    %2079 = vmatpush1.msra.mxu0 %v1153
    %2080 = vmatprep.subr.mxu0 0.0
    %2081 = vmatpush1.msra.mxu0 %v1158
    %2082 = vmatprep.subr.mxu0 0.0
    %2083 = vmatpush1.msra.mxu0 %v1163
    %2084 = vmatprep.subr.mxu0 0.0
    %2085 = vmatpush1.msra.mxu0 %v1168
    %2086 = vmatprep.subr.mxu0 0.0
    %2087 = vmatpush1.msra.mxu0 %v1173
    %2088 = vmatprep.subr.mxu0 0.0
    %2089 = vmatpush1.msra.mxu0 %v1178
    %2090 = vmatprep.subr.mxu0 0.0
    %2091 = vmatpush1.msra.mxu0 %v1183
    %2092 = vmatprep.subr.mxu0 0.0
    %2093 = vmatpush1.msra.mxu0 %v1188
    %2094 = vmatprep.subr.mxu0 0.0
    %2095 = vmatpush1.msra.mxu0 %v1193
    %2096 = vmatprep.subr.mxu0 0.0
    %2097 = vmatpush1.msra.mxu0 %v1198
    %2098 = vmatprep.subr.mxu0 0.0
    %2099 = vmatpush1.msra.mxu0 %v1203
    %2100 = vmatprep.subr.mxu0 0.0
    %2101 = vmatpush1.msra.mxu0 0.0
    %2102 = vmatprep.subr.mxu0 0.0
    %2103 = vmatpush1.msra.mxu0 0.0
    %2104 = vmatprep.subr.mxu0 0.0
    %2105 = vmatpush1.msra.mxu0 0.0
    %2106 = vmatprep.subr.mxu0 0.0
    %2107 = vmatpush1.msra.mxu0 0.0
    %2108 = vmatprep.subr.mxu0 0.0
    %2109 = vmatpush1.msra.mxu0 0.0
    %2110 = vmatprep.subr.mxu0 0.0
    %2111 = vmatpush1.msra.mxu0 0.0
    %2112 = vmatprep.subr.mxu0 0.0
    %2113 = vmatpush1.msra.mxu0 0.0
    %2114 = vmatprep.subr.mxu0 0.0
    %2115 = vmatpush1.msra.mxu0 0.0
    %2116 = vmatprep.subr.mxu0 0.0
    %2117 = vmatpush1.msra.mxu0 0.0
    %2118 = vmatprep.subr.mxu0 0.0
    %2119 = vmatpush1.msra.mxu0 0.0
    %2120 = vmatprep.subr.mxu0 0.0
    %2121 = vmatpush1.msra.mxu0 0.0
    %2122 = vmatprep.subr.mxu0 0.0
    %2123 = vmatpush1.msra.mxu0 0.0
    %2124 = vmatprep.subr.mxu0 0.0
    %2125 = vmatpush1.msra.mxu0 0.0
    %2126 = vmatprep.subr.mxu0 0.0
    %2127 = vmatpush1.msra.mxu0 0.0
    %2128 = vmatprep.subr.mxu0 0.0
    %2129 = vmatpush1.msra.mxu0 0.0
    %2130 = vmatprep.subr.mxu0 0.0
    %2131 = vmatpush1.msra.mxu0 0.0
    %2132 = vmatprep.mubr.f32.mxu0 0.0
    %2133 = vmatmul.mubr.f32.gmra.mrb[0].mxu0 %v2067
    %v2134 = vpop.f32.mrb[0].mxu0
    %v2135 = vadd.f32 %v2043, %v2134
    %v2136 = vpop.f32.mrb[0].mxu0
    %2137 = vdwg.mxu0
    %v2138 = vxor.u32 %v2135, 2147483648
    %v2139 = vmul.f32 %v2138, 1.442695
    %v2140 = vpow.pop %v2139
    %v2141 = vadd.f32 %v2140, 1.0
    %v2142 = vrcp.pop %v2141
    %v2143 = vmul.f32 1.0, %v2142
    %v2144 = vtanh.pop %v2135
    %v2145 = vmul.f32 %v2143, %v1962
    %2147 = vrot.lane.b32.xlu0 %v2144, 64
    %v2148 = vpop.permute.xlu0 %2147
    %v2150 = vmul.f32 %v2143, %v2148
    %2152 = vrot.lane.b32.xlu0 %v2150, 32
    %v2153 = vpop.permute.xlu0 %2152
    %v2155 = vadd.f32 %v2145, %v2153
    %v2156 = vtanh.pop %v2155
    %2158 = vrot.lane.b32.xlu0 %v2156, 64
    %v2159 = vpop.permute.xlu0 %2158
    %v2161 = vmul.f32 %v2143, %v2159
    %2163 = vrot.lane.b32.xlu0 %v2161, 32
    %v2164 = vpop.permute.xlu0 %2163
    %v2165 = vsel %vm189, %v2164, 0
    %2167 = vmatprep.subr.mxu0 %v1207
    %2168 = vmatpush1.msra.mxu0 %v1206
    %2169 = vmatprep.subr.mxu0 %v1209
    %2170 = vmatpush1.msra.mxu0 %v1208
    %2171 = vmatprep.subr.mxu0 %v1211
    %2172 = vmatpush1.msra.mxu0 %v1210
    %2173 = vmatprep.subr.mxu0 %v1213
    %2174 = vmatpush1.msra.mxu0 %v1212
    %2175 = vmatprep.subr.mxu0 0.0
    %2176 = vmatpush1.msra.mxu0 0.0
    %2177 = vmatprep.subr.mxu0 0.0
    %2178 = vmatpush1.msra.mxu0 0.0
    %2179 = vmatprep.subr.mxu0 0.0
    %2180 = vmatpush1.msra.mxu0 0.0
    %2181 = vmatprep.subr.mxu0 0.0
    %2182 = vmatpush1.msra.mxu0 0.0
    %2183 = vmatprep.subr.mxu0 0.0
    %2184 = vmatpush1.msra.mxu0 0.0
    %2185 = vmatprep.subr.mxu0 0.0
    %2186 = vmatpush1.msra.mxu0 0.0
    %2187 = vmatprep.subr.mxu0 0.0
    %2188 = vmatpush1.msra.mxu0 0.0
    %2189 = vmatprep.subr.mxu0 0.0
    %2190 = vmatpush1.msra.mxu0 0.0
    %2191 = vmatprep.subr.mxu0 0.0
    %2192 = vmatpush1.msra.mxu0 0.0
    %2193 = vmatprep.subr.mxu0 0.0
    %2194 = vmatpush1.msra.mxu0 0.0
    %2195 = vmatprep.subr.mxu0 0.0
    %2196 = vmatpush1.msra.mxu0 0.0
    %2197 = vmatprep.subr.mxu0 0.0
    %2198 = vmatpush1.msra.mxu0 0.0
    %2199 = vmatprep.subr.mxu0 0.0
    %2200 = vmatpush1.msra.mxu0 0.0
    %2201 = vmatprep.subr.mxu0 0.0
    %2202 = vmatpush1.msra.mxu0 0.0
    %2203 = vmatprep.subr.mxu0 0.0
    %2204 = vmatpush1.msra.mxu0 0.0
    %2205 = vmatprep.subr.mxu0 0.0
    %2206 = vmatpush1.msra.mxu0 0.0
    %2207 = vmatprep.subr.mxu0 0.0
    %2208 = vmatpush1.msra.mxu0 0.0
    %2209 = vmatprep.subr.mxu0 0.0
    %2210 = vmatpush1.msra.mxu0 0.0
    %2211 = vmatprep.subr.mxu0 0.0
    %2212 = vmatpush1.msra.mxu0 0.0
    %2213 = vmatprep.subr.mxu0 0.0
    %2214 = vmatpush1.msra.mxu0 0.0
    %2215 = vmatprep.subr.mxu0 0.0
    %2216 = vmatpush1.msra.mxu0 0.0
    %2217 = vmatprep.subr.mxu0 0.0
    %2218 = vmatpush1.msra.mxu0 0.0
    %2219 = vmatprep.subr.mxu0 0.0
    %2220 = vmatpush1.msra.mxu0 0.0
    %2221 = vmatprep.subr.mxu0 0.0
    %2222 = vmatpush1.msra.mxu0 0.0
    %2223 = vmatprep.subr.mxu0 0.0
    %2224 = vmatpush1.msra.mxu0 0.0
    %2225 = vmatprep.subr.mxu0 0.0
    %2226 = vmatpush1.msra.mxu0 0.0
    %2227 = vmatprep.subr.mxu0 0.0
    %2228 = vmatpush1.msra.mxu0 0.0
    %2229 = vmatprep.subr.mxu0 0.0
    %2230 = vmatpush1.msra.mxu0 0.0
    %2231 = vmatprep.mubr.f32.mxu0 0.0
    %2232 = vmatmul.mubr.f32.gmra.mrb[0].mxu0 %v2165
    %v2233 = vpop.f32.mrb[0].mxu0
    %v2234 = vadd.f32 0.0, %v2233
    %v2235 = vpop.f32.mrb[0].mxu0
    %v2236 = vadd.f32 0.0, %v2235
    %2237 = vdwg.mxu0
    %v2238 = vadd.f32 %v2234, %v1219
    %s2239 = scalar_lea.vmem [#allocation2], 40
    %2240 = vst [vmem:[%s2239] sm:$0xff] %v2238
    %2241 = vmax.xlane.f32.xlu0 %v2238
    %v2242 = vpop.xlane.xlu0 %2241
    %vm2243 = vcmp.eq.f32.partialorder %v2238, %v2242
    %v2244 = vsel %vm2243, %v34, 128
    %v2245 = vand.u32 %v2244, 65535
    %v2246 = vshra.s32 %v2244, 16
    %v2247 = vcvt.s32.f32 %v2245
    %v2248 = vcvt.s32.f32 %v2246
    %2249 = vmin.xlane.f32.xlu0 %v2248
    %v2250 = vpop.xlane.xlu0 %2249
    %vm2251 = vcmp.eq.f32.partialorder %v2248, %v2250
    %v2252 = vsel %vm2251, %v2247, inf
    %2253 = vmin.xlane.f32.xlu0 %v2252
    %v2254 = vpop.xlane.xlu0 %2253
    %v2255 = vcvt.f32.s32 %v2254
    %v2256 = vcvt.f32.s32 %v2250
    %v2257 = vshll.u32 %v2256, 16
    %v2258 = vadd.s32 %v2257, %v2255
    %vm2259 = vcmp.eq.s32.totalorder %v34, %v2258
    %v2260 = vsel %vm2259, 1.0, 0.0
    %2261 = vmatprep.subr.mxu0 0.0
    %2262 = vmatpush1.msra.mxu0 %v1128
    %2263 = vmatprep.subr.mxu0 0.0
    %2264 = vmatpush1.msra.mxu0 %v1133
    %2265 = vmatprep.subr.mxu0 0.0
    %2266 = vmatpush1.msra.mxu0 %v1138
    %2267 = vmatprep.subr.mxu0 0.0
    %2268 = vmatpush1.msra.mxu0 %v1143
    %2269 = vmatprep.subr.mxu0 0.0
    %2270 = vmatpush1.msra.mxu0 %v1148
    %2271 = vmatprep.subr.mxu0 0.0
    %2272 = vmatpush1.msra.mxu0 %v1153
    %2273 = vmatprep.subr.mxu0 0.0
    %2274 = vmatpush1.msra.mxu0 %v1158
    %2275 = vmatprep.subr.mxu0 0.0
    %2276 = vmatpush1.msra.mxu0 %v1163
    %2277 = vmatprep.subr.mxu0 0.0
    %2278 = vmatpush1.msra.mxu0 %v1168
    %2279 = vmatprep.subr.mxu0 0.0
    %2280 = vmatpush1.msra.mxu0 %v1173
    %2281 = vmatprep.subr.mxu0 0.0
    %2282 = vmatpush1.msra.mxu0 %v1178
    %2283 = vmatprep.subr.mxu0 0.0
    %2284 = vmatpush1.msra.mxu0 %v1183
    %2285 = vmatprep.subr.mxu0 0.0
    %2286 = vmatpush1.msra.mxu0 %v1188
    %2287 = vmatprep.subr.mxu0 0.0
    %2288 = vmatpush1.msra.mxu0 %v1193
    %2289 = vmatprep.subr.mxu0 0.0
    %2290 = vmatpush1.msra.mxu0 %v1198
    %2291 = vmatprep.subr.mxu0 0.0
    %2292 = vmatpush1.msra.mxu0 %v1203
    %2293 = vmatprep.subr.mxu0 0.0
    %2294 = vmatpush1.msra.mxu0 0.0
    %2295 = vmatprep.subr.mxu0 0.0
    %2296 = vmatpush1.msra.mxu0 0.0
    %2297 = vmatprep.subr.mxu0 0.0
    %2298 = vmatpush1.msra.mxu0 0.0
    %2299 = vmatprep.subr.mxu0 0.0
    %2300 = vmatpush1.msra.mxu0 0.0
    %2301 = vmatprep.subr.mxu0 0.0
    %2302 = vmatpush1.msra.mxu0 0.0
    %2303 = vmatprep.subr.mxu0 0.0
    %2304 = vmatpush1.msra.mxu0 0.0
    %2305 = vmatprep.subr.mxu0 0.0
    %2306 = vmatpush1.msra.mxu0 0.0
    %2307 = vmatprep.subr.mxu0 0.0
    %2308 = vmatpush1.msra.mxu0 0.0
    %2309 = vmatprep.subr.mxu0 0.0
    %2310 = vmatpush1.msra.mxu0 0.0
    %2311 = vmatprep.subr.mxu0 0.0
    %2312 = vmatpush1.msra.mxu0 0.0
    %2313 = vmatprep.subr.mxu0 0.0
    %2314 = vmatpush1.msra.mxu0 0.0
    %2315 = vmatprep.subr.mxu0 0.0
    %2316 = vmatpush1.msra.mxu0 0.0
    %2317 = vmatprep.subr.mxu0 0.0
    %2318 = vmatpush1.msra.mxu0 0.0
    %2319 = vmatprep.subr.mxu0 0.0
    %2320 = vmatpush1.msra.mxu0 0.0
    %2321 = vmatprep.subr.mxu0 0.0
    %2322 = vmatpush1.msra.mxu0 0.0
    %2323 = vmatprep.subr.mxu0 0.0
    %2324 = vmatpush1.msra.mxu0 0.0
    %2325 = vmatprep.mubr.f32.mxu0 0.0
    %2326 = vmatmul.mubr.f32.gmra.mrb[0].mxu0 %v2260
    %v2327 = vpop.f32.mrb[0].mxu0
    %v2328 = vadd.f32 %v2236, %v2327
    %v2329 = vpop.f32.mrb[0].mxu0
    %2330 = vdwg.mxu0
    %v2331 = vxor.u32 %v2328, 2147483648
    %v2332 = vmul.f32 %v2331, 1.442695
    %v2333 = vpow.pop %v2332
    %v2334 = vadd.f32 %v2333, 1.0
    %v2335 = vrcp.pop %v2334
    %v2336 = vmul.f32 1.0, %v2335
    %v2337 = vtanh.pop %v2328
    %v2338 = vmul.f32 %v2336, %v2155
    %2340 = vrot.lane.b32.xlu0 %v2337, 64
    %v2341 = vpop.permute.xlu0 %2340
    %v2343 = vmul.f32 %v2336, %v2341
    %2345 = vrot.lane.b32.xlu0 %v2343, 32
    %v2346 = vpop.permute.xlu0 %2345
    %v2348 = vadd.f32 %v2338, %v2346
    %v2349 = vtanh.pop %v2348
    %2351 = vrot.lane.b32.xlu0 %v2349, 64
    %v2352 = vpop.permute.xlu0 %2351
    %v2354 = vmul.f32 %v2336, %v2352
    %2356 = vrot.lane.b32.xlu0 %v2354, 32
    %v2357 = vpop.permute.xlu0 %2356
    %v2358 = vsel %vm189, %v2357, 0
    %2360 = vmatprep.subr.mxu0 %v1207
    %2361 = vmatpush1.msra.mxu0 %v1206
    %2362 = vmatprep.subr.mxu0 %v1209
    %2363 = vmatpush1.msra.mxu0 %v1208
    %2364 = vmatprep.subr.mxu0 %v1211
    %2365 = vmatpush1.msra.mxu0 %v1210
    %2366 = vmatprep.subr.mxu0 %v1213
    %2367 = vmatpush1.msra.mxu0 %v1212
    %2368 = vmatprep.subr.mxu0 0.0
    %2369 = vmatpush1.msra.mxu0 0.0
    %2370 = vmatprep.subr.mxu0 0.0
    %2371 = vmatpush1.msra.mxu0 0.0
    %2372 = vmatprep.subr.mxu0 0.0
    %2373 = vmatpush1.msra.mxu0 0.0
    %2374 = vmatprep.subr.mxu0 0.0
    %2375 = vmatpush1.msra.mxu0 0.0
    %2376 = vmatprep.subr.mxu0 0.0
    %2377 = vmatpush1.msra.mxu0 0.0
    %2378 = vmatprep.subr.mxu0 0.0
    %2379 = vmatpush1.msra.mxu0 0.0
    %2380 = vmatprep.subr.mxu0 0.0
    %2381 = vmatpush1.msra.mxu0 0.0
    %2382 = vmatprep.subr.mxu0 0.0
    %2383 = vmatpush1.msra.mxu0 0.0
    %2384 = vmatprep.subr.mxu0 0.0
    %2385 = vmatpush1.msra.mxu0 0.0
    %2386 = vmatprep.subr.mxu0 0.0
    %2387 = vmatpush1.msra.mxu0 0.0
    %2388 = vmatprep.subr.mxu0 0.0
    %2389 = vmatpush1.msra.mxu0 0.0
    %2390 = vmatprep.subr.mxu0 0.0
    %2391 = vmatpush1.msra.mxu0 0.0
    %2392 = vmatprep.subr.mxu0 0.0
    %2393 = vmatpush1.msra.mxu0 0.0
    %2394 = vmatprep.subr.mxu0 0.0
    %2395 = vmatpush1.msra.mxu0 0.0
    %2396 = vmatprep.subr.mxu0 0.0
    %2397 = vmatpush1.msra.mxu0 0.0
    %2398 = vmatprep.subr.mxu0 0.0
    %2399 = vmatpush1.msra.mxu0 0.0
    %2400 = vmatprep.subr.mxu0 0.0
    %2401 = vmatpush1.msra.mxu0 0.0
    %2402 = vmatprep.subr.mxu0 0.0
    %2403 = vmatpush1.msra.mxu0 0.0
    %2404 = vmatprep.subr.mxu0 0.0
    %2405 = vmatpush1.msra.mxu0 0.0
    %2406 = vmatprep.subr.mxu0 0.0
    %2407 = vmatpush1.msra.mxu0 0.0
    %2408 = vmatprep.subr.mxu0 0.0
    %2409 = vmatpush1.msra.mxu0 0.0
    %2410 = vmatprep.subr.mxu0 0.0
    %2411 = vmatpush1.msra.mxu0 0.0
    %2412 = vmatprep.subr.mxu0 0.0
    %2413 = vmatpush1.msra.mxu0 0.0
    %2414 = vmatprep.subr.mxu0 0.0
    %2415 = vmatpush1.msra.mxu0 0.0
    %2416 = vmatprep.subr.mxu0 0.0
    %2417 = vmatpush1.msra.mxu0 0.0
    %2418 = vmatprep.subr.mxu0 0.0
    %2419 = vmatpush1.msra.mxu0 0.0
    %2420 = vmatprep.subr.mxu0 0.0
    %2421 = vmatpush1.msra.mxu0 0.0
    %2422 = vmatprep.subr.mxu0 0.0
    %2423 = vmatpush1.msra.mxu0 0.0
    %2424 = vmatprep.mubr.f32.mxu0 0.0
    %2425 = vmatmul.mubr.f32.gmra.mrb[0].mxu0 %v2358
    %v2426 = vpop.f32.mrb[0].mxu0
    %v2427 = vadd.f32 0.0, %v2426
    %v2428 = vpop.f32.mrb[0].mxu0
    %v2429 = vadd.f32 0.0, %v2428
    %2430 = vdwg.mxu0
    %v2431 = vadd.f32 %v2427, %v1219
    %s2432 = scalar_lea.vmem [#allocation2], 48
    %2433 = vst [vmem:[%s2432] sm:$0xff] %v2431
    %2434 = vmax.xlane.f32.xlu0 %v2431
    %v2435 = vpop.xlane.xlu0 %2434
    %vm2436 = vcmp.eq.f32.partialorder %v2431, %v2435
    %v2437 = vsel %vm2436, %v34, 128
    %v2438 = vand.u32 %v2437, 65535
    %v2439 = vshra.s32 %v2437, 16
    %v2440 = vcvt.s32.f32 %v2438
    %v2441 = vcvt.s32.f32 %v2439
    %2442 = vmin.xlane.f32.xlu0 %v2441
    %v2443 = vpop.xlane.xlu0 %2442
    %vm2444 = vcmp.eq.f32.partialorder %v2441, %v2443
    %v2445 = vsel %vm2444, %v2440, inf
    %2446 = vmin.xlane.f32.xlu0 %v2445
    %v2447 = vpop.xlane.xlu0 %2446
    %v2448 = vcvt.f32.s32 %v2447
    %v2449 = vcvt.f32.s32 %v2443
    %v2450 = vshll.u32 %v2449, 16
    %v2451 = vadd.s32 %v2450, %v2448
    %vm2452 = vcmp.eq.s32.totalorder %v34, %v2451
    %v2453 = vsel %vm2452, 1.0, 0.0
    %2454 = vmatprep.subr.mxu0 0.0
    %2455 = vmatpush1.msra.mxu0 %v1128
    %2456 = vmatprep.subr.mxu0 0.0
    %2457 = vmatpush1.msra.mxu0 %v1133
    %2458 = vmatprep.subr.mxu0 0.0
    %2459 = vmatpush1.msra.mxu0 %v1138
    %2460 = vmatprep.subr.mxu0 0.0
    %2461 = vmatpush1.msra.mxu0 %v1143
    %2462 = vmatprep.subr.mxu0 0.0
    %2463 = vmatpush1.msra.mxu0 %v1148
    %2464 = vmatprep.subr.mxu0 0.0
    %2465 = vmatpush1.msra.mxu0 %v1153
    %2466 = vmatprep.subr.mxu0 0.0
    %2467 = vmatpush1.msra.mxu0 %v1158
    %2468 = vmatprep.subr.mxu0 0.0
    %2469 = vmatpush1.msra.mxu0 %v1163
    %2470 = vmatprep.subr.mxu0 0.0
    %2471 = vmatpush1.msra.mxu0 %v1168
    %2472 = vmatprep.subr.mxu0 0.0
    %2473 = vmatpush1.msra.mxu0 %v1173
    %2474 = vmatprep.subr.mxu0 0.0
    %2475 = vmatpush1.msra.mxu0 %v1178
    %2476 = vmatprep.subr.mxu0 0.0
    %2477 = vmatpush1.msra.mxu0 %v1183
    %2478 = vmatprep.subr.mxu0 0.0
    %2479 = vmatpush1.msra.mxu0 %v1188
    %2480 = vmatprep.subr.mxu0 0.0
    %2481 = vmatpush1.msra.mxu0 %v1193
    %2482 = vmatprep.subr.mxu0 0.0
    %2483 = vmatpush1.msra.mxu0 %v1198
    %2484 = vmatprep.subr.mxu0 0.0
    %2485 = vmatpush1.msra.mxu0 %v1203
    %2486 = vmatprep.subr.mxu0 0.0
    %2487 = vmatpush1.msra.mxu0 0.0
    %2488 = vmatprep.subr.mxu0 0.0
    %2489 = vmatpush1.msra.mxu0 0.0
    %2490 = vmatprep.subr.mxu0 0.0
    %2491 = vmatpush1.msra.mxu0 0.0
    %2492 = vmatprep.subr.mxu0 0.0
    %2493 = vmatpush1.msra.mxu0 0.0
    %2494 = vmatprep.subr.mxu0 0.0
    %2495 = vmatpush1.msra.mxu0 0.0
    %2496 = vmatprep.subr.mxu0 0.0
    %2497 = vmatpush1.msra.mxu0 0.0
    %2498 = vmatprep.subr.mxu0 0.0
    %2499 = vmatpush1.msra.mxu0 0.0
    %2500 = vmatprep.subr.mxu0 0.0
    %2501 = vmatpush1.msra.mxu0 0.0
    %2502 = vmatprep.subr.mxu0 0.0
    %2503 = vmatpush1.msra.mxu0 0.0
    %2504 = vmatprep.subr.mxu0 0.0
    %2505 = vmatpush1.msra.mxu0 0.0
    %2506 = vmatprep.subr.mxu0 0.0
    %2507 = vmatpush1.msra.mxu0 0.0
    %2508 = vmatprep.subr.mxu0 0.0
    %2509 = vmatpush1.msra.mxu0 0.0
    %2510 = vmatprep.subr.mxu0 0.0
    %2511 = vmatpush1.msra.mxu0 0.0
    %2512 = vmatprep.subr.mxu0 0.0
    %2513 = vmatpush1.msra.mxu0 0.0
    %2514 = vmatprep.subr.mxu0 0.0
    %2515 = vmatpush1.msra.mxu0 0.0
    %2516 = vmatprep.subr.mxu0 0.0
    %2517 = vmatpush1.msra.mxu0 0.0
    %2518 = vmatprep.mubr.f32.mxu0 0.0
    %2519 = vmatmul.mubr.f32.gmra.mrb[0].mxu0 %v2453
    %v2520 = vpop.f32.mrb[0].mxu0
    %v2521 = vadd.f32 %v2429, %v2520
    %v2522 = vpop.f32.mrb[0].mxu0
    %2523 = vdwg.mxu0
    %v2524 = vxor.u32 %v2521, 2147483648
    %v2525 = vmul.f32 %v2524, 1.442695
    %v2526 = vpow.pop %v2525
    %v2527 = vadd.f32 %v2526, 1.0
    %v2528 = vrcp.pop %v2527
    %v2529 = vmul.f32 1.0, %v2528
    %v2530 = vtanh.pop %v2521
    %v2531 = vmul.f32 %v2529, %v2348
    %2533 = vrot.lane.b32.xlu0 %v2530, 64
    %v2534 = vpop.permute.xlu0 %2533
    %v2536 = vmul.f32 %v2529, %v2534
    %2538 = vrot.lane.b32.xlu0 %v2536, 32
    %v2539 = vpop.permute.xlu0 %2538
    %v2541 = vadd.f32 %v2531, %v2539
    %v2542 = vtanh.pop %v2541
    %2544 = vrot.lane.b32.xlu0 %v2542, 64
    %v2545 = vpop.permute.xlu0 %2544
    %v2547 = vmul.f32 %v2529, %v2545
    %2549 = vrot.lane.b32.xlu0 %v2547, 32
    %v2550 = vpop.permute.xlu0 %2549
    %v2551 = vsel %vm189, %v2550, 0
    %2553 = vmatprep.subr.mxu0 %v1207
    %2554 = vmatpush1.msra.mxu0 %v1206
    %2555 = vmatprep.subr.mxu0 %v1209
    %2556 = vmatpush1.msra.mxu0 %v1208
    %2557 = vmatprep.subr.mxu0 %v1211
    %2558 = vmatpush1.msra.mxu0 %v1210
    %2559 = vmatprep.subr.mxu0 %v1213
    %2560 = vmatpush1.msra.mxu0 %v1212
    %2561 = vmatprep.subr.mxu0 0.0
    %2562 = vmatpush1.msra.mxu0 0.0
    %2563 = vmatprep.subr.mxu0 0.0
    %2564 = vmatpush1.msra.mxu0 0.0
    %2565 = vmatprep.subr.mxu0 0.0
    %2566 = vmatpush1.msra.mxu0 0.0
    %2567 = vmatprep.subr.mxu0 0.0
    %2568 = vmatpush1.msra.mxu0 0.0
    %2569 = vmatprep.subr.mxu0 0.0
    %2570 = vmatpush1.msra.mxu0 0.0
    %2571 = vmatprep.subr.mxu0 0.0
    %2572 = vmatpush1.msra.mxu0 0.0
    %2573 = vmatprep.subr.mxu0 0.0
    %2574 = vmatpush1.msra.mxu0 0.0
    %2575 = vmatprep.subr.mxu0 0.0
    %2576 = vmatpush1.msra.mxu0 0.0
    %2577 = vmatprep.subr.mxu0 0.0
    %2578 = vmatpush1.msra.mxu0 0.0
    %2579 = vmatprep.subr.mxu0 0.0
    %2580 = vmatpush1.msra.mxu0 0.0
    %2581 = vmatprep.subr.mxu0 0.0
    %2582 = vmatpush1.msra.mxu0 0.0
    %2583 = vmatprep.subr.mxu0 0.0
    %2584 = vmatpush1.msra.mxu0 0.0
    %2585 = vmatprep.subr.mxu0 0.0
    %2586 = vmatpush1.msra.mxu0 0.0
    %2587 = vmatprep.subr.mxu0 0.0
    %2588 = vmatpush1.msra.mxu0 0.0
    %2589 = vmatprep.subr.mxu0 0.0
    %2590 = vmatpush1.msra.mxu0 0.0
    %2591 = vmatprep.subr.mxu0 0.0
    %2592 = vmatpush1.msra.mxu0 0.0
    %2593 = vmatprep.subr.mxu0 0.0
    %2594 = vmatpush1.msra.mxu0 0.0
    %2595 = vmatprep.subr.mxu0 0.0
    %2596 = vmatpush1.msra.mxu0 0.0
    %2597 = vmatprep.subr.mxu0 0.0
    %2598 = vmatpush1.msra.mxu0 0.0
    %2599 = vmatprep.subr.mxu0 0.0
    %2600 = vmatpush1.msra.mxu0 0.0
    %2601 = vmatprep.subr.mxu0 0.0
    %2602 = vmatpush1.msra.mxu0 0.0
    %2603 = vmatprep.subr.mxu0 0.0
    %2604 = vmatpush1.msra.mxu0 0.0
    %2605 = vmatprep.subr.mxu0 0.0
    %2606 = vmatpush1.msra.mxu0 0.0
    %2607 = vmatprep.subr.mxu0 0.0
    %2608 = vmatpush1.msra.mxu0 0.0
    %2609 = vmatprep.subr.mxu0 0.0
    %2610 = vmatpush1.msra.mxu0 0.0
    %2611 = vmatprep.subr.mxu0 0.0
    %2612 = vmatpush1.msra.mxu0 0.0
    %2613 = vmatprep.subr.mxu0 0.0
    %2614 = vmatpush1.msra.mxu0 0.0
    %2615 = vmatprep.subr.mxu0 0.0
    %2616 = vmatpush1.msra.mxu0 0.0
    %2617 = vmatprep.mubr.f32.mxu0 0.0
    %2618 = vmatmul.mubr.f32.gmra.mrb[0].mxu0 %v2551
    %v2619 = vpop.f32.mrb[0].mxu0
    %v2620 = vadd.f32 0.0, %v2619
    %v2621 = vpop.f32.mrb[0].mxu0
    %2622 = vdwg.mxu0
    %v2623 = vadd.f32 %v2620, %v1219
    %s2624 = scalar_lea.vmem [#allocation2], 56
    %2625 = vst [vmem:[%s2624] sm:$0xff] %v2623
    // Predicated region
    $region38: #{seq2seq_forward.1} parent=1 // pred_check
      _
    $region39: #{seq2seq_forward.1} parent=1 // pred_check_branch
      %2627 = sbr.rel (0) target = $region41
    $region40: #{seq2seq_forward.1} parent=1 // pred_region
      %s2629 = ssub.s32 1024, 1024
      %2630 = vsyncadd [#allocation3], %s2629
      %s2631 = sshll.u32 [#allocation2], 4
      %s2632 = int_to_ptr.vmem [resolvable:$true] %s2631
      %2637 = dma.vmem_to_hbm [thread:$0]  %s2632, 1024, %s9, [#allocation3], 128, 128, 8
    $region41: #{seq2seq_forward.1} parent=1 // pred_fallthru
      _
    // Predicated region
    $region42: #{seq2seq_forward.1} parent=1 // pred_check
      _
    $region43: #{seq2seq_forward.1} parent=1 // pred_check_branch
      %2639 = sbr.rel (0) target = $region45
    $region44: #{seq2seq_forward.1} parent=1 // pred_region
      %2640 = dma.done [#allocation3], 1024
    $region45: #{seq2seq_forward.1} parent=1 // pred_fallthru
      _
    %2641 = vsyncpa [#allocation3], 1

</llo_original>
